<compile_context>
chip_gen: v5e
topology: v5e:2x2
jax: 0.10.0
libtpu: 0.0.40
codegen_flags: <defaults>
</compile_context>

<pallas_src>
import random

import jax
import jax.numpy as jnp
from jax import lax
from jax.experimental import pallas as pl
from jax.experimental.pallas import tpu as pltpu

VPAD = 128  # vocab padded to one full lane width


def make_seq2seq_kernel(T, B, D, H, V, tf_mask):
    """Builds the fused encoder + decoder-loop kernel for static shapes.

    tf_mask: tuple of T Python ints (teacher-forcing coin flips), baked in statically.
    """
    Vp = VPAD
    tf_mask = tuple(int(m) for m in tf_mask)
    assert len(tf_mask) == T

    def lstm_gates(pre, c):
        # Two full-width EUP passes over the (B, 4H) vreg, then lane slices
        # (instead of 4 sliced EUP calls).
        sg = jax.nn.sigmoid(pre)          # (B, 4H)
        th = jnp.tanh(pre)                # (B, 4H)
        i = sg[:, 0 * H:1 * H]
        f = sg[:, 1 * H:2 * H]
        g = th[:, 2 * H:3 * H]
        o = sg[:, 3 * H:4 * H]
        c_new = f * c + i * g
        h_new = o * jnp.tanh(c_new)
        return h_new, c_new

    def kernel(x_ref, tgt_ref,
               w_ih_e_ref, w_hh_e_ref, b_e_ref,
               w_enc_a_ref, b_a_ref, w_dec_a_ref, v_a_ref,
               w_ctx_d_ref, w_hh_d_ref, w_tok_d_ref, b_d_ref,
               w_out_ref, b_out_ref,
               out_ref,
               xp_scr, enc_scr, encp_scr):
        # Only small per-step invariants live in vregs; every large weight is read
        # from its VMEM ref at the use site (vld is ~free, holding them would spill
        # across the fully unrolled decoder loop).
        v_a = v_a_ref[...]          # (1, H)
        b_d = b_d_ref[...]          # (1, 4H)
        b_out = b_out_ref[...]      # (1, Vp)   padded lanes hold -1e9
        w_dec_a = w_dec_a_ref[...]  # (H, H)    small, used every decoder step
        ids = lax.broadcasted_iota(jnp.int32, (B, Vp), 1)

        # ---- Encoder input projection hoisted out of the recurrence:
        # one (T*B, D) @ (D, 4H) matmul with the bias folded in.
        xp_scr[...] = (jnp.dot(x_ref[...], w_ih_e_ref[...],
                               preferred_element_type=jnp.float32)
                       + b_e_ref[...])

        # ---- Encoder recurrence (fully unrolled): only h @ w_hh_e stays on the chain.
        h = jnp.zeros((B, H), jnp.float32)
        c = jnp.zeros((B, H), jnp.float32)
        for t in range(T):
            pre = xp_scr[t * B:(t + 1) * B, :] + jnp.dot(
                h, w_hh_e_ref[...], preferred_element_type=jnp.float32)
            h, c = lstm_gates(pre, c)
            enc_scr[:, t:t + 1, :] = h[:, None, :]            # (B, T, H) layout

        # ---- Encoder-side attention projection, batched into one matmul.
        enc_flat = enc_scr[...].reshape(B * T, H)
        encp = jnp.dot(enc_flat, w_enc_a_ref[...],
                       preferred_element_type=jnp.float32) + b_a_ref[...]
        encp_scr[...] = encp.reshape(B, T, H)

        # ---- Decoder loop (fully unrolled, static teacher-forcing schedule).
        x_tok = jnp.ones((B, 1), jnp.int32)                   # <sos> token id = 1
        for t in range(T):
            enc = enc_scr[...]                                # (B, T, H) — 2 dense tiles
            encp_t = encp_scr[...]                            # (B, T, H)

            # Additive attention; encoder side pre-projected, decoder side here.
            dec_proj = jnp.dot(h, w_dec_a,
                               preferred_element_type=jnp.float32)        # (B, H)
            energy = jnp.tanh(encp_t + dec_proj[:, None, :])              # (B, T, H)
            # VPU multiply + lane reduce instead of an N=1 MXU matmul.
            scores = jnp.sum(energy * v_a, axis=-1, keepdims=True)        # (B, T, 1)
            # |scores| <= sum|v_a| (~2.6 with the 0.1-scaled init): exp cannot
            # overflow, so the max-subtraction stabilization is dropped.
            w = jnp.exp(scores)
            attn = w * pl.reciprocal(jnp.sum(w, axis=1, keepdims=True),
                                     approx=True)                          # (B, T, 1)
            context = jnp.sum(attn * enc, axis=1)                          # (B, H)

            # Decoder LSTM cell; embedding + its input projection are folded into
            # the (Vp, 4H) token table, addressed via a one-hot matmul.
            onehot = (ids == x_tok).astype(jnp.float32)                    # (B, Vp)
            pre = (jnp.dot(context, w_ctx_d_ref[...],
                           preferred_element_type=jnp.float32)
                   + jnp.dot(h, w_hh_d_ref[...],
                             preferred_element_type=jnp.float32)
                   + jnp.dot(onehot, w_tok_d_ref[...],
                             preferred_element_type=jnp.float32)
                   + b_d)
            h, c = lstm_gates(pre, c)

            logits = jnp.dot(h, w_out_ref[...],
                             preferred_element_type=jnp.float32) + b_out   # (B, Vp)
            out_ref[t * B:(t + 1) * B, :] = logits            # dense (T*B, Vp) store

            if t + 1 < T:
                if tf_mask[t]:
                    # Teacher forcing: next token straight from the target; the
                    # argmax block is skipped entirely for this step.
                    x_tok = tgt_ref[t * B:(t + 1) * B, :]
                else:
                    # best_guess = argmax over real vocab lanes (pad lanes hold -1e9)
                    maxv = jnp.max(logits, axis=1, keepdims=True)
                    x_tok = jnp.min(jnp.where(logits == maxv, ids, Vp),
                                    axis=1, keepdims=True)                 # (B, 1) int32

    return kernel


def init_params(key, D, H, E, V):
    ks = jax.random.split(key, 12)
    s = 0.1
    p = {
        "w_ih_e": s * jax.random.normal(ks[0], (D, 4 * H), jnp.float32),
        "w_hh_e": s * jax.random.normal(ks[1], (H, 4 * H), jnp.float32),
        "b_e": jnp.zeros((1, 4 * H), jnp.float32),
        "emb": s * jax.random.normal(ks[2], (V, E), jnp.float32),
        "w_enc_a": s * jax.random.normal(ks[3], (H, H), jnp.float32),
        "w_dec_a": s * jax.random.normal(ks[4], (H, H), jnp.float32),
        "b_a": jnp.zeros((1, H), jnp.float32),
        "v_a": s * jax.random.normal(ks[5], (H, 1), jnp.float32),
        "w_ctx_d": s * jax.random.normal(ks[6], (H, 4 * H), jnp.float32),
        "w_emb_d": s * jax.random.normal(ks[7], (E, 4 * H), jnp.float32),
        "w_hh_d": s * jax.random.normal(ks[8], (H, 4 * H), jnp.float32),
        "b_d": jnp.zeros((1, 4 * H), jnp.float32),
        "w_out": s * jax.random.normal(ks[9], (H, V), jnp.float32),
        "b_out": jnp.zeros((1, V), jnp.float32),
    }
    return p


def seq2seq_forward(params, input_tensor, target, teacher_force_ratio=0.5):
    """input_tensor: (B, T, D) float32; target: (B, T) int32 (token ids < 10).
    Returns (B, T, 10) float32, matching the PyTorch module's output."""
    B, T, D = input_tensor.shape
    H = params["w_hh_e"].shape[0]
    V = params["emb"].shape[0]
    Vp = VPAD

    # Host-side equivalent of the module's target padding/permute + per-step coin flips.
    if teacher_force_ratio != 0:
        tgt_tb = jnp.transpose(jnp.asarray(target, jnp.int32), (1, 0))           # (T, B)
        tf_mask = tuple(1 if random.random() < teacher_force_ratio else 0
                        for _ in range(T))
    else:
        tgt_tb = jnp.zeros((T, B), jnp.int32)
        tf_mask = (0,) * T

    tgt_flat = tgt_tb.reshape(T * B, 1)                                           # (T*B, 1)
    x_flat = jnp.transpose(input_tensor, (1, 0, 2)).astype(
        jnp.float32).reshape(T * B, D)                                            # (T*B, D)

    # Host-side weight prep (pure re-parameterization, same math):
    w_tok_d = jnp.zeros((Vp, 4 * H), jnp.float32).at[:V].set(
        params["emb"] @ params["w_emb_d"])                                        # (Vp, 4H)
    w_out_p = jnp.zeros((H, Vp), jnp.float32).at[:, :V].set(params["w_out"])      # (H, Vp)
    b_out_p = jnp.full((1, Vp), -1e9, jnp.float32).at[:, :V].set(params["b_out"])  # (1, Vp)
    v_a_row = params["v_a"].reshape(1, H)                                         # (1, H)

    weights = [params["w_ih_e"], params["w_hh_e"], params["b_e"],
               params["w_enc_a"], params["b_a"], params["w_dec_a"], v_a_row,
               params["w_ctx_d"], params["w_hh_d"], w_tok_d, params["b_d"],
               w_out_p, b_out_p]

    kernel = make_seq2seq_kernel(T, B, D, H, V, tf_mask)

    vmem = pl.BlockSpec(memory_space=pltpu.MemorySpace.VMEM)
    in_specs = [vmem, vmem] + [vmem] * len(weights)

    out_flat = pl.pallas_call(
        kernel,
        out_shape=jax.ShapeDtypeStruct((T * B, Vp), jnp.float32),
        in_specs=in_specs,
        out_specs=vmem,
        scratch_shapes=[pltpu.VMEM((T * B, 4 * H), jnp.float32),   # hoisted input proj
                        pltpu.VMEM((B, T, H), jnp.float32),        # encoder states
                        pltpu.VMEM((B, T, H), jnp.float32)],       # enc-side attn proj
    )(x_flat, tgt_flat, *weights)

    # (T*B, Vp) -> (T, B, V) -> (B, T, V); matches `outputs.permute(1, 0, 2)`.
    return jnp.transpose(out_flat.reshape(T, B, Vp)[..., :V], (1, 0, 2))


if __name__ == "__main__":
    B, T, D, H, E, V = 2, 8, 16, 32, 8, 10

    key = jax.random.PRNGKey(0)
    k_in, k_tgt, k_par = jax.random.split(key, 3)

    input_tensor = jax.random.normal(k_in, (B, T, D), jnp.float32)
    target = jax.random.randint(k_tgt, (B, T), 0, V, jnp.int32)
    params = init_params(k_par, D, H, E, V)

    random.seed(0)  # deterministic teacher-forcing coin flips
    out = seq2seq_forward(params, input_tensor, target, teacher_force_ratio=0.5)
    out = jax.block_until_ready(out)

    assert out.shape == (B, T, V), out.shape
    assert bool(jnp.all(jnp.isfinite(out)))
    print("KERNEL_OK")
</pallas_src>

<mosaic_0001>
module attributes {stable_mosaic.version = 11 : i64} {
  func.func @kernel(%arg0: memref<16x16xf32, #tpu.memory_space<vmem>>, %arg1: memref<16x1xi32, #tpu.memory_space<vmem>>, %arg2: memref<16x128xf32, #tpu.memory_space<vmem>>, %arg3: memref<32x128xf32, #tpu.memory_space<vmem>>, %arg4: memref<1x128xf32, #tpu.memory_space<vmem>>, %arg5: memref<32x32xf32, #tpu.memory_space<vmem>>, %arg6: memref<1x32xf32, #tpu.memory_space<vmem>>, %arg7: memref<32x32xf32, #tpu.memory_space<vmem>>, %arg8: memref<1x32xf32, #tpu.memory_space<vmem>>, %arg9: memref<32x128xf32, #tpu.memory_space<vmem>>, %arg10: memref<32x128xf32, #tpu.memory_space<vmem>>, %arg11: memref<128x128xf32, #tpu.memory_space<vmem>>, %arg12: memref<1x128xf32, #tpu.memory_space<vmem>>, %arg13: memref<32x128xf32, #tpu.memory_space<vmem>>, %arg14: memref<1x128xf32, #tpu.memory_space<vmem>>, %arg15: memref<16x128xf32, #tpu.memory_space<vmem>>, %arg16: memref<16x128xf32, #tpu.memory_space<vmem>>, %arg17: memref<2x8x32xf32, #tpu.memory_space<vmem>>, %arg18: memref<2x8x32xf32, #tpu.memory_space<vmem>>) attributes {dimension_semantics = [], scalar_prefetch = 0 : i64, scratch_operands = 3 : i64, tpu.core_type = #tpu.core_type<tc>} {
    %c0 = arith.constant 0 : index
    %c0_0 = arith.constant 0 : index
    %0 = vector.load %arg8[%c0, %c0_0] : memref<1x32xf32, #tpu.memory_space<vmem>>, vector<1x32xf32>
    %c0_1 = arith.constant 0 : index
    %c0_2 = arith.constant 0 : index
    %1 = vector.load %arg12[%c0_1, %c0_2] : memref<1x128xf32, #tpu.memory_space<vmem>>, vector<1x128xf32>
    %c0_3 = arith.constant 0 : index
    %c0_4 = arith.constant 0 : index
    %2 = vector.load %arg14[%c0_3, %c0_4] : memref<1x128xf32, #tpu.memory_space<vmem>>, vector<1x128xf32>
    %c0_5 = arith.constant 0 : index
    %c0_6 = arith.constant 0 : index
    %3 = vector.load %arg7[%c0_5, %c0_6] : memref<32x32xf32, #tpu.memory_space<vmem>>, vector<32x32xf32>
    %4 = tpu.iota {dimensions = array<i32: 1>} : vector<2x128xi32>
    %c0_7 = arith.constant 0 : index
    %c0_8 = arith.constant 0 : index
    %5 = vector.load %arg0[%c0_7, %c0_8] : memref<16x16xf32, #tpu.memory_space<vmem>>, vector<16x16xf32>
    %c0_9 = arith.constant 0 : index
    %c0_10 = arith.constant 0 : index
    %6 = vector.load %arg2[%c0_9, %c0_10] : memref<16x128xf32, #tpu.memory_space<vmem>>, vector<16x128xf32>
    %cst = arith.constant dense<0.000000e+00> : vector<16x128xf32>
    %7 = tpu.matmul %5, %6, %cst {dimension_numbers = #tpu.dot_dimension_numbers<[1], [0], [0], [1], [0, 0, 1, 1], [], []>} : vector<16x16xf32>, vector<16x128xf32>, vector<16x128xf32> -> vector<16x128xf32>
    %c0_11 = arith.constant 0 : index
    %c0_12 = arith.constant 0 : index
    %8 = vector.load %arg4[%c0_11, %c0_12] : memref<1x128xf32, #tpu.memory_space<vmem>>, vector<1x128xf32>
    %9 = vector.broadcast %8 : vector<1x128xf32> to vector<16x128xf32>
    %10 = arith.addf %7, %9 : vector<16x128xf32>
    %c0_13 = arith.constant 0 : index
    %c0_14 = arith.constant 0 : index
    %11 = vector.load %arg16[%c0_13, %c0_14] : memref<16x128xf32, #tpu.memory_space<vmem>>, vector<16x128xf32>
    tpu.vector_store %arg16[%c0_13, %c0_14], %10 {strides = array<i32>} : memref<16x128xf32, #tpu.memory_space<vmem>>, vector<16x128xf32>,
    %cst_15 = arith.constant 0.000000e+00 : f32
    %12 = vector.broadcast %cst_15 : f32 to vector<2x32xf32>
    %cst_16 = arith.constant 0.000000e+00 : f32
    %13 = vector.broadcast %cst_16 : f32 to vector<2x32xf32>
    %c0_17 = arith.constant 0 : index
    %c0_18 = arith.constant 0 : index
    %14 = vector.load %arg16[%c0_17, %c0_18] : memref<16x128xf32, #tpu.memory_space<vmem>>, vector<2x128xf32>
    %c0_19 = arith.constant 0 : index
    %c0_20 = arith.constant 0 : index
    %15 = vector.load %arg3[%c0_19, %c0_20] : memref<32x128xf32, #tpu.memory_space<vmem>>, vector<32x128xf32>
    %cst_21 = arith.constant dense<0.000000e+00> : vector<2x128xf32>
    %16 = tpu.matmul %12, %15, %cst_21 {dimension_numbers = #tpu.dot_dimension_numbers<[1], [0], [0], [1], [0, 0, 1, 1], [], []>} : vector<2x32xf32>, vector<32x128xf32>, vector<2x128xf32> -> vector<2x128xf32>
    %17 = arith.addf %14, %16 : vector<2x128xf32>
    %18 = arith.negf %17 : vector<2x128xf32>
    %19 = math.exp %18 : vector<2x128xf32>
    %cst_22 = arith.constant 1.000000e+00 : f32
    %20 = vector.broadcast %cst_22 : f32 to vector<2x128xf32>
    %21 = arith.addf %20, %19 : vector<2x128xf32>
    %22 = arith.divf %20, %21 : vector<2x128xf32>
    %23 = math.tanh %17 : vector<2x128xf32>
    %24 = vector.extract_strided_slice %22 {offsets = [0, 0], sizes = [2, 32], strides = [1, 1]} : vector<2x128xf32> to vector<2x32xf32>
    %25 = vector.extract_strided_slice %22 {offsets = [0, 32], sizes = [2, 32], strides = [1, 1]} : vector<2x128xf32> to vector<2x32xf32>
    %26 = vector.extract_strided_slice %23 {offsets = [0, 64], sizes = [2, 32], strides = [1, 1]} : vector<2x128xf32> to vector<2x32xf32>
    %27 = vector.extract_strided_slice %22 {offsets = [0, 96], sizes = [2, 32], strides = [1, 1]} : vector<2x128xf32> to vector<2x32xf32>
    %28 = arith.mulf %25, %13 : vector<2x32xf32>
    %29 = arith.mulf %24, %26 : vector<2x32xf32>
    %30 = arith.addf %28, %29 : vector<2x32xf32>
    %31 = math.tanh %30 : vector<2x32xf32>
    %32 = arith.mulf %27, %31 : vector<2x32xf32>
    %33 = vector.shape_cast %32 : vector<2x32xf32> to vector<2x1x32xf32>
    %c0_23 = arith.constant 0 : index
    %c0_24 = arith.constant 0 : index
    %c0_25 = arith.constant 0 : index
    %34 = vector.load %arg17[%c0_23, %c0_24, %c0_25] : memref<2x8x32xf32, #tpu.memory_space<vmem>>, vector<2x1x32xf32>
    tpu.vector_store %arg17[%c0_23, %c0_24, %c0_25], %33 {strides = array<i32>} : memref<2x8x32xf32, #tpu.memory_space<vmem>>, vector<2x1x32xf32>,
    %c2 = arith.constant 2 : index
    %c0_26 = arith.constant 0 : index
    %35 = vector.load %arg16[%c2, %c0_26] : memref<16x128xf32, #tpu.memory_space<vmem>>, vector<2x128xf32>
    %c0_27 = arith.constant 0 : index
    %c0_28 = arith.constant 0 : index
    %36 = vector.load %arg3[%c0_27, %c0_28] : memref<32x128xf32, #tpu.memory_space<vmem>>, vector<32x128xf32>
    %cst_29 = arith.constant dense<0.000000e+00> : vector<2x128xf32>
    %37 = tpu.matmul %32, %36, %cst_29 {dimension_numbers = #tpu.dot_dimension_numbers<[1], [0], [0], [1], [0, 0, 1, 1], [], []>} : vector<2x32xf32>, vector<32x128xf32>, vector<2x128xf32> -> vector<2x128xf32>
    %38 = arith.addf %35, %37 : vector<2x128xf32>
    %39 = arith.negf %38 : vector<2x128xf32>
    %40 = math.exp %39 : vector<2x128xf32>
    %cst_30 = arith.constant 1.000000e+00 : f32
    %41 = vector.broadcast %cst_30 : f32 to vector<2x128xf32>
    %42 = arith.addf %41, %40 : vector<2x128xf32>
    %43 = arith.divf %41, %42 : vector<2x128xf32>
    %44 = math.tanh %38 : vector<2x128xf32>
    %45 = vector.extract_strided_slice %43 {offsets = [0, 0], sizes = [2, 32], strides = [1, 1]} : vector<2x128xf32> to vector<2x32xf32>
    %46 = vector.extract_strided_slice %43 {offsets = [0, 32], sizes = [2, 32], strides = [1, 1]} : vector<2x128xf32> to vector<2x32xf32>
    %47 = vector.extract_strided_slice %44 {offsets = [0, 64], sizes = [2, 32], strides = [1, 1]} : vector<2x128xf32> to vector<2x32xf32>
    %48 = vector.extract_strided_slice %43 {offsets = [0, 96], sizes = [2, 32], strides = [1, 1]} : vector<2x128xf32> to vector<2x32xf32>
    %49 = arith.mulf %46, %30 : vector<2x32xf32>
    %50 = arith.mulf %45, %47 : vector<2x32xf32>
    %51 = arith.addf %49, %50 : vector<2x32xf32>
    %52 = math.tanh %51 : vector<2x32xf32>
    %53 = arith.mulf %48, %52 : vector<2x32xf32>
    %54 = vector.shape_cast %53 : vector<2x32xf32> to vector<2x1x32xf32>
    %c0_31 = arith.constant 0 : index
    %c1 = arith.constant 1 : index
    %c0_32 = arith.constant 0 : index
    %55 = vector.load %arg17[%c0_31, %c1, %c0_32] : memref<2x8x32xf32, #tpu.memory_space<vmem>>, vector<2x1x32xf32>
    tpu.vector_store %arg17[%c0_31, %c1, %c0_32], %54 {strides = array<i32>} : memref<2x8x32xf32, #tpu.memory_space<vmem>>, vector<2x1x32xf32>,
    %c4 = arith.constant 4 : index
    %c0_33 = arith.constant 0 : index
    %56 = vector.load %arg16[%c4, %c0_33] : memref<16x128xf32, #tpu.memory_space<vmem>>, vector<2x128xf32>
    %c0_34 = arith.constant 0 : index
    %c0_35 = arith.constant 0 : index
    %57 = vector.load %arg3[%c0_34, %c0_35] : memref<32x128xf32, #tpu.memory_space<vmem>>, vector<32x128xf32>
    %cst_36 = arith.constant dense<0.000000e+00> : vector<2x128xf32>
    %58 = tpu.matmul %53, %57, %cst_36 {dimension_numbers = #tpu.dot_dimension_numbers<[1], [0], [0], [1], [0, 0, 1, 1], [], []>} : vector<2x32xf32>, vector<32x128xf32>, vector<2x128xf32> -> vector<2x128xf32>
    %59 = arith.addf %56, %58 : vector<2x128xf32>
    %60 = arith.negf %59 : vector<2x128xf32>
    %61 = math.exp %60 : vector<2x128xf32>
    %cst_37 = arith.constant 1.000000e+00 : f32
    %62 = vector.broadcast %cst_37 : f32 to vector<2x128xf32>
    %63 = arith.addf %62, %61 : vector<2x128xf32>
    %64 = arith.divf %62, %63 : vector<2x128xf32>
    %65 = math.tanh %59 : vector<2x128xf32>
    %66 = vector.extract_strided_slice %64 {offsets = [0, 0], sizes = [2, 32], strides = [1, 1]} : vector<2x128xf32> to vector<2x32xf32>
    %67 = vector.extract_strided_slice %64 {offsets = [0, 32], sizes = [2, 32], strides = [1, 1]} : vector<2x128xf32> to vector<2x32xf32>
    %68 = vector.extract_strided_slice %65 {offsets = [0, 64], sizes = [2, 32], strides = [1, 1]} : vector<2x128xf32> to vector<2x32xf32>
    %69 = vector.extract_strided_slice %64 {offsets = [0, 96], sizes = [2, 32], strides = [1, 1]} : vector<2x128xf32> to vector<2x32xf32>
    %70 = arith.mulf %67, %51 : vector<2x32xf32>
    %71 = arith.mulf %66, %68 : vector<2x32xf32>
    %72 = arith.addf %70, %71 : vector<2x32xf32>
    %73 = math.tanh %72 : vector<2x32xf32>
    %74 = arith.mulf %69, %73 : vector<2x32xf32>
    %75 = vector.shape_cast %74 : vector<2x32xf32> to vector<2x1x32xf32>
    %c0_38 = arith.constant 0 : index
    %c2_39 = arith.constant 2 : index
    %c0_40 = arith.constant 0 : index
    %76 = vector.load %arg17[%c0_38, %c2_39, %c0_40] : memref<2x8x32xf32, #tpu.memory_space<vmem>>, vector<2x1x32xf32>
    tpu.vector_store %arg17[%c0_38, %c2_39, %c0_40], %75 {strides = array<i32>} : memref<2x8x32xf32, #tpu.memory_space<vmem>>, vector<2x1x32xf32>,
    %c6 = arith.constant 6 : index
    %c0_41 = arith.constant 0 : index
    %77 = vector.load %arg16[%c6, %c0_41] : memref<16x128xf32, #tpu.memory_space<vmem>>, vector<2x128xf32>
    %c0_42 = arith.constant 0 : index
    %c0_43 = arith.constant 0 : index
    %78 = vector.load %arg3[%c0_42, %c0_43] : memref<32x128xf32, #tpu.memory_space<vmem>>, vector<32x128xf32>
    %cst_44 = arith.constant dense<0.000000e+00> : vector<2x128xf32>
    %79 = tpu.matmul %74, %78, %cst_44 {dimension_numbers = #tpu.dot_dimension_numbers<[1], [0], [0], [1], [0, 0, 1, 1], [], []>} : vector<2x32xf32>, vector<32x128xf32>, vector<2x128xf32> -> vector<2x128xf32>
    %80 = arith.addf %77, %79 : vector<2x128xf32>
    %81 = arith.negf %80 : vector<2x128xf32>
    %82 = math.exp %81 : vector<2x128xf32>
    %cst_45 = arith.constant 1.000000e+00 : f32
    %83 = vector.broadcast %cst_45 : f32 to vector<2x128xf32>
    %84 = arith.addf %83, %82 : vector<2x128xf32>
    %85 = arith.divf %83, %84 : vector<2x128xf32>
    %86 = math.tanh %80 : vector<2x128xf32>
    %87 = vector.extract_strided_slice %85 {offsets = [0, 0], sizes = [2, 32], strides = [1, 1]} : vector<2x128xf32> to vector<2x32xf32>
    %88 = vector.extract_strided_slice %85 {offsets = [0, 32], sizes = [2, 32], strides = [1, 1]} : vector<2x128xf32> to vector<2x32xf32>
    %89 = vector.extract_strided_slice %86 {offsets = [0, 64], sizes = [2, 32], strides = [1, 1]} : vector<2x128xf32> to vector<2x32xf32>
    %90 = vector.extract_strided_slice %85 {offsets = [0, 96], sizes = [2, 32], strides = [1, 1]} : vector<2x128xf32> to vector<2x32xf32>
    %91 = arith.mulf %88, %72 : vector<2x32xf32>
    %92 = arith.mulf %87, %89 : vector<2x32xf32>
    %93 = arith.addf %91, %92 : vector<2x32xf32>
    %94 = math.tanh %93 : vector<2x32xf32>
    %95 = arith.mulf %90, %94 : vector<2x32xf32>
    %96 = vector.shape_cast %95 : vector<2x32xf32> to vector<2x1x32xf32>
    %c0_46 = arith.constant 0 : index
    %c3 = arith.constant 3 : index
    %c0_47 = arith.constant 0 : index
    %97 = vector.load %arg17[%c0_46, %c3, %c0_47] : memref<2x8x32xf32, #tpu.memory_space<vmem>>, vector<2x1x32xf32>
    tpu.vector_store %arg17[%c0_46, %c3, %c0_47], %96 {strides = array<i32>} : memref<2x8x32xf32, #tpu.memory_space<vmem>>, vector<2x1x32xf32>,
    %c8 = arith.constant 8 : index
    %c0_48 = arith.constant 0 : index
    %98 = vector.load %arg16[%c8, %c0_48] : memref<16x128xf32, #tpu.memory_space<vmem>>, vector<2x128xf32>
    %c0_49 = arith.constant 0 : index
    %c0_50 = arith.constant 0 : index
    %99 = vector.load %arg3[%c0_49, %c0_50] : memref<32x128xf32, #tpu.memory_space<vmem>>, vector<32x128xf32>
    %cst_51 = arith.constant dense<0.000000e+00> : vector<2x128xf32>
    %100 = tpu.matmul %95, %99, %cst_51 {dimension_numbers = #tpu.dot_dimension_numbers<[1], [0], [0], [1], [0, 0, 1, 1], [], []>} : vector<2x32xf32>, vector<32x128xf32>, vector<2x128xf32> -> vector<2x128xf32>
    %101 = arith.addf %98, %100 : vector<2x128xf32>
    %102 = arith.negf %101 : vector<2x128xf32>
    %103 = math.exp %102 : vector<2x128xf32>
    %cst_52 = arith.constant 1.000000e+00 : f32
    %104 = vector.broadcast %cst_52 : f32 to vector<2x128xf32>
    %105 = arith.addf %104, %103 : vector<2x128xf32>
    %106 = arith.divf %104, %105 : vector<2x128xf32>
    %107 = math.tanh %101 : vector<2x128xf32>
    %108 = vector.extract_strided_slice %106 {offsets = [0, 0], sizes = [2, 32], strides = [1, 1]} : vector<2x128xf32> to vector<2x32xf32>
    %109 = vector.extract_strided_slice %106 {offsets = [0, 32], sizes = [2, 32], strides = [1, 1]} : vector<2x128xf32> to vector<2x32xf32>
    %110 = vector.extract_strided_slice %107 {offsets = [0, 64], sizes = [2, 32], strides = [1, 1]} : vector<2x128xf32> to vector<2x32xf32>
    %111 = vector.extract_strided_slice %106 {offsets = [0, 96], sizes = [2, 32], strides = [1, 1]} : vector<2x128xf32> to vector<2x32xf32>
    %112 = arith.mulf %109, %93 : vector<2x32xf32>
    %113 = arith.mulf %108, %110 : vector<2x32xf32>
    %114 = arith.addf %112, %113 : vector<2x32xf32>
    %115 = math.tanh %114 : vector<2x32xf32>
    %116 = arith.mulf %111, %115 : vector<2x32xf32>
    %117 = vector.shape_cast %116 : vector<2x32xf32> to vector<2x1x32xf32>
    %c0_53 = arith.constant 0 : index
    %c4_54 = arith.constant 4 : index
    %c0_55 = arith.constant 0 : index
    %118 = vector.load %arg17[%c0_53, %c4_54, %c0_55] : memref<2x8x32xf32, #tpu.memory_space<vmem>>, vector<2x1x32xf32>
    tpu.vector_store %arg17[%c0_53, %c4_54, %c0_55], %117 {strides = array<i32>} : memref<2x8x32xf32, #tpu.memory_space<vmem>>, vector<2x1x32xf32>,
    %c10 = arith.constant 10 : index
    %c0_56 = arith.constant 0 : index
    %119 = vector.load %arg16[%c10, %c0_56] : memref<16x128xf32, #tpu.memory_space<vmem>>, vector<2x128xf32>
    %c0_57 = arith.constant 0 : index
    %c0_58 = arith.constant 0 : index
    %120 = vector.load %arg3[%c0_57, %c0_58] : memref<32x128xf32, #tpu.memory_space<vmem>>, vector<32x128xf32>
    %cst_59 = arith.constant dense<0.000000e+00> : vector<2x128xf32>
    %121 = tpu.matmul %116, %120, %cst_59 {dimension_numbers = #tpu.dot_dimension_numbers<[1], [0], [0], [1], [0, 0, 1, 1], [], []>} : vector<2x32xf32>, vector<32x128xf32>, vector<2x128xf32> -> vector<2x128xf32>
    %122 = arith.addf %119, %121 : vector<2x128xf32>
    %123 = arith.negf %122 : vector<2x128xf32>
    %124 = math.exp %123 : vector<2x128xf32>
    %cst_60 = arith.constant 1.000000e+00 : f32
    %125 = vector.broadcast %cst_60 : f32 to vector<2x128xf32>
    %126 = arith.addf %125, %124 : vector<2x128xf32>
    %127 = arith.divf %125, %126 : vector<2x128xf32>
    %128 = math.tanh %122 : vector<2x128xf32>
    %129 = vector.extract_strided_slice %127 {offsets = [0, 0], sizes = [2, 32], strides = [1, 1]} : vector<2x128xf32> to vector<2x32xf32>
    %130 = vector.extract_strided_slice %127 {offsets = [0, 32], sizes = [2, 32], strides = [1, 1]} : vector<2x128xf32> to vector<2x32xf32>
    %131 = vector.extract_strided_slice %128 {offsets = [0, 64], sizes = [2, 32], strides = [1, 1]} : vector<2x128xf32> to vector<2x32xf32>
    %132 = vector.extract_strided_slice %127 {offsets = [0, 96], sizes = [2, 32], strides = [1, 1]} : vector<2x128xf32> to vector<2x32xf32>
    %133 = arith.mulf %130, %114 : vector<2x32xf32>
    %134 = arith.mulf %129, %131 : vector<2x32xf32>
    %135 = arith.addf %133, %134 : vector<2x32xf32>
    %136 = math.tanh %135 : vector<2x32xf32>
    %137 = arith.mulf %132, %136 : vector<2x32xf32>
    %138 = vector.shape_cast %137 : vector<2x32xf32> to vector<2x1x32xf32>
    %c0_61 = arith.constant 0 : index
    %c5 = arith.constant 5 : index
    %c0_62 = arith.constant 0 : index
    %139 = vector.load %arg17[%c0_61, %c5, %c0_62] : memref<2x8x32xf32, #tpu.memory_space<vmem>>, vector<2x1x32xf32>
    tpu.vector_store %arg17[%c0_61, %c5, %c0_62], %138 {strides = array<i32>} : memref<2x8x32xf32, #tpu.memory_space<vmem>>, vector<2x1x32xf32>,
    %c12 = arith.constant 12 : index
    %c0_63 = arith.constant 0 : index
    %140 = vector.load %arg16[%c12, %c0_63] : memref<16x128xf32, #tpu.memory_space<vmem>>, vector<2x128xf32>
    %c0_64 = arith.constant 0 : index
    %c0_65 = arith.constant 0 : index
    %141 = vector.load %arg3[%c0_64, %c0_65] : memref<32x128xf32, #tpu.memory_space<vmem>>, vector<32x128xf32>
    %cst_66 = arith.constant dense<0.000000e+00> : vector<2x128xf32>
    %142 = tpu.matmul %137, %141, %cst_66 {dimension_numbers = #tpu.dot_dimension_numbers<[1], [0], [0], [1], [0, 0, 1, 1], [], []>} : vector<2x32xf32>, vector<32x128xf32>, vector<2x128xf32> -> vector<2x128xf32>
    %143 = arith.addf %140, %142 : vector<2x128xf32>
    %144 = arith.negf %143 : vector<2x128xf32>
    %145 = math.exp %144 : vector<2x128xf32>
    %cst_67 = arith.constant 1.000000e+00 : f32
    %146 = vector.broadcast %cst_67 : f32 to vector<2x128xf32>
    %147 = arith.addf %146, %145 : vector<2x128xf32>
    %148 = arith.divf %146, %147 : vector<2x128xf32>
    %149 = math.tanh %143 : vector<2x128xf32>
    %150 = vector.extract_strided_slice %148 {offsets = [0, 0], sizes = [2, 32], strides = [1, 1]} : vector<2x128xf32> to vector<2x32xf32>
    %151 = vector.extract_strided_slice %148 {offsets = [0, 32], sizes = [2, 32], strides = [1, 1]} : vector<2x128xf32> to vector<2x32xf32>
    %152 = vector.extract_strided_slice %149 {offsets = [0, 64], sizes = [2, 32], strides = [1, 1]} : vector<2x128xf32> to vector<2x32xf32>
    %153 = vector.extract_strided_slice %148 {offsets = [0, 96], sizes = [2, 32], strides = [1, 1]} : vector<2x128xf32> to vector<2x32xf32>
    %154 = arith.mulf %151, %135 : vector<2x32xf32>
    %155 = arith.mulf %150, %152 : vector<2x32xf32>
    %156 = arith.addf %154, %155 : vector<2x32xf32>
    %157 = math.tanh %156 : vector<2x32xf32>
    %158 = arith.mulf %153, %157 : vector<2x32xf32>
    %159 = vector.shape_cast %158 : vector<2x32xf32> to vector<2x1x32xf32>
    %c0_68 = arith.constant 0 : index
    %c6_69 = arith.constant 6 : index
    %c0_70 = arith.constant 0 : index
    %160 = vector.load %arg17[%c0_68, %c6_69, %c0_70] : memref<2x8x32xf32, #tpu.memory_space<vmem>>, vector<2x1x32xf32>
    tpu.vector_store %arg17[%c0_68, %c6_69, %c0_70], %159 {strides = array<i32>} : memref<2x8x32xf32, #tpu.memory_space<vmem>>, vector<2x1x32xf32>,
    %c14 = arith.constant 14 : index
    %c0_71 = arith.constant 0 : index
    %161 = vector.load %arg16[%c14, %c0_71] : memref<16x128xf32, #tpu.memory_space<vmem>>, vector<2x128xf32>
    %c0_72 = arith.constant 0 : index
    %c0_73 = arith.constant 0 : index
    %162 = vector.load %arg3[%c0_72, %c0_73] : memref<32x128xf32, #tpu.memory_space<vmem>>, vector<32x128xf32>
    %cst_74 = arith.constant dense<0.000000e+00> : vector<2x128xf32>
    %163 = tpu.matmul %158, %162, %cst_74 {dimension_numbers = #tpu.dot_dimension_numbers<[1], [0], [0], [1], [0, 0, 1, 1], [], []>} : vector<2x32xf32>, vector<32x128xf32>, vector<2x128xf32> -> vector<2x128xf32>
    %164 = arith.addf %161, %163 : vector<2x128xf32>
    %165 = arith.negf %164 : vector<2x128xf32>
    %166 = math.exp %165 : vector<2x128xf32>
    %cst_75 = arith.constant 1.000000e+00 : f32
    %167 = vector.broadcast %cst_75 : f32 to vector<2x128xf32>
    %168 = arith.addf %167, %166 : vector<2x128xf32>
    %169 = arith.divf %167, %168 : vector<2x128xf32>
    %170 = math.tanh %164 : vector<2x128xf32>
    %171 = vector.extract_strided_slice %169 {offsets = [0, 0], sizes = [2, 32], strides = [1, 1]} : vector<2x128xf32> to vector<2x32xf32>
    %172 = vector.extract_strided_slice %169 {offsets = [0, 32], sizes = [2, 32], strides = [1, 1]} : vector<2x128xf32> to vector<2x32xf32>
    %173 = vector.extract_strided_slice %170 {offsets = [0, 64], sizes = [2, 32], strides = [1, 1]} : vector<2x128xf32> to vector<2x32xf32>
    %174 = vector.extract_strided_slice %169 {offsets = [0, 96], sizes = [2, 32], strides = [1, 1]} : vector<2x128xf32> to vector<2x32xf32>
    %175 = arith.mulf %172, %156 : vector<2x32xf32>
    %176 = arith.mulf %171, %173 : vector<2x32xf32>
    %177 = arith.addf %175, %176 : vector<2x32xf32>
    %178 = math.tanh %177 : vector<2x32xf32>
    %179 = arith.mulf %174, %178 : vector<2x32xf32>
    %180 = vector.shape_cast %179 : vector<2x32xf32> to vector<2x1x32xf32>
    %c0_76 = arith.constant 0 : index
    %c7 = arith.constant 7 : index
    %c0_77 = arith.constant 0 : index
    %181 = vector.load %arg17[%c0_76, %c7, %c0_77] : memref<2x8x32xf32, #tpu.memory_space<vmem>>, vector<2x1x32xf32>
    tpu.vector_store %arg17[%c0_76, %c7, %c0_77], %180 {strides = array<i32>} : memref<2x8x32xf32, #tpu.memory_space<vmem>>, vector<2x1x32xf32>,
    %c0_78 = arith.constant 0 : index
    %c0_79 = arith.constant 0 : index
    %c0_80 = arith.constant 0 : index
    %182 = vector.load %arg17[%c0_78, %c0_79, %c0_80] : memref<2x8x32xf32, #tpu.memory_space<vmem>>, vector<2x8x32xf32>
    %183 = vector.shape_cast %182 : vector<2x8x32xf32> to vector<16x32xf32>
    %c0_81 = arith.constant 0 : index
    %c0_82 = arith.constant 0 : index
    %184 = vector.load %arg5[%c0_81, %c0_82] : memref<32x32xf32, #tpu.memory_space<vmem>>, vector<32x32xf32>
    %cst_83 = arith.constant dense<0.000000e+00> : vector<16x32xf32>
    %185 = tpu.matmul %183, %184, %cst_83 {dimension_numbers = #tpu.dot_dimension_numbers<[1], [0], [0], [1], [0, 0, 1, 1], [], []>} : vector<16x32xf32>, vector<32x32xf32>, vector<16x32xf32> -> vector<16x32xf32>
    %c0_84 = arith.constant 0 : index
    %c0_85 = arith.constant 0 : index
    %186 = vector.load %arg6[%c0_84, %c0_85] : memref<1x32xf32, #tpu.memory_space<vmem>>, vector<1x32xf32>
    %187 = vector.broadcast %186 : vector<1x32xf32> to vector<16x32xf32>
    %188 = arith.addf %185, %187 : vector<16x32xf32>
    %189 = vector.shape_cast %188 : vector<16x32xf32> to vector<2x8x32xf32>
    %c0_86 = arith.constant 0 : index
    %c0_87 = arith.constant 0 : index
    %c0_88 = arith.constant 0 : index
    %190 = vector.load %arg18[%c0_86, %c0_87, %c0_88] : memref<2x8x32xf32, #tpu.memory_space<vmem>>, vector<2x8x32xf32>
    tpu.vector_store %arg18[%c0_86, %c0_87, %c0_88], %189 {strides = array<i32>} : memref<2x8x32xf32, #tpu.memory_space<vmem>>, vector<2x8x32xf32>,
    %c1_i32 = arith.constant 1 : i32
    %191 = vector.broadcast %c1_i32 : i32 to vector<2x1xi32>
    %c0_89 = arith.constant 0 : index
    %c0_90 = arith.constant 0 : index
    %c0_91 = arith.constant 0 : index
    %192 = vector.load %arg17[%c0_89, %c0_90, %c0_91] : memref<2x8x32xf32, #tpu.memory_space<vmem>>, vector<2x8x32xf32>
    %c0_92 = arith.constant 0 : index
    %c0_93 = arith.constant 0 : index
    %c0_94 = arith.constant 0 : index
    %193 = vector.load %arg18[%c0_92, %c0_93, %c0_94] : memref<2x8x32xf32, #tpu.memory_space<vmem>>, vector<2x8x32xf32>
    %cst_95 = arith.constant dense<0.000000e+00> : vector<2x32xf32>
    %194 = tpu.matmul %179, %3, %cst_95 {dimension_numbers = #tpu.dot_dimension_numbers<[1], [0], [0], [1], [0, 0, 1, 1], [], []>} : vector<2x32xf32>, vector<32x32xf32>, vector<2x32xf32> -> vector<2x32xf32>
    %195 = vector.shape_cast %194 : vector<2x32xf32> to vector<2x1x32xf32>
    %196 = vector.broadcast %195 : vector<2x1x32xf32> to vector<2x8x32xf32>
    %197 = arith.addf %193, %196 : vector<2x8x32xf32>
    %198 = math.tanh %197 : vector<2x8x32xf32>
    %199 = vector.shape_cast %0 : vector<1x32xf32> to vector<1x1x32xf32>
    %200 = vector.broadcast %199 : vector<1x1x32xf32> to vector<2x8x32xf32>
    %201 = arith.mulf %198, %200 : vector<2x8x32xf32>
    %cst_96 = arith.constant dense<0.000000e+00> : vector<2x8xf32>
    %202 = vector.multi_reduction <add>, %201, %cst_96 [2] : vector<2x8x32xf32> to vector<2x8xf32>
    %203 = vector.shape_cast %202 : vector<2x8xf32> to vector<2x8x1xf32>
    %204 = math.exp %203 : vector<2x8x1xf32>
    %cst_97 = arith.constant dense<0.000000e+00> : vector<2x1xf32>
    %205 = vector.multi_reduction <add>, %204, %cst_97 [1] : vector<2x8x1xf32> to vector<2x1xf32>
    %206 = vector.shape_cast %205 : vector<2x1xf32> to vector<2x1x1xf32>
    %207 = tpu.reciprocal %206 {approx = true} : vector<2x1x1xf32> -> vector<2x1x1xf32>
    %208 = vector.broadcast %207 : vector<2x1x1xf32> to vector<2x8x1xf32>
    %209 = arith.mulf %204, %208 : vector<2x8x1xf32>
    %210 = vector.broadcast %209 : vector<2x8x1xf32> to vector<2x8x32xf32>
    %211 = arith.mulf %210, %192 : vector<2x8x32xf32>
    %cst_98 = arith.constant dense<0.000000e+00> : vector<2x32xf32>
    %212 = vector.multi_reduction <add>, %211, %cst_98 [1] : vector<2x8x32xf32> to vector<2x32xf32>
    %213 = vector.broadcast %191 : vector<2x1xi32> to vector<2x128xi32>
    %214 = arith.cmpi eq, %4, %213 : vector<2x128xi32>
    %215 = arith.extui %214 : vector<2x128xi1> to vector<2x128xi32>
    %216 = arith.sitofp %215 : vector<2x128xi32> to vector<2x128xf32>
    %c0_99 = arith.constant 0 : index
    %c0_100 = arith.constant 0 : index
    %217 = vector.load %arg9[%c0_99, %c0_100] : memref<32x128xf32, #tpu.memory_space<vmem>>, vector<32x128xf32>
    %cst_101 = arith.constant dense<0.000000e+00> : vector<2x128xf32>
    %218 = tpu.matmul %212, %217, %cst_101 {dimension_numbers = #tpu.dot_dimension_numbers<[1], [0], [0], [1], [0, 0, 1, 1], [], []>} : vector<2x32xf32>, vector<32x128xf32>, vector<2x128xf32> -> vector<2x128xf32>
    %c0_102 = arith.constant 0 : index
    %c0_103 = arith.constant 0 : index
    %219 = vector.load %arg10[%c0_102, %c0_103] : memref<32x128xf32, #tpu.memory_space<vmem>>, vector<32x128xf32>
    %cst_104 = arith.constant dense<0.000000e+00> : vector<2x128xf32>
    %220 = tpu.matmul %179, %219, %cst_104 {dimension_numbers = #tpu.dot_dimension_numbers<[1], [0], [0], [1], [0, 0, 1, 1], [], []>} : vector<2x32xf32>, vector<32x128xf32>, vector<2x128xf32> -> vector<2x128xf32>
    %221 = arith.addf %218, %220 : vector<2x128xf32>
    %c0_105 = arith.constant 0 : index
    %c0_106 = arith.constant 0 : index
    %222 = vector.load %arg11[%c0_105, %c0_106] : memref<128x128xf32, #tpu.memory_space<vmem>>, vector<128x128xf32>
    %cst_107 = arith.constant dense<0.000000e+00> : vector<2x128xf32>
    %223 = tpu.matmul %216, %222, %cst_107 {dimension_numbers = #tpu.dot_dimension_numbers<[1], [0], [0], [1], [0, 0, 1, 1], [], []>} : vector<2x128xf32>, vector<128x128xf32>, vector<2x128xf32> -> vector<2x128xf32>
    %224 = arith.addf %221, %223 : vector<2x128xf32>
    %225 = vector.broadcast %1 : vector<1x128xf32> to vector<2x128xf32>
    %226 = arith.addf %224, %225 : vector<2x128xf32>
    %227 = arith.negf %226 : vector<2x128xf32>
    %228 = math.exp %227 : vector<2x128xf32>
    %cst_108 = arith.constant 1.000000e+00 : f32
    %229 = vector.broadcast %cst_108 : f32 to vector<2x128xf32>
    %230 = arith.addf %229, %228 : vector<2x128xf32>
    %231 = arith.divf %229, %230 : vector<2x128xf32>
    %232 = math.tanh %226 : vector<2x128xf32>
    %233 = vector.extract_strided_slice %231 {offsets = [0, 0], sizes = [2, 32], strides = [1, 1]} : vector<2x128xf32> to vector<2x32xf32>
    %234 = vector.extract_strided_slice %231 {offsets = [0, 32], sizes = [2, 32], strides = [1, 1]} : vector<2x128xf32> to vector<2x32xf32>
    %235 = vector.extract_strided_slice %232 {offsets = [0, 64], sizes = [2, 32], strides = [1, 1]} : vector<2x128xf32> to vector<2x32xf32>
    %236 = vector.extract_strided_slice %231 {offsets = [0, 96], sizes = [2, 32], strides = [1, 1]} : vector<2x128xf32> to vector<2x32xf32>
    %237 = arith.mulf %234, %177 : vector<2x32xf32>
    %238 = arith.mulf %233, %235 : vector<2x32xf32>
    %239 = arith.addf %237, %238 : vector<2x32xf32>
    %240 = math.tanh %239 : vector<2x32xf32>
    %241 = arith.mulf %236, %240 : vector<2x32xf32>
    %c0_109 = arith.constant 0 : index
    %c0_110 = arith.constant 0 : index
    %242 = vector.load %arg13[%c0_109, %c0_110] : memref<32x128xf32, #tpu.memory_space<vmem>>, vector<32x128xf32>
    %cst_111 = arith.constant dense<0.000000e+00> : vector<2x128xf32>
    %243 = tpu.matmul %241, %242, %cst_111 {dimension_numbers = #tpu.dot_dimension_numbers<[1], [0], [0], [1], [0, 0, 1, 1], [], []>} : vector<2x32xf32>, vector<32x128xf32>, vector<2x128xf32> -> vector<2x128xf32>
    %244 = vector.broadcast %2 : vector<1x128xf32> to vector<2x128xf32>
    %245 = arith.addf %243, %244 : vector<2x128xf32>
    %c0_112 = arith.constant 0 : index
    %c0_113 = arith.constant 0 : index
    %246 = vector.load %arg15[%c0_112, %c0_113] : memref<16x128xf32, #tpu.memory_space<vmem>>, vector<2x128xf32>
    tpu.vector_store %arg15[%c0_112, %c0_113], %245 {strides = array<i32>} : memref<16x128xf32, #tpu.memory_space<vmem>>, vector<2x128xf32>,
    %cst_114 = arith.constant dense<0xFF800000> : vector<2xf32>
    %247 = vector.multi_reduction <maximumf>, %245, %cst_114 [1] : vector<2x128xf32> to vector<2xf32>
    %248 = vector.shape_cast %247 : vector<2xf32> to vector<2x1xf32>
    %249 = vector.broadcast %248 : vector<2x1xf32> to vector<2x128xf32>
    %250 = arith.cmpf oeq, %245, %249 : vector<2x128xf32>
    %c128_i32 = arith.constant 128 : i32
    %251 = vector.broadcast %c128_i32 : i32 to vector<2x128xi32>
    %252 = arith.select %250, %4, %251 : vector<2x128xi1>, vector<2x128xi32>
    %cst_115 = arith.constant dense<2147483647> : vector<2xi32>
    %253 = vector.multi_reduction <minsi>, %252, %cst_115 [1] : vector<2x128xi32> to vector<2xi32>
    %254 = vector.shape_cast %253 : vector<2xi32> to vector<2x1xi32>
    %c0_116 = arith.constant 0 : index
    %c0_117 = arith.constant 0 : index
    %c0_118 = arith.constant 0 : index
    %255 = vector.load %arg17[%c0_116, %c0_117, %c0_118] : memref<2x8x32xf32, #tpu.memory_space<vmem>>, vector<2x8x32xf32>
    %c0_119 = arith.constant 0 : index
    %c0_120 = arith.constant 0 : index
    %c0_121 = arith.constant 0 : index
    %256 = vector.load %arg18[%c0_119, %c0_120, %c0_121] : memref<2x8x32xf32, #tpu.memory_space<vmem>>, vector<2x8x32xf32>
    %cst_122 = arith.constant dense<0.000000e+00> : vector<2x32xf32>
    %257 = tpu.matmul %241, %3, %cst_122 {dimension_numbers = #tpu.dot_dimension_numbers<[1], [0], [0], [1], [0, 0, 1, 1], [], []>} : vector<2x32xf32>, vector<32x32xf32>, vector<2x32xf32> -> vector<2x32xf32>
    %258 = vector.shape_cast %257 : vector<2x32xf32> to vector<2x1x32xf32>
    %259 = vector.broadcast %258 : vector<2x1x32xf32> to vector<2x8x32xf32>
    %260 = arith.addf %256, %259 : vector<2x8x32xf32>
    %261 = math.tanh %260 : vector<2x8x32xf32>
    %262 = vector.shape_cast %0 : vector<1x32xf32> to vector<1x1x32xf32>
    %263 = vector.broadcast %262 : vector<1x1x32xf32> to vector<2x8x32xf32>
    %264 = arith.mulf %261, %263 : vector<2x8x32xf32>
    %cst_123 = arith.constant dense<0.000000e+00> : vector<2x8xf32>
    %265 = vector.multi_reduction <add>, %264, %cst_123 [2] : vector<2x8x32xf32> to vector<2x8xf32>
    %266 = vector.shape_cast %265 : vector<2x8xf32> to vector<2x8x1xf32>
    %267 = math.exp %266 : vector<2x8x1xf32>
    %cst_124 = arith.constant dense<0.000000e+00> : vector<2x1xf32>
    %268 = vector.multi_reduction <add>, %267, %cst_124 [1] : vector<2x8x1xf32> to vector<2x1xf32>
    %269 = vector.shape_cast %268 : vector<2x1xf32> to vector<2x1x1xf32>
    %270 = tpu.reciprocal %269 {approx = true} : vector<2x1x1xf32> -> vector<2x1x1xf32>
    %271 = vector.broadcast %270 : vector<2x1x1xf32> to vector<2x8x1xf32>
    %272 = arith.mulf %267, %271 : vector<2x8x1xf32>
    %273 = vector.broadcast %272 : vector<2x8x1xf32> to vector<2x8x32xf32>
    %274 = arith.mulf %273, %255 : vector<2x8x32xf32>
    %cst_125 = arith.constant dense<0.000000e+00> : vector<2x32xf32>
    %275 = vector.multi_reduction <add>, %274, %cst_125 [1] : vector<2x8x32xf32> to vector<2x32xf32>
    %276 = vector.broadcast %254 : vector<2x1xi32> to vector<2x128xi32>
    %277 = arith.cmpi eq, %4, %276 : vector<2x128xi32>
    %278 = arith.extui %277 : vector<2x128xi1> to vector<2x128xi32>
    %279 = arith.sitofp %278 : vector<2x128xi32> to vector<2x128xf32>
    %c0_126 = arith.constant 0 : index
    %c0_127 = arith.constant 0 : index
    %280 = vector.load %arg9[%c0_126, %c0_127] : memref<32x128xf32, #tpu.memory_space<vmem>>, vector<32x128xf32>
    %cst_128 = arith.constant dense<0.000000e+00> : vector<2x128xf32>
    %281 = tpu.matmul %275, %280, %cst_128 {dimension_numbers = #tpu.dot_dimension_numbers<[1], [0], [0], [1], [0, 0, 1, 1], [], []>} : vector<2x32xf32>, vector<32x128xf32>, vector<2x128xf32> -> vector<2x128xf32>
    %c0_129 = arith.constant 0 : index
    %c0_130 = arith.constant 0 : index
    %282 = vector.load %arg10[%c0_129, %c0_130] : memref<32x128xf32, #tpu.memory_space<vmem>>, vector<32x128xf32>
    %cst_131 = arith.constant dense<0.000000e+00> : vector<2x128xf32>
    %283 = tpu.matmul %241, %282, %cst_131 {dimension_numbers = #tpu.dot_dimension_numbers<[1], [0], [0], [1], [0, 0, 1, 1], [], []>} : vector<2x32xf32>, vector<32x128xf32>, vector<2x128xf32> -> vector<2x128xf32>
    %284 = arith.addf %281, %283 : vector<2x128xf32>
    %c0_132 = arith.constant 0 : index
    %c0_133 = arith.constant 0 : index
    %285 = vector.load %arg11[%c0_132, %c0_133] : memref<128x128xf32, #tpu.memory_space<vmem>>, vector<128x128xf32>
    %cst_134 = arith.constant dense<0.000000e+00> : vector<2x128xf32>
    %286 = tpu.matmul %279, %285, %cst_134 {dimension_numbers = #tpu.dot_dimension_numbers<[1], [0], [0], [1], [0, 0, 1, 1], [], []>} : vector<2x128xf32>, vector<128x128xf32>, vector<2x128xf32> -> vector<2x128xf32>
    %287 = arith.addf %284, %286 : vector<2x128xf32>
    %288 = vector.broadcast %1 : vector<1x128xf32> to vector<2x128xf32>
    %289 = arith.addf %287, %288 : vector<2x128xf32>
    %290 = arith.negf %289 : vector<2x128xf32>
    %291 = math.exp %290 : vector<2x128xf32>
    %cst_135 = arith.constant 1.000000e+00 : f32
    %292 = vector.broadcast %cst_135 : f32 to vector<2x128xf32>
    %293 = arith.addf %292, %291 : vector<2x128xf32>
    %294 = arith.divf %292, %293 : vector<2x128xf32>
    %295 = math.tanh %289 : vector<2x128xf32>
    %296 = vector.extract_strided_slice %294 {offsets = [0, 0], sizes = [2, 32], strides = [1, 1]} : vector<2x128xf32> to vector<2x32xf32>
    %297 = vector.extract_strided_slice %294 {offsets = [0, 32], sizes = [2, 32], strides = [1, 1]} : vector<2x128xf32> to vector<2x32xf32>
    %298 = vector.extract_strided_slice %295 {offsets = [0, 64], sizes = [2, 32], strides = [1, 1]} : vector<2x128xf32> to vector<2x32xf32>
    %299 = vector.extract_strided_slice %294 {offsets = [0, 96], sizes = [2, 32], strides = [1, 1]} : vector<2x128xf32> to vector<2x32xf32>
    %300 = arith.mulf %297, %239 : vector<2x32xf32>
    %301 = arith.mulf %296, %298 : vector<2x32xf32>
    %302 = arith.addf %300, %301 : vector<2x32xf32>
    %303 = math.tanh %302 : vector<2x32xf32>
    %304 = arith.mulf %299, %303 : vector<2x32xf32>
    %c0_136 = arith.constant 0 : index
    %c0_137 = arith.constant 0 : index
    %305 = vector.load %arg13[%c0_136, %c0_137] : memref<32x128xf32, #tpu.memory_space<vmem>>, vector<32x128xf32>
    %cst_138 = arith.constant dense<0.000000e+00> : vector<2x128xf32>
    %306 = tpu.matmul %304, %305, %cst_138 {dimension_numbers = #tpu.dot_dimension_numbers<[1], [0], [0], [1], [0, 0, 1, 1], [], []>} : vector<2x32xf32>, vector<32x128xf32>, vector<2x128xf32> -> vector<2x128xf32>
    %307 = vector.broadcast %2 : vector<1x128xf32> to vector<2x128xf32>
    %308 = arith.addf %306, %307 : vector<2x128xf32>
    %c2_139 = arith.constant 2 : index
    %c0_140 = arith.constant 0 : index
    %309 = vector.load %arg15[%c2_139, %c0_140] : memref<16x128xf32, #tpu.memory_space<vmem>>, vector<2x128xf32>
    tpu.vector_store %arg15[%c2_139, %c0_140], %308 {strides = array<i32>} : memref<16x128xf32, #tpu.memory_space<vmem>>, vector<2x128xf32>,
    %cst_141 = arith.constant dense<0xFF800000> : vector<2xf32>
    %310 = vector.multi_reduction <maximumf>, %308, %cst_141 [1] : vector<2x128xf32> to vector<2xf32>
    %311 = vector.shape_cast %310 : vector<2xf32> to vector<2x1xf32>
    %312 = vector.broadcast %311 : vector<2x1xf32> to vector<2x128xf32>
    %313 = arith.cmpf oeq, %308, %312 : vector<2x128xf32>
    %c128_i32_142 = arith.constant 128 : i32
    %314 = vector.broadcast %c128_i32_142 : i32 to vector<2x128xi32>
    %315 = arith.select %313, %4, %314 : vector<2x128xi1>, vector<2x128xi32>
    %cst_143 = arith.constant dense<2147483647> : vector<2xi32>
    %316 = vector.multi_reduction <minsi>, %315, %cst_143 [1] : vector<2x128xi32> to vector<2xi32>
    %317 = vector.shape_cast %316 : vector<2xi32> to vector<2x1xi32>
    %c0_144 = arith.constant 0 : index
    %c0_145 = arith.constant 0 : index
    %c0_146 = arith.constant 0 : index
    %318 = vector.load %arg17[%c0_144, %c0_145, %c0_146] : memref<2x8x32xf32, #tpu.memory_space<vmem>>, vector<2x8x32xf32>
    %c0_147 = arith.constant 0 : index
    %c0_148 = arith.constant 0 : index
    %c0_149 = arith.constant 0 : index
    %319 = vector.load %arg18[%c0_147, %c0_148, %c0_149] : memref<2x8x32xf32, #tpu.memory_space<vmem>>, vector<2x8x32xf32>
    %cst_150 = arith.constant dense<0.000000e+00> : vector<2x32xf32>
    %320 = tpu.matmul %304, %3, %cst_150 {dimension_numbers = #tpu.dot_dimension_numbers<[1], [0], [0], [1], [0, 0, 1, 1], [], []>} : vector<2x32xf32>, vector<32x32xf32>, vector<2x32xf32> -> vector<2x32xf32>
    %321 = vector.shape_cast %320 : vector<2x32xf32> to vector<2x1x32xf32>
    %322 = vector.broadcast %321 : vector<2x1x32xf32> to vector<2x8x32xf32>
    %323 = arith.addf %319, %322 : vector<2x8x32xf32>
    %324 = math.tanh %323 : vector<2x8x32xf32>
    %325 = vector.shape_cast %0 : vector<1x32xf32> to vector<1x1x32xf32>
    %326 = vector.broadcast %325 : vector<1x1x32xf32> to vector<2x8x32xf32>
    %327 = arith.mulf %324, %326 : vector<2x8x32xf32>
    %cst_151 = arith.constant dense<0.000000e+00> : vector<2x8xf32>
    %328 = vector.multi_reduction <add>, %327, %cst_151 [2] : vector<2x8x32xf32> to vector<2x8xf32>
    %329 = vector.shape_cast %328 : vector<2x8xf32> to vector<2x8x1xf32>
    %330 = math.exp %329 : vector<2x8x1xf32>
    %cst_152 = arith.constant dense<0.000000e+00> : vector<2x1xf32>
    %331 = vector.multi_reduction <add>, %330, %cst_152 [1] : vector<2x8x1xf32> to vector<2x1xf32>
    %332 = vector.shape_cast %331 : vector<2x1xf32> to vector<2x1x1xf32>
    %333 = tpu.reciprocal %332 {approx = true} : vector<2x1x1xf32> -> vector<2x1x1xf32>
    %334 = vector.broadcast %333 : vector<2x1x1xf32> to vector<2x8x1xf32>
    %335 = arith.mulf %330, %334 : vector<2x8x1xf32>
    %336 = vector.broadcast %335 : vector<2x8x1xf32> to vector<2x8x32xf32>
    %337 = arith.mulf %336, %318 : vector<2x8x32xf32>
    %cst_153 = arith.constant dense<0.000000e+00> : vector<2x32xf32>
    %338 = vector.multi_reduction <add>, %337, %cst_153 [1] : vector<2x8x32xf32> to vector<2x32xf32>
    %339 = vector.broadcast %317 : vector<2x1xi32> to vector<2x128xi32>
    %340 = arith.cmpi eq, %4, %339 : vector<2x128xi32>
    %341 = arith.extui %340 : vector<2x128xi1> to vector<2x128xi32>
    %342 = arith.sitofp %341 : vector<2x128xi32> to vector<2x128xf32>
    %c0_154 = arith.constant 0 : index
    %c0_155 = arith.constant 0 : index
    %343 = vector.load %arg9[%c0_154, %c0_155] : memref<32x128xf32, #tpu.memory_space<vmem>>, vector<32x128xf32>
    %cst_156 = arith.constant dense<0.000000e+00> : vector<2x128xf32>
    %344 = tpu.matmul %338, %343, %cst_156 {dimension_numbers = #tpu.dot_dimension_numbers<[1], [0], [0], [1], [0, 0, 1, 1], [], []>} : vector<2x32xf32>, vector<32x128xf32>, vector<2x128xf32> -> vector<2x128xf32>
    %c0_157 = arith.constant 0 : index
    %c0_158 = arith.constant 0 : index
    %345 = vector.load %arg10[%c0_157, %c0_158] : memref<32x128xf32, #tpu.memory_space<vmem>>, vector<32x128xf32>
    %cst_159 = arith.constant dense<0.000000e+00> : vector<2x128xf32>
    %346 = tpu.matmul %304, %345, %cst_159 {dimension_numbers = #tpu.dot_dimension_numbers<[1], [0], [0], [1], [0, 0, 1, 1], [], []>} : vector<2x32xf32>, vector<32x128xf32>, vector<2x128xf32> -> vector<2x128xf32>
    %347 = arith.addf %344, %346 : vector<2x128xf32>
    %c0_160 = arith.constant 0 : index
    %c0_161 = arith.constant 0 : index
    %348 = vector.load %arg11[%c0_160, %c0_161] : memref<128x128xf32, #tpu.memory_space<vmem>>, vector<128x128xf32>
    %cst_162 = arith.constant dense<0.000000e+00> : vector<2x128xf32>
    %349 = tpu.matmul %342, %348, %cst_162 {dimension_numbers = #tpu.dot_dimension_numbers<[1], [0], [0], [1], [0, 0, 1, 1], [], []>} : vector<2x128xf32>, vector<128x128xf32>, vector<2x128xf32> -> vector<2x128xf32>
    %350 = arith.addf %347, %349 : vector<2x128xf32>
    %351 = vector.broadcast %1 : vector<1x128xf32> to vector<2x128xf32>
    %352 = arith.addf %350, %351 : vector<2x128xf32>
    %353 = arith.negf %352 : vector<2x128xf32>
    %354 = math.exp %353 : vector<2x128xf32>
    %cst_163 = arith.constant 1.000000e+00 : f32
    %355 = vector.broadcast %cst_163 : f32 to vector<2x128xf32>
    %356 = arith.addf %355, %354 : vector<2x128xf32>
    %357 = arith.divf %355, %356 : vector<2x128xf32>
    %358 = math.tanh %352 : vector<2x128xf32>
    %359 = vector.extract_strided_slice %357 {offsets = [0, 0], sizes = [2, 32], strides = [1, 1]} : vector<2x128xf32> to vector<2x32xf32>
    %360 = vector.extract_strided_slice %357 {offsets = [0, 32], sizes = [2, 32], strides = [1, 1]} : vector<2x128xf32> to vector<2x32xf32>
    %361 = vector.extract_strided_slice %358 {offsets = [0, 64], sizes = [2, 32], strides = [1, 1]} : vector<2x128xf32> to vector<2x32xf32>
    %362 = vector.extract_strided_slice %357 {offsets = [0, 96], sizes = [2, 32], strides = [1, 1]} : vector<2x128xf32> to vector<2x32xf32>
    %363 = arith.mulf %360, %302 : vector<2x32xf32>
    %364 = arith.mulf %359, %361 : vector<2x32xf32>
    %365 = arith.addf %363, %364 : vector<2x32xf32>
    %366 = math.tanh %365 : vector<2x32xf32>
    %367 = arith.mulf %362, %366 : vector<2x32xf32>
    %c0_164 = arith.constant 0 : index
    %c0_165 = arith.constant 0 : index
    %368 = vector.load %arg13[%c0_164, %c0_165] : memref<32x128xf32, #tpu.memory_space<vmem>>, vector<32x128xf32>
    %cst_166 = arith.constant dense<0.000000e+00> : vector<2x128xf32>
    %369 = tpu.matmul %367, %368, %cst_166 {dimension_numbers = #tpu.dot_dimension_numbers<[1], [0], [0], [1], [0, 0, 1, 1], [], []>} : vector<2x32xf32>, vector<32x128xf32>, vector<2x128xf32> -> vector<2x128xf32>
    %370 = vector.broadcast %2 : vector<1x128xf32> to vector<2x128xf32>
    %371 = arith.addf %369, %370 : vector<2x128xf32>
    %c4_167 = arith.constant 4 : index
    %c0_168 = arith.constant 0 : index
    %372 = vector.load %arg15[%c4_167, %c0_168] : memref<16x128xf32, #tpu.memory_space<vmem>>, vector<2x128xf32>
    tpu.vector_store %arg15[%c4_167, %c0_168], %371 {strides = array<i32>} : memref<16x128xf32, #tpu.memory_space<vmem>>, vector<2x128xf32>,
    %c4_169 = arith.constant 4 : index
    %c0_170 = arith.constant 0 : index
    %373 = vector.load %arg1[%c4_169, %c0_170] : memref<16x1xi32, #tpu.memory_space<vmem>>, vector<2x1xi32>
    %c0_171 = arith.constant 0 : index
    %c0_172 = arith.constant 0 : index
    %c0_173 = arith.constant 0 : index
    %374 = vector.load %arg17[%c0_171, %c0_172, %c0_173] : memref<2x8x32xf32, #tpu.memory_space<vmem>>, vector<2x8x32xf32>
    %c0_174 = arith.constant 0 : index
    %c0_175 = arith.constant 0 : index
    %c0_176 = arith.constant 0 : index
    %375 = vector.load %arg18[%c0_174, %c0_175, %c0_176] : memref<2x8x32xf32, #tpu.memory_space<vmem>>, vector<2x8x32xf32>
    %cst_177 = arith.constant dense<0.000000e+00> : vector<2x32xf32>
    %376 = tpu.matmul %367, %3, %cst_177 {dimension_numbers = #tpu.dot_dimension_numbers<[1], [0], [0], [1], [0, 0, 1, 1], [], []>} : vector<2x32xf32>, vector<32x32xf32>, vector<2x32xf32> -> vector<2x32xf32>
    %377 = vector.shape_cast %376 : vector<2x32xf32> to vector<2x1x32xf32>
    %378 = vector.broadcast %377 : vector<2x1x32xf32> to vector<2x8x32xf32>
    %379 = arith.addf %375, %378 : vector<2x8x32xf32>
    %380 = math.tanh %379 : vector<2x8x32xf32>
    %381 = vector.shape_cast %0 : vector<1x32xf32> to vector<1x1x32xf32>
    %382 = vector.broadcast %381 : vector<1x1x32xf32> to vector<2x8x32xf32>
    %383 = arith.mulf %380, %382 : vector<2x8x32xf32>
    %cst_178 = arith.constant dense<0.000000e+00> : vector<2x8xf32>
    %384 = vector.multi_reduction <add>, %383, %cst_178 [2] : vector<2x8x32xf32> to vector<2x8xf32>
    %385 = vector.shape_cast %384 : vector<2x8xf32> to vector<2x8x1xf32>
    %386 = math.exp %385 : vector<2x8x1xf32>
    %cst_179 = arith.constant dense<0.000000e+00> : vector<2x1xf32>
    %387 = vector.multi_reduction <add>, %386, %cst_179 [1] : vector<2x8x1xf32> to vector<2x1xf32>
    %388 = vector.shape_cast %387 : vector<2x1xf32> to vector<2x1x1xf32>
    %389 = tpu.reciprocal %388 {approx = true} : vector<2x1x1xf32> -> vector<2x1x1xf32>
    %390 = vector.broadcast %389 : vector<2x1x1xf32> to vector<2x8x1xf32>
    %391 = arith.mulf %386, %390 : vector<2x8x1xf32>
    %392 = vector.broadcast %391 : vector<2x8x1xf32> to vector<2x8x32xf32>
    %393 = arith.mulf %392, %374 : vector<2x8x32xf32>
    %cst_180 = arith.constant dense<0.000000e+00> : vector<2x32xf32>
    %394 = vector.multi_reduction <add>, %393, %cst_180 [1] : vector<2x8x32xf32> to vector<2x32xf32>
    %395 = vector.broadcast %373 : vector<2x1xi32> to vector<2x128xi32>
    %396 = arith.cmpi eq, %4, %395 : vector<2x128xi32>
    %397 = arith.extui %396 : vector<2x128xi1> to vector<2x128xi32>
    %398 = arith.sitofp %397 : vector<2x128xi32> to vector<2x128xf32>
    %c0_181 = arith.constant 0 : index
    %c0_182 = arith.constant 0 : index
    %399 = vector.load %arg9[%c0_181, %c0_182] : memref<32x128xf32, #tpu.memory_space<vmem>>, vector<32x128xf32>
    %cst_183 = arith.constant dense<0.000000e+00> : vector<2x128xf32>
    %400 = tpu.matmul %394, %399, %cst_183 {dimension_numbers = #tpu.dot_dimension_numbers<[1], [0], [0], [1], [0, 0, 1, 1], [], []>} : vector<2x32xf32>, vector<32x128xf32>, vector<2x128xf32> -> vector<2x128xf32>
    %c0_184 = arith.constant 0 : index
    %c0_185 = arith.constant 0 : index
    %401 = vector.load %arg10[%c0_184, %c0_185] : memref<32x128xf32, #tpu.memory_space<vmem>>, vector<32x128xf32>
    %cst_186 = arith.constant dense<0.000000e+00> : vector<2x128xf32>
    %402 = tpu.matmul %367, %401, %cst_186 {dimension_numbers = #tpu.dot_dimension_numbers<[1], [0], [0], [1], [0, 0, 1, 1], [], []>} : vector<2x32xf32>, vector<32x128xf32>, vector<2x128xf32> -> vector<2x128xf32>
    %403 = arith.addf %400, %402 : vector<2x128xf32>
    %c0_187 = arith.constant 0 : index
    %c0_188 = arith.constant 0 : index
    %404 = vector.load %arg11[%c0_187, %c0_188] : memref<128x128xf32, #tpu.memory_space<vmem>>, vector<128x128xf32>
    %cst_189 = arith.constant dense<0.000000e+00> : vector<2x128xf32>
    %405 = tpu.matmul %398, %404, %cst_189 {dimension_numbers = #tpu.dot_dimension_numbers<[1], [0], [0], [1], [0, 0, 1, 1], [], []>} : vector<2x128xf32>, vector<128x128xf32>, vector<2x128xf32> -> vector<2x128xf32>
    %406 = arith.addf %403, %405 : vector<2x128xf32>
    %407 = vector.broadcast %1 : vector<1x128xf32> to vector<2x128xf32>
    %408 = arith.addf %406, %407 : vector<2x128xf32>
    %409 = arith.negf %408 : vector<2x128xf32>
    %410 = math.exp %409 : vector<2x128xf32>
    %cst_190 = arith.constant 1.000000e+00 : f32
    %411 = vector.broadcast %cst_190 : f32 to vector<2x128xf32>
    %412 = arith.addf %411, %410 : vector<2x128xf32>
    %413 = arith.divf %411, %412 : vector<2x128xf32>
    %414 = math.tanh %408 : vector<2x128xf32>
    %415 = vector.extract_strided_slice %413 {offsets = [0, 0], sizes = [2, 32], strides = [1, 1]} : vector<2x128xf32> to vector<2x32xf32>
    %416 = vector.extract_strided_slice %413 {offsets = [0, 32], sizes = [2, 32], strides = [1, 1]} : vector<2x128xf32> to vector<2x32xf32>
    %417 = vector.extract_strided_slice %414 {offsets = [0, 64], sizes = [2, 32], strides = [1, 1]} : vector<2x128xf32> to vector<2x32xf32>
    %418 = vector.extract_strided_slice %413 {offsets = [0, 96], sizes = [2, 32], strides = [1, 1]} : vector<2x128xf32> to vector<2x32xf32>
    %419 = arith.mulf %416, %365 : vector<2x32xf32>
    %420 = arith.mulf %415, %417 : vector<2x32xf32>
    %421 = arith.addf %419, %420 : vector<2x32xf32>
    %422 = math.tanh %421 : vector<2x32xf32>
    %423 = arith.mulf %418, %422 : vector<2x32xf32>
    %c0_191 = arith.constant 0 : index
    %c0_192 = arith.constant 0 : index
    %424 = vector.load %arg13[%c0_191, %c0_192] : memref<32x128xf32, #tpu.memory_space<vmem>>, vector<32x128xf32>
    %cst_193 = arith.constant dense<0.000000e+00> : vector<2x128xf32>
    %425 = tpu.matmul %423, %424, %cst_193 {dimension_numbers = #tpu.dot_dimension_numbers<[1], [0], [0], [1], [0, 0, 1, 1], [], []>} : vector<2x32xf32>, vector<32x128xf32>, vector<2x128xf32> -> vector<2x128xf32>
    %426 = vector.broadcast %2 : vector<1x128xf32> to vector<2x128xf32>
    %427 = arith.addf %425, %426 : vector<2x128xf32>
    %c6_194 = arith.constant 6 : index
    %c0_195 = arith.constant 0 : index
    %428 = vector.load %arg15[%c6_194, %c0_195] : memref<16x128xf32, #tpu.memory_space<vmem>>, vector<2x128xf32>
    tpu.vector_store %arg15[%c6_194, %c0_195], %427 {strides = array<i32>} : memref<16x128xf32, #tpu.memory_space<vmem>>, vector<2x128xf32>,
    %c6_196 = arith.constant 6 : index
    %c0_197 = arith.constant 0 : index
    %429 = vector.load %arg1[%c6_196, %c0_197] : memref<16x1xi32, #tpu.memory_space<vmem>>, vector<2x1xi32>
    %c0_198 = arith.constant 0 : index
    %c0_199 = arith.constant 0 : index
    %c0_200 = arith.constant 0 : index
    %430 = vector.load %arg17[%c0_198, %c0_199, %c0_200] : memref<2x8x32xf32, #tpu.memory_space<vmem>>, vector<2x8x32xf32>
    %c0_201 = arith.constant 0 : index
    %c0_202 = arith.constant 0 : index
    %c0_203 = arith.constant 0 : index
    %431 = vector.load %arg18[%c0_201, %c0_202, %c0_203] : memref<2x8x32xf32, #tpu.memory_space<vmem>>, vector<2x8x32xf32>
    %cst_204 = arith.constant dense<0.000000e+00> : vector<2x32xf32>
    %432 = tpu.matmul %423, %3, %cst_204 {dimension_numbers = #tpu.dot_dimension_numbers<[1], [0], [0], [1], [0, 0, 1, 1], [], []>} : vector<2x32xf32>, vector<32x32xf32>, vector<2x32xf32> -> vector<2x32xf32>
    %433 = vector.shape_cast %432 : vector<2x32xf32> to vector<2x1x32xf32>
    %434 = vector.broadcast %433 : vector<2x1x32xf32> to vector<2x8x32xf32>
    %435 = arith.addf %431, %434 : vector<2x8x32xf32>
    %436 = math.tanh %435 : vector<2x8x32xf32>
    %437 = vector.shape_cast %0 : vector<1x32xf32> to vector<1x1x32xf32>
    %438 = vector.broadcast %437 : vector<1x1x32xf32> to vector<2x8x32xf32>
    %439 = arith.mulf %436, %438 : vector<2x8x32xf32>
    %cst_205 = arith.constant dense<0.000000e+00> : vector<2x8xf32>
    %440 = vector.multi_reduction <add>, %439, %cst_205 [2] : vector<2x8x32xf32> to vector<2x8xf32>
    %441 = vector.shape_cast %440 : vector<2x8xf32> to vector<2x8x1xf32>
    %442 = math.exp %441 : vector<2x8x1xf32>
    %cst_206 = arith.constant dense<0.000000e+00> : vector<2x1xf32>
    %443 = vector.multi_reduction <add>, %442, %cst_206 [1] : vector<2x8x1xf32> to vector<2x1xf32>
    %444 = vector.shape_cast %443 : vector<2x1xf32> to vector<2x1x1xf32>
    %445 = tpu.reciprocal %444 {approx = true} : vector<2x1x1xf32> -> vector<2x1x1xf32>
    %446 = vector.broadcast %445 : vector<2x1x1xf32> to vector<2x8x1xf32>
    %447 = arith.mulf %442, %446 : vector<2x8x1xf32>
    %448 = vector.broadcast %447 : vector<2x8x1xf32> to vector<2x8x32xf32>
    %449 = arith.mulf %448, %430 : vector<2x8x32xf32>
    %cst_207 = arith.constant dense<0.000000e+00> : vector<2x32xf32>
    %450 = vector.multi_reduction <add>, %449, %cst_207 [1] : vector<2x8x32xf32> to vector<2x32xf32>
    %451 = vector.broadcast %429 : vector<2x1xi32> to vector<2x128xi32>
    %452 = arith.cmpi eq, %4, %451 : vector<2x128xi32>
    %453 = arith.extui %452 : vector<2x128xi1> to vector<2x128xi32>
    %454 = arith.sitofp %453 : vector<2x128xi32> to vector<2x128xf32>
    %c0_208 = arith.constant 0 : index
    %c0_209 = arith.constant 0 : index
    %455 = vector.load %arg9[%c0_208, %c0_209] : memref<32x128xf32, #tpu.memory_space<vmem>>, vector<32x128xf32>
    %cst_210 = arith.constant dense<0.000000e+00> : vector<2x128xf32>
    %456 = tpu.matmul %450, %455, %cst_210 {dimension_numbers = #tpu.dot_dimension_numbers<[1], [0], [0], [1], [0, 0, 1, 1], [], []>} : vector<2x32xf32>, vector<32x128xf32>, vector<2x128xf32> -> vector<2x128xf32>
    %c0_211 = arith.constant 0 : index
    %c0_212 = arith.constant 0 : index
    %457 = vector.load %arg10[%c0_211, %c0_212] : memref<32x128xf32, #tpu.memory_space<vmem>>, vector<32x128xf32>
    %cst_213 = arith.constant dense<0.000000e+00> : vector<2x128xf32>
    %458 = tpu.matmul %423, %457, %cst_213 {dimension_numbers = #tpu.dot_dimension_numbers<[1], [0], [0], [1], [0, 0, 1, 1], [], []>} : vector<2x32xf32>, vector<32x128xf32>, vector<2x128xf32> -> vector<2x128xf32>
    %459 = arith.addf %456, %458 : vector<2x128xf32>
    %c0_214 = arith.constant 0 : index
    %c0_215 = arith.constant 0 : index
    %460 = vector.load %arg11[%c0_214, %c0_215] : memref<128x128xf32, #tpu.memory_space<vmem>>, vector<128x128xf32>
    %cst_216 = arith.constant dense<0.000000e+00> : vector<2x128xf32>
    %461 = tpu.matmul %454, %460, %cst_216 {dimension_numbers = #tpu.dot_dimension_numbers<[1], [0], [0], [1], [0, 0, 1, 1], [], []>} : vector<2x128xf32>, vector<128x128xf32>, vector<2x128xf32> -> vector<2x128xf32>
    %462 = arith.addf %459, %461 : vector<2x128xf32>
    %463 = vector.broadcast %1 : vector<1x128xf32> to vector<2x128xf32>
    %464 = arith.addf %462, %463 : vector<2x128xf32>
    %465 = arith.negf %464 : vector<2x128xf32>
    %466 = math.exp %465 : vector<2x128xf32>
    %cst_217 = arith.constant 1.000000e+00 : f32
    %467 = vector.broadcast %cst_217 : f32 to vector<2x128xf32>
    %468 = arith.addf %467, %466 : vector<2x128xf32>
    %469 = arith.divf %467, %468 : vector<2x128xf32>
    %470 = math.tanh %464 : vector<2x128xf32>
    %471 = vector.extract_strided_slice %469 {offsets = [0, 0], sizes = [2, 32], strides = [1, 1]} : vector<2x128xf32> to vector<2x32xf32>
    %472 = vector.extract_strided_slice %469 {offsets = [0, 32], sizes = [2, 32], strides = [1, 1]} : vector<2x128xf32> to vector<2x32xf32>
    %473 = vector.extract_strided_slice %470 {offsets = [0, 64], sizes = [2, 32], strides = [1, 1]} : vector<2x128xf32> to vector<2x32xf32>
    %474 = vector.extract_strided_slice %469 {offsets = [0, 96], sizes = [2, 32], strides = [1, 1]} : vector<2x128xf32> to vector<2x32xf32>
    %475 = arith.mulf %472, %421 : vector<2x32xf32>
    %476 = arith.mulf %471, %473 : vector<2x32xf32>
    %477 = arith.addf %475, %476 : vector<2x32xf32>
    %478 = math.tanh %477 : vector<2x32xf32>
    %479 = arith.mulf %474, %478 : vector<2x32xf32>
    %c0_218 = arith.constant 0 : index
    %c0_219 = arith.constant 0 : index
    %480 = vector.load %arg13[%c0_218, %c0_219] : memref<32x128xf32, #tpu.memory_space<vmem>>, vector<32x128xf32>
    %cst_220 = arith.constant dense<0.000000e+00> : vector<2x128xf32>
    %481 = tpu.matmul %479, %480, %cst_220 {dimension_numbers = #tpu.dot_dimension_numbers<[1], [0], [0], [1], [0, 0, 1, 1], [], []>} : vector<2x32xf32>, vector<32x128xf32>, vector<2x128xf32> -> vector<2x128xf32>
    %482 = vector.broadcast %2 : vector<1x128xf32> to vector<2x128xf32>
    %483 = arith.addf %481, %482 : vector<2x128xf32>
    %c8_221 = arith.constant 8 : index
    %c0_222 = arith.constant 0 : index
    %484 = vector.load %arg15[%c8_221, %c0_222] : memref<16x128xf32, #tpu.memory_space<vmem>>, vector<2x128xf32>
    tpu.vector_store %arg15[%c8_221, %c0_222], %483 {strides = array<i32>} : memref<16x128xf32, #tpu.memory_space<vmem>>, vector<2x128xf32>,
    %cst_223 = arith.constant dense<0xFF800000> : vector<2xf32>
    %485 = vector.multi_reduction <maximumf>, %483, %cst_223 [1] : vector<2x128xf32> to vector<2xf32>
    %486 = vector.shape_cast %485 : vector<2xf32> to vector<2x1xf32>
    %487 = vector.broadcast %486 : vector<2x1xf32> to vector<2x128xf32>
    %488 = arith.cmpf oeq, %483, %487 : vector<2x128xf32>
    %c128_i32_224 = arith.constant 128 : i32
    %489 = vector.broadcast %c128_i32_224 : i32 to vector<2x128xi32>
    %490 = arith.select %488, %4, %489 : vector<2x128xi1>, vector<2x128xi32>
    %cst_225 = arith.constant dense<2147483647> : vector<2xi32>
    %491 = vector.multi_reduction <minsi>, %490, %cst_225 [1] : vector<2x128xi32> to vector<2xi32>
    %492 = vector.shape_cast %491 : vector<2xi32> to vector<2x1xi32>
    %c0_226 = arith.constant 0 : index
    %c0_227 = arith.constant 0 : index
    %c0_228 = arith.constant 0 : index
    %493 = vector.load %arg17[%c0_226, %c0_227, %c0_228] : memref<2x8x32xf32, #tpu.memory_space<vmem>>, vector<2x8x32xf32>
    %c0_229 = arith.constant 0 : index
    %c0_230 = arith.constant 0 : index
    %c0_231 = arith.constant 0 : index
    %494 = vector.load %arg18[%c0_229, %c0_230, %c0_231] : memref<2x8x32xf32, #tpu.memory_space<vmem>>, vector<2x8x32xf32>
    %cst_232 = arith.constant dense<0.000000e+00> : vector<2x32xf32>
    %495 = tpu.matmul %479, %3, %cst_232 {dimension_numbers = #tpu.dot_dimension_numbers<[1], [0], [0], [1], [0, 0, 1, 1], [], []>} : vector<2x32xf32>, vector<32x32xf32>, vector<2x32xf32> -> vector<2x32xf32>
    %496 = vector.shape_cast %495 : vector<2x32xf32> to vector<2x1x32xf32>
    %497 = vector.broadcast %496 : vector<2x1x32xf32> to vector<2x8x32xf32>
    %498 = arith.addf %494, %497 : vector<2x8x32xf32>
    %499 = math.tanh %498 : vector<2x8x32xf32>
    %500 = vector.shape_cast %0 : vector<1x32xf32> to vector<1x1x32xf32>
    %501 = vector.broadcast %500 : vector<1x1x32xf32> to vector<2x8x32xf32>
    %502 = arith.mulf %499, %501 : vector<2x8x32xf32>
    %cst_233 = arith.constant dense<0.000000e+00> : vector<2x8xf32>
    %503 = vector.multi_reduction <add>, %502, %cst_233 [2] : vector<2x8x32xf32> to vector<2x8xf32>
    %504 = vector.shape_cast %503 : vector<2x8xf32> to vector<2x8x1xf32>
    %505 = math.exp %504 : vector<2x8x1xf32>
    %cst_234 = arith.constant dense<0.000000e+00> : vector<2x1xf32>
    %506 = vector.multi_reduction <add>, %505, %cst_234 [1] : vector<2x8x1xf32> to vector<2x1xf32>
    %507 = vector.shape_cast %506 : vector<2x1xf32> to vector<2x1x1xf32>
    %508 = tpu.reciprocal %507 {approx = true} : vector<2x1x1xf32> -> vector<2x1x1xf32>
    %509 = vector.broadcast %508 : vector<2x1x1xf32> to vector<2x8x1xf32>
    %510 = arith.mulf %505, %509 : vector<2x8x1xf32>
    %511 = vector.broadcast %510 : vector<2x8x1xf32> to vector<2x8x32xf32>
    %512 = arith.mulf %511, %493 : vector<2x8x32xf32>
    %cst_235 = arith.constant dense<0.000000e+00> : vector<2x32xf32>
    %513 = vector.multi_reduction <add>, %512, %cst_235 [1] : vector<2x8x32xf32> to vector<2x32xf32>
    %514 = vector.broadcast %492 : vector<2x1xi32> to vector<2x128xi32>
    %515 = arith.cmpi eq, %4, %514 : vector<2x128xi32>
    %516 = arith.extui %515 : vector<2x128xi1> to vector<2x128xi32>
    %517 = arith.sitofp %516 : vector<2x128xi32> to vector<2x128xf32>
    %c0_236 = arith.constant 0 : index
    %c0_237 = arith.constant 0 : index
    %518 = vector.load %arg9[%c0_236, %c0_237] : memref<32x128xf32, #tpu.memory_space<vmem>>, vector<32x128xf32>
    %cst_238 = arith.constant dense<0.000000e+00> : vector<2x128xf32>
    %519 = tpu.matmul %513, %518, %cst_238 {dimension_numbers = #tpu.dot_dimension_numbers<[1], [0], [0], [1], [0, 0, 1, 1], [], []>} : vector<2x32xf32>, vector<32x128xf32>, vector<2x128xf32> -> vector<2x128xf32>
    %c0_239 = arith.constant 0 : index
    %c0_240 = arith.constant 0 : index
    %520 = vector.load %arg10[%c0_239, %c0_240] : memref<32x128xf32, #tpu.memory_space<vmem>>, vector<32x128xf32>
    %cst_241 = arith.constant dense<0.000000e+00> : vector<2x128xf32>
    %521 = tpu.matmul %479, %520, %cst_241 {dimension_numbers = #tpu.dot_dimension_numbers<[1], [0], [0], [1], [0, 0, 1, 1], [], []>} : vector<2x32xf32>, vector<32x128xf32>, vector<2x128xf32> -> vector<2x128xf32>
    %522 = arith.addf %519, %521 : vector<2x128xf32>
    %c0_242 = arith.constant 0 : index
    %c0_243 = arith.constant 0 : index
    %523 = vector.load %arg11[%c0_242, %c0_243] : memref<128x128xf32, #tpu.memory_space<vmem>>, vector<128x128xf32>
    %cst_244 = arith.constant dense<0.000000e+00> : vector<2x128xf32>
    %524 = tpu.matmul %517, %523, %cst_244 {dimension_numbers = #tpu.dot_dimension_numbers<[1], [0], [0], [1], [0, 0, 1, 1], [], []>} : vector<2x128xf32>, vector<128x128xf32>, vector<2x128xf32> -> vector<2x128xf32>
    %525 = arith.addf %522, %524 : vector<2x128xf32>
    %526 = vector.broadcast %1 : vector<1x128xf32> to vector<2x128xf32>
    %527 = arith.addf %525, %526 : vector<2x128xf32>
    %528 = arith.negf %527 : vector<2x128xf32>
    %529 = math.exp %528 : vector<2x128xf32>
    %cst_245 = arith.constant 1.000000e+00 : f32
    %530 = vector.broadcast %cst_245 : f32 to vector<2x128xf32>
    %531 = arith.addf %530, %529 : vector<2x128xf32>
    %532 = arith.divf %530, %531 : vector<2x128xf32>
    %533 = math.tanh %527 : vector<2x128xf32>
    %534 = vector.extract_strided_slice %532 {offsets = [0, 0], sizes = [2, 32], strides = [1, 1]} : vector<2x128xf32> to vector<2x32xf32>
    %535 = vector.extract_strided_slice %532 {offsets = [0, 32], sizes = [2, 32], strides = [1, 1]} : vector<2x128xf32> to vector<2x32xf32>
    %536 = vector.extract_strided_slice %533 {offsets = [0, 64], sizes = [2, 32], strides = [1, 1]} : vector<2x128xf32> to vector<2x32xf32>
    %537 = vector.extract_strided_slice %532 {offsets = [0, 96], sizes = [2, 32], strides = [1, 1]} : vector<2x128xf32> to vector<2x32xf32>
    %538 = arith.mulf %535, %477 : vector<2x32xf32>
    %539 = arith.mulf %534, %536 : vector<2x32xf32>
    %540 = arith.addf %538, %539 : vector<2x32xf32>
    %541 = math.tanh %540 : vector<2x32xf32>
    %542 = arith.mulf %537, %541 : vector<2x32xf32>
    %c0_246 = arith.constant 0 : index
    %c0_247 = arith.constant 0 : index
    %543 = vector.load %arg13[%c0_246, %c0_247] : memref<32x128xf32, #tpu.memory_space<vmem>>, vector<32x128xf32>
    %cst_248 = arith.constant dense<0.000000e+00> : vector<2x128xf32>
    %544 = tpu.matmul %542, %543, %cst_248 {dimension_numbers = #tpu.dot_dimension_numbers<[1], [0], [0], [1], [0, 0, 1, 1], [], []>} : vector<2x32xf32>, vector<32x128xf32>, vector<2x128xf32> -> vector<2x128xf32>
    %545 = vector.broadcast %2 : vector<1x128xf32> to vector<2x128xf32>
    %546 = arith.addf %544, %545 : vector<2x128xf32>
    %c10_249 = arith.constant 10 : index
    %c0_250 = arith.constant 0 : index
    %547 = vector.load %arg15[%c10_249, %c0_250] : memref<16x128xf32, #tpu.memory_space<vmem>>, vector<2x128xf32>
    tpu.vector_store %arg15[%c10_249, %c0_250], %546 {strides = array<i32>} : memref<16x128xf32, #tpu.memory_space<vmem>>, vector<2x128xf32>,
    %c10_251 = arith.constant 10 : index
    %c0_252 = arith.constant 0 : index
    %548 = vector.load %arg1[%c10_251, %c0_252] : memref<16x1xi32, #tpu.memory_space<vmem>>, vector<2x1xi32>
    %c0_253 = arith.constant 0 : index
    %c0_254 = arith.constant 0 : index
    %c0_255 = arith.constant 0 : index
    %549 = vector.load %arg17[%c0_253, %c0_254, %c0_255] : memref<2x8x32xf32, #tpu.memory_space<vmem>>, vector<2x8x32xf32>
    %c0_256 = arith.constant 0 : index
    %c0_257 = arith.constant 0 : index
    %c0_258 = arith.constant 0 : index
    %550 = vector.load %arg18[%c0_256, %c0_257, %c0_258] : memref<2x8x32xf32, #tpu.memory_space<vmem>>, vector<2x8x32xf32>
    %cst_259 = arith.constant dense<0.000000e+00> : vector<2x32xf32>
    %551 = tpu.matmul %542, %3, %cst_259 {dimension_numbers = #tpu.dot_dimension_numbers<[1], [0], [0], [1], [0, 0, 1, 1], [], []>} : vector<2x32xf32>, vector<32x32xf32>, vector<2x32xf32> -> vector<2x32xf32>
    %552 = vector.shape_cast %551 : vector<2x32xf32> to vector<2x1x32xf32>
    %553 = vector.broadcast %552 : vector<2x1x32xf32> to vector<2x8x32xf32>
    %554 = arith.addf %550, %553 : vector<2x8x32xf32>
    %555 = math.tanh %554 : vector<2x8x32xf32>
    %556 = vector.shape_cast %0 : vector<1x32xf32> to vector<1x1x32xf32>
    %557 = vector.broadcast %556 : vector<1x1x32xf32> to vector<2x8x32xf32>
    %558 = arith.mulf %555, %557 : vector<2x8x32xf32>
    %cst_260 = arith.constant dense<0.000000e+00> : vector<2x8xf32>
    %559 = vector.multi_reduction <add>, %558, %cst_260 [2] : vector<2x8x32xf32> to vector<2x8xf32>
    %560 = vector.shape_cast %559 : vector<2x8xf32> to vector<2x8x1xf32>
    %561 = math.exp %560 : vector<2x8x1xf32>
    %cst_261 = arith.constant dense<0.000000e+00> : vector<2x1xf32>
    %562 = vector.multi_reduction <add>, %561, %cst_261 [1] : vector<2x8x1xf32> to vector<2x1xf32>
    %563 = vector.shape_cast %562 : vector<2x1xf32> to vector<2x1x1xf32>
    %564 = tpu.reciprocal %563 {approx = true} : vector<2x1x1xf32> -> vector<2x1x1xf32>
    %565 = vector.broadcast %564 : vector<2x1x1xf32> to vector<2x8x1xf32>
    %566 = arith.mulf %561, %565 : vector<2x8x1xf32>
    %567 = vector.broadcast %566 : vector<2x8x1xf32> to vector<2x8x32xf32>
    %568 = arith.mulf %567, %549 : vector<2x8x32xf32>
    %cst_262 = arith.constant dense<0.000000e+00> : vector<2x32xf32>
    %569 = vector.multi_reduction <add>, %568, %cst_262 [1] : vector<2x8x32xf32> to vector<2x32xf32>
    %570 = vector.broadcast %548 : vector<2x1xi32> to vector<2x128xi32>
    %571 = arith.cmpi eq, %4, %570 : vector<2x128xi32>
    %572 = arith.extui %571 : vector<2x128xi1> to vector<2x128xi32>
    %573 = arith.sitofp %572 : vector<2x128xi32> to vector<2x128xf32>
    %c0_263 = arith.constant 0 : index
    %c0_264 = arith.constant 0 : index
    %574 = vector.load %arg9[%c0_263, %c0_264] : memref<32x128xf32, #tpu.memory_space<vmem>>, vector<32x128xf32>
    %cst_265 = arith.constant dense<0.000000e+00> : vector<2x128xf32>
    %575 = tpu.matmul %569, %574, %cst_265 {dimension_numbers = #tpu.dot_dimension_numbers<[1], [0], [0], [1], [0, 0, 1, 1], [], []>} : vector<2x32xf32>, vector<32x128xf32>, vector<2x128xf32> -> vector<2x128xf32>
    %c0_266 = arith.constant 0 : index
    %c0_267 = arith.constant 0 : index
    %576 = vector.load %arg10[%c0_266, %c0_267] : memref<32x128xf32, #tpu.memory_space<vmem>>, vector<32x128xf32>
    %cst_268 = arith.constant dense<0.000000e+00> : vector<2x128xf32>
    %577 = tpu.matmul %542, %576, %cst_268 {dimension_numbers = #tpu.dot_dimension_numbers<[1], [0], [0], [1], [0, 0, 1, 1], [], []>} : vector<2x32xf32>, vector<32x128xf32>, vector<2x128xf32> -> vector<2x128xf32>
    %578 = arith.addf %575, %577 : vector<2x128xf32>
    %c0_269 = arith.constant 0 : index
    %c0_270 = arith.constant 0 : index
    %579 = vector.load %arg11[%c0_269, %c0_270] : memref<128x128xf32, #tpu.memory_space<vmem>>, vector<128x128xf32>
    %cst_271 = arith.constant dense<0.000000e+00> : vector<2x128xf32>
    %580 = tpu.matmul %573, %579, %cst_271 {dimension_numbers = #tpu.dot_dimension_numbers<[1], [0], [0], [1], [0, 0, 1, 1], [], []>} : vector<2x128xf32>, vector<128x128xf32>, vector<2x128xf32> -> vector<2x128xf32>
    %581 = arith.addf %578, %580 : vector<2x128xf32>
    %582 = vector.broadcast %1 : vector<1x128xf32> to vector<2x128xf32>
    %583 = arith.addf %581, %582 : vector<2x128xf32>
    %584 = arith.negf %583 : vector<2x128xf32>
    %585 = math.exp %584 : vector<2x128xf32>
    %cst_272 = arith.constant 1.000000e+00 : f32
    %586 = vector.broadcast %cst_272 : f32 to vector<2x128xf32>
    %587 = arith.addf %586, %585 : vector<2x128xf32>
    %588 = arith.divf %586, %587 : vector<2x128xf32>
    %589 = math.tanh %583 : vector<2x128xf32>
    %590 = vector.extract_strided_slice %588 {offsets = [0, 0], sizes = [2, 32], strides = [1, 1]} : vector<2x128xf32> to vector<2x32xf32>
    %591 = vector.extract_strided_slice %588 {offsets = [0, 32], sizes = [2, 32], strides = [1, 1]} : vector<2x128xf32> to vector<2x32xf32>
    %592 = vector.extract_strided_slice %589 {offsets = [0, 64], sizes = [2, 32], strides = [1, 1]} : vector<2x128xf32> to vector<2x32xf32>
    %593 = vector.extract_strided_slice %588 {offsets = [0, 96], sizes = [2, 32], strides = [1, 1]} : vector<2x128xf32> to vector<2x32xf32>
    %594 = arith.mulf %591, %540 : vector<2x32xf32>
    %595 = arith.mulf %590, %592 : vector<2x32xf32>
    %596 = arith.addf %594, %595 : vector<2x32xf32>
    %597 = math.tanh %596 : vector<2x32xf32>
    %598 = arith.mulf %593, %597 : vector<2x32xf32>
    %c0_273 = arith.constant 0 : index
    %c0_274 = arith.constant 0 : index
    %599 = vector.load %arg13[%c0_273, %c0_274] : memref<32x128xf32, #tpu.memory_space<vmem>>, vector<32x128xf32>
    %cst_275 = arith.constant dense<0.000000e+00> : vector<2x128xf32>
    %600 = tpu.matmul %598, %599, %cst_275 {dimension_numbers = #tpu.dot_dimension_numbers<[1], [0], [0], [1], [0, 0, 1, 1], [], []>} : vector<2x32xf32>, vector<32x128xf32>, vector<2x128xf32> -> vector<2x128xf32>
    %601 = vector.broadcast %2 : vector<1x128xf32> to vector<2x128xf32>
    %602 = arith.addf %600, %601 : vector<2x128xf32>
    %c12_276 = arith.constant 12 : index
    %c0_277 = arith.constant 0 : index
    %603 = vector.load %arg15[%c12_276, %c0_277] : memref<16x128xf32, #tpu.memory_space<vmem>>, vector<2x128xf32>
    tpu.vector_store %arg15[%c12_276, %c0_277], %602 {strides = array<i32>} : memref<16x128xf32, #tpu.memory_space<vmem>>, vector<2x128xf32>,
    %cst_278 = arith.constant dense<0xFF800000> : vector<2xf32>
    %604 = vector.multi_reduction <maximumf>, %602, %cst_278 [1] : vector<2x128xf32> to vector<2xf32>
    %605 = vector.shape_cast %604 : vector<2xf32> to vector<2x1xf32>
    %606 = vector.broadcast %605 : vector<2x1xf32> to vector<2x128xf32>
    %607 = arith.cmpf oeq, %602, %606 : vector<2x128xf32>
    %c128_i32_279 = arith.constant 128 : i32
    %608 = vector.broadcast %c128_i32_279 : i32 to vector<2x128xi32>
    %609 = arith.select %607, %4, %608 : vector<2x128xi1>, vector<2x128xi32>
    %cst_280 = arith.constant dense<2147483647> : vector<2xi32>
    %610 = vector.multi_reduction <minsi>, %609, %cst_280 [1] : vector<2x128xi32> to vector<2xi32>
    %611 = vector.shape_cast %610 : vector<2xi32> to vector<2x1xi32>
    %c0_281 = arith.constant 0 : index
    %c0_282 = arith.constant 0 : index
    %c0_283 = arith.constant 0 : index
    %612 = vector.load %arg17[%c0_281, %c0_282, %c0_283] : memref<2x8x32xf32, #tpu.memory_space<vmem>>, vector<2x8x32xf32>
    %c0_284 = arith.constant 0 : index
    %c0_285 = arith.constant 0 : index
    %c0_286 = arith.constant 0 : index
    %613 = vector.load %arg18[%c0_284, %c0_285, %c0_286] : memref<2x8x32xf32, #tpu.memory_space<vmem>>, vector<2x8x32xf32>
    %cst_287 = arith.constant dense<0.000000e+00> : vector<2x32xf32>
    %614 = tpu.matmul %598, %3, %cst_287 {dimension_numbers = #tpu.dot_dimension_numbers<[1], [0], [0], [1], [0, 0, 1, 1], [], []>} : vector<2x32xf32>, vector<32x32xf32>, vector<2x32xf32> -> vector<2x32xf32>
    %615 = vector.shape_cast %614 : vector<2x32xf32> to vector<2x1x32xf32>
    %616 = vector.broadcast %615 : vector<2x1x32xf32> to vector<2x8x32xf32>
    %617 = arith.addf %613, %616 : vector<2x8x32xf32>
    %618 = math.tanh %617 : vector<2x8x32xf32>
    %619 = vector.shape_cast %0 : vector<1x32xf32> to vector<1x1x32xf32>
    %620 = vector.broadcast %619 : vector<1x1x32xf32> to vector<2x8x32xf32>
    %621 = arith.mulf %618, %620 : vector<2x8x32xf32>
    %cst_288 = arith.constant dense<0.000000e+00> : vector<2x8xf32>
    %622 = vector.multi_reduction <add>, %621, %cst_288 [2] : vector<2x8x32xf32> to vector<2x8xf32>
    %623 = vector.shape_cast %622 : vector<2x8xf32> to vector<2x8x1xf32>
    %624 = math.exp %623 : vector<2x8x1xf32>
    %cst_289 = arith.constant dense<0.000000e+00> : vector<2x1xf32>
    %625 = vector.multi_reduction <add>, %624, %cst_289 [1] : vector<2x8x1xf32> to vector<2x1xf32>
    %626 = vector.shape_cast %625 : vector<2x1xf32> to vector<2x1x1xf32>
    %627 = tpu.reciprocal %626 {approx = true} : vector<2x1x1xf32> -> vector<2x1x1xf32>
    %628 = vector.broadcast %627 : vector<2x1x1xf32> to vector<2x8x1xf32>
    %629 = arith.mulf %624, %628 : vector<2x8x1xf32>
    %630 = vector.broadcast %629 : vector<2x8x1xf32> to vector<2x8x32xf32>
    %631 = arith.mulf %630, %612 : vector<2x8x32xf32>
    %cst_290 = arith.constant dense<0.000000e+00> : vector<2x32xf32>
    %632 = vector.multi_reduction <add>, %631, %cst_290 [1] : vector<2x8x32xf32> to vector<2x32xf32>
    %633 = vector.broadcast %611 : vector<2x1xi32> to vector<2x128xi32>
    %634 = arith.cmpi eq, %4, %633 : vector<2x128xi32>
    %635 = arith.extui %634 : vector<2x128xi1> to vector<2x128xi32>
    %636 = arith.sitofp %635 : vector<2x128xi32> to vector<2x128xf32>
    %c0_291 = arith.constant 0 : index
    %c0_292 = arith.constant 0 : index
    %637 = vector.load %arg9[%c0_291, %c0_292] : memref<32x128xf32, #tpu.memory_space<vmem>>, vector<32x128xf32>
    %cst_293 = arith.constant dense<0.000000e+00> : vector<2x128xf32>
    %638 = tpu.matmul %632, %637, %cst_293 {dimension_numbers = #tpu.dot_dimension_numbers<[1], [0], [0], [1], [0, 0, 1, 1], [], []>} : vector<2x32xf32>, vector<32x128xf32>, vector<2x128xf32> -> vector<2x128xf32>
    %c0_294 = arith.constant 0 : index
    %c0_295 = arith.constant 0 : index
    %639 = vector.load %arg10[%c0_294, %c0_295] : memref<32x128xf32, #tpu.memory_space<vmem>>, vector<32x128xf32>
    %cst_296 = arith.constant dense<0.000000e+00> : vector<2x128xf32>
    %640 = tpu.matmul %598, %639, %cst_296 {dimension_numbers = #tpu.dot_dimension_numbers<[1], [0], [0], [1], [0, 0, 1, 1], [], []>} : vector<2x32xf32>, vector<32x128xf32>, vector<2x128xf32> -> vector<2x128xf32>
    %641 = arith.addf %638, %640 : vector<2x128xf32>
    %c0_297 = arith.constant 0 : index
    %c0_298 = arith.constant 0 : index
    %642 = vector.load %arg11[%c0_297, %c0_298] : memref<128x128xf32, #tpu.memory_space<vmem>>, vector<128x128xf32>
    %cst_299 = arith.constant dense<0.000000e+00> : vector<2x128xf32>
    %643 = tpu.matmul %636, %642, %cst_299 {dimension_numbers = #tpu.dot_dimension_numbers<[1], [0], [0], [1], [0, 0, 1, 1], [], []>} : vector<2x128xf32>, vector<128x128xf32>, vector<2x128xf32> -> vector<2x128xf32>
    %644 = arith.addf %641, %643 : vector<2x128xf32>
    %645 = vector.broadcast %1 : vector<1x128xf32> to vector<2x128xf32>
    %646 = arith.addf %644, %645 : vector<2x128xf32>
    %647 = arith.negf %646 : vector<2x128xf32>
    %648 = math.exp %647 : vector<2x128xf32>
    %cst_300 = arith.constant 1.000000e+00 : f32
    %649 = vector.broadcast %cst_300 : f32 to vector<2x128xf32>
    %650 = arith.addf %649, %648 : vector<2x128xf32>
    %651 = arith.divf %649, %650 : vector<2x128xf32>
    %652 = math.tanh %646 : vector<2x128xf32>
    %653 = vector.extract_strided_slice %651 {offsets = [0, 0], sizes = [2, 32], strides = [1, 1]} : vector<2x128xf32> to vector<2x32xf32>
    %654 = vector.extract_strided_slice %651 {offsets = [0, 32], sizes = [2, 32], strides = [1, 1]} : vector<2x128xf32> to vector<2x32xf32>
    %655 = vector.extract_strided_slice %652 {offsets = [0, 64], sizes = [2, 32], strides = [1, 1]} : vector<2x128xf32> to vector<2x32xf32>
    %656 = vector.extract_strided_slice %651 {offsets = [0, 96], sizes = [2, 32], strides = [1, 1]} : vector<2x128xf32> to vector<2x32xf32>
    %657 = arith.mulf %654, %596 : vector<2x32xf32>
    %658 = arith.mulf %653, %655 : vector<2x32xf32>
    %659 = arith.addf %657, %658 : vector<2x32xf32>
    %660 = math.tanh %659 : vector<2x32xf32>
    %661 = arith.mulf %656, %660 : vector<2x32xf32>
    %c0_301 = arith.constant 0 : index
    %c0_302 = arith.constant 0 : index
    %662 = vector.load %arg13[%c0_301, %c0_302] : memref<32x128xf32, #tpu.memory_space<vmem>>, vector<32x128xf32>
    %cst_303 = arith.constant dense<0.000000e+00> : vector<2x128xf32>
    %663 = tpu.matmul %661, %662, %cst_303 {dimension_numbers = #tpu.dot_dimension_numbers<[1], [0], [0], [1], [0, 0, 1, 1], [], []>} : vector<2x32xf32>, vector<32x128xf32>, vector<2x128xf32> -> vector<2x128xf32>
    %664 = vector.broadcast %2 : vector<1x128xf32> to vector<2x128xf32>
    %665 = arith.addf %663, %664 : vector<2x128xf32>
    %c14_304 = arith.constant 14 : index
    %c0_305 = arith.constant 0 : index
    %666 = vector.load %arg15[%c14_304, %c0_305] : memref<16x128xf32, #tpu.memory_space<vmem>>, vector<2x128xf32>
    tpu.vector_store %arg15[%c14_304, %c0_305], %665 {strides = array<i32>} : memref<16x128xf32, #tpu.memory_space<vmem>>, vector<2x128xf32>,
    return
  }
}

</mosaic_0001>

<llo_original>
// kernel: tpu_custom_call.1
$region0: #{tpu_custom_call.1}
  #allocation0 [shape = 'u32[]', space=smem, size = 0x4, offset = 0x4, fixed_abs, tag = 'smem constant byte address 0x4 - core index']
  #allocation1 [shape = 'u32[72,128]{1,0:T(1,128)}', space=vmem, size = 0x9000, scoped, tag = 'internal scratch']
  #allocation2 [shape = 'f32[16,128]{1,0:T(8,128)}', space=vmem, size = 0x2000, scoped, tag = 'scratch operand']
  #allocation3 [shape = 'f32[2,8,32]{2,1,0:T(8,128)}', space=vmem, size = 0x2000, scoped, tag = 'scratch operand']
  #allocation4 [shape = 'f32[2,8,32]{2,1,0:T(8,128)}', space=vmem, size = 0x2000, scoped, tag = 'scratch operand']
  %s0 = inlined_call_operand.vmem [shape: f32[16,16], index: 0, kind: input, shape index: {}]
  %s1 = inlined_call_operand.vmem [shape: s32[16,1], index: 1, kind: input, shape index: {}]
  %s2 = inlined_call_operand.hbm [shape: f32[16,128], index: 2, kind: input, shape index: {}]
  %s3 = inlined_call_operand.hbm [shape: f32[32,128], index: 3, kind: input, shape index: {}]
  %s4 = inlined_call_operand.vmem [shape: f32[1,128], index: 4, kind: input, shape index: {}]
  %s5 = inlined_call_operand.hbm [shape: f32[32,32], index: 5, kind: input, shape index: {}]
  %s6 = inlined_call_operand.vmem [shape: f32[1,32], index: 6, kind: input, shape index: {}]
  %s7 = inlined_call_operand.hbm [shape: f32[32,32], index: 7, kind: input, shape index: {}]
  %s8 = inlined_call_operand.vmem [shape: f32[1,32], index: 8, kind: input, shape index: {}]
  %s9 = inlined_call_operand.hbm [shape: f32[32,128], index: 9, kind: input, shape index: {}]
  %s10 = inlined_call_operand.hbm [shape: f32[32,128], index: 10, kind: input, shape index: {}]
  %s11 = inlined_call_operand.hbm [shape: f32[128,128], index: 11, kind: input, shape index: {}]
  %s12 = inlined_call_operand.vmem [shape: f32[1,128], index: 12, kind: input, shape index: {}]
  %s13 = inlined_call_operand.hbm [shape: f32[32,128], index: 13, kind: input, shape index: {}]
  %s14 = inlined_call_operand.vmem [shape: f32[1,128], index: 14, kind: input, shape index: {}]
  %s15 = inlined_call_operand.hbm [shape: f32[16,128], index: 15, kind: output, shape index: {}]
  %s16 = sld [smem:[#allocation0]]
  $region102: #{tpu_custom_call.1} parent=0
    _
  %s18 = ssub.s32 1, %s16
  %s19 = scalar_select 0, %s18, %s16
  $region1: #{tpu_custom_call.1} parent=0
    #allocation5 [shape = 'u8[8192]{0}', space=vmem, size = 0x2000, scoped, tag = 'input window, operand 2, single buffered']
    #allocation6 [shape = 's32[1]{0}', space=sflag, size = 0x4, scoped, tag = 'scoped memory for tpu_custom_call.1']
    #allocation7 [shape = 's32[1]{0}', space=sflag, size = 0x4, scoped, tag = 'scoped memory for tpu_custom_call.1']
    #allocation8 [shape = 'u8[16384]{0}', space=vmem, size = 0x4000, scoped, tag = 'input window, operand 3, single buffered']
    #allocation9 [shape = 's32[1]{0}', space=sflag, size = 0x4, scoped, tag = 'scoped memory for tpu_custom_call.1']
    #allocation10 [shape = 'u8[16384]{0}', space=vmem, size = 0x4000, scoped, tag = 'input window, operand 5, single buffered']
    #allocation11 [shape = 'u8[16384]{0}', space=vmem, size = 0x4000, scoped, tag = 'input window, operand 7, single buffered']
    #allocation12 [shape = 's32[1]{0}', space=sflag, size = 0x4, scoped, tag = 'scoped memory for tpu_custom_call.1']
    #allocation13 [shape = 'u8[16384]{0}', space=vmem, size = 0x4000, scoped, tag = 'input window, operand 9, single buffered']
    #allocation14 [shape = 'u8[16384]{0}', space=vmem, size = 0x4000, scoped, tag = 'input window, operand 10, single buffered']
    #allocation15 [shape = 's32[1]{0}', space=sflag, size = 0x4, scoped, tag = 'scoped memory for tpu_custom_call.1']
    #allocation16 [shape = 'u8[65536]{0}', space=vmem, size = 0x10000, scoped, tag = 'input window, operand 11, single buffered']
    #allocation17 [shape = 'u8[16384]{0}', space=vmem, size = 0x4000, scoped, tag = 'input window, operand 13, single buffered']
    #allocation18 [shape = 's32[1]{0}', space=sflag, size = 0x4, scoped, tag = 'scoped memory for tpu_custom_call.1']
    #allocation19 [shape = 'u8[8192]{0}', space=vmem, size = 0x2000, scoped, tag = 'output window, operand 0, single buffered']
    %20 = vsyncpa [#allocation6], 0
    %21 = vsyncpa [#allocation9], 0
    %22 = vsyncpa [#allocation12], 0
    %23 = vsyncpa [#allocation15], 0
    %24 = vsyncpa [#allocation18], 0
    %25 = vsyncpa [#allocation7], 0
    // Predicated region
    $region2: #{tpu_custom_call.1} parent=1 // pred_check
      _
    $region3: #{tpu_custom_call.1} parent=1 // pred_check_branch
      %27 = sbr.rel (0) target = $region5
    $region4: #{tpu_custom_call.1} parent=1 // pred_region
      _
    $region5: #{tpu_custom_call.1} parent=1 // pred_fallthru
      _
    // Predicated region
    $region6: #{tpu_custom_call.1} parent=1 // pred_check
      _
    $region7: #{tpu_custom_call.1} parent=1 // pred_check_branch
      %29 = sbr.rel (0) target = $region9
    $region8: #{tpu_custom_call.1} parent=1 // pred_region
      _
    $region9: #{tpu_custom_call.1} parent=1 // pred_fallthru
      _
    // Predicated region
    $region10: #{tpu_custom_call.1} parent=1 // pred_check
      _
    $region11: #{tpu_custom_call.1} parent=1 // pred_check_branch
      %31 = sbr.rel (0) target = $region13
    $region12: #{tpu_custom_call.1} parent=1 // pred_region
      %33 = vsyncadd [#allocation6], 0
      %s34 = sshll.u32 %s2, 4
      %s35 = int_to_ptr.hbm [resolvable:$true] %s34
      %s36 = sshll.u32 [#allocation5], 4
      %s37 = int_to_ptr.vmem [resolvable:$true] %s36
      %42 = dma.hbm_to_vmem [thread:$0]  %s35, 256, %s37, [#allocation6], 128, 128, 8
    $region13: #{tpu_custom_call.1} parent=1 // pred_fallthru
      _
    // Predicated region
    $region14: #{tpu_custom_call.1} parent=1 // pred_check
      _
    $region15: #{tpu_custom_call.1} parent=1 // pred_check_branch
      %44 = sbr.rel (0) target = $region17
    $region16: #{tpu_custom_call.1} parent=1 // pred_region
      %46 = vsyncadd [#allocation9], 0
      %s47 = sshll.u32 %s3, 4
      %s48 = int_to_ptr.hbm [resolvable:$true] %s47
      %s49 = sshll.u32 [#allocation8], 4
      %s50 = int_to_ptr.vmem [resolvable:$true] %s49
      %55 = dma.hbm_to_vmem [thread:$0]  %s48, 512, %s50, [#allocation9], 128, 128, 8
    $region17: #{tpu_custom_call.1} parent=1 // pred_fallthru
      _
    // Predicated region
    $region18: #{tpu_custom_call.1} parent=1 // pred_check
      _
    $region19: #{tpu_custom_call.1} parent=1 // pred_check_branch
      %57 = sbr.rel (0) target = $region21
    $region20: #{tpu_custom_call.1} parent=1 // pred_region
      _
    $region21: #{tpu_custom_call.1} parent=1 // pred_fallthru
      _
    // Predicated region
    $region22: #{tpu_custom_call.1} parent=1 // pred_check
      _
    $region23: #{tpu_custom_call.1} parent=1 // pred_check_branch
      %59 = sbr.rel (0) target = $region25
    $region24: #{tpu_custom_call.1} parent=1 // pred_region
      %61 = vsyncadd [#allocation9], 0
      %s62 = sshll.u32 %s5, 4
      %s63 = int_to_ptr.hbm [resolvable:$true] %s62
      %s64 = sshll.u32 [#allocation10], 4
      %s65 = int_to_ptr.vmem [resolvable:$true] %s64
      %70 = dma.hbm_to_vmem [thread:$0]  %s63, 512, %s65, [#allocation9], 128, 128, 8
    $region25: #{tpu_custom_call.1} parent=1 // pred_fallthru
      _
    // Predicated region
    $region26: #{tpu_custom_call.1} parent=1 // pred_check
      _
    $region27: #{tpu_custom_call.1} parent=1 // pred_check_branch
      %72 = sbr.rel (0) target = $region29
    $region28: #{tpu_custom_call.1} parent=1 // pred_region
      _
    $region29: #{tpu_custom_call.1} parent=1 // pred_fallthru
      _
    // Predicated region
    $region30: #{tpu_custom_call.1} parent=1 // pred_check
      _
    $region31: #{tpu_custom_call.1} parent=1 // pred_check_branch
      %74 = sbr.rel (0) target = $region33
    $region32: #{tpu_custom_call.1} parent=1 // pred_region
      %76 = vsyncadd [#allocation12], 0
      %s77 = sshll.u32 %s7, 4
      %s78 = int_to_ptr.hbm [resolvable:$true] %s77
      %s79 = sshll.u32 [#allocation11], 4
      %s80 = int_to_ptr.vmem [resolvable:$true] %s79
      %85 = dma.hbm_to_vmem [thread:$0]  %s78, 512, %s80, [#allocation12], 128, 128, 8
    $region33: #{tpu_custom_call.1} parent=1 // pred_fallthru
      _
    // Predicated region
    $region34: #{tpu_custom_call.1} parent=1 // pred_check
      _
    $region35: #{tpu_custom_call.1} parent=1 // pred_check_branch
      %87 = sbr.rel (0) target = $region37
    $region36: #{tpu_custom_call.1} parent=1 // pred_region
      _
    $region37: #{tpu_custom_call.1} parent=1 // pred_fallthru
      _
    // Predicated region
    $region38: #{tpu_custom_call.1} parent=1 // pred_check
      _
    $region39: #{tpu_custom_call.1} parent=1 // pred_check_branch
      %89 = sbr.rel (0) target = $region41
    $region40: #{tpu_custom_call.1} parent=1 // pred_region
      %91 = vsyncadd [#allocation12], 0
      %s92 = sshll.u32 %s9, 4
      %s93 = int_to_ptr.hbm [resolvable:$true] %s92
      %s94 = sshll.u32 [#allocation13], 4
      %s95 = int_to_ptr.vmem [resolvable:$true] %s94
      %100 = dma.hbm_to_vmem [thread:$0]  %s93, 512, %s95, [#allocation12], 128, 128, 8
    $region41: #{tpu_custom_call.1} parent=1 // pred_fallthru
      _
    // Predicated region
    $region42: #{tpu_custom_call.1} parent=1 // pred_check
      _
    $region43: #{tpu_custom_call.1} parent=1 // pred_check_branch
      %102 = sbr.rel (0) target = $region45
    $region44: #{tpu_custom_call.1} parent=1 // pred_region
      %104 = vsyncadd [#allocation15], 0
      %s105 = sshll.u32 %s10, 4
      %s106 = int_to_ptr.hbm [resolvable:$true] %s105
      %s107 = sshll.u32 [#allocation14], 4
      %s108 = int_to_ptr.vmem [resolvable:$true] %s107
      %113 = dma.hbm_to_vmem [thread:$0]  %s106, 512, %s108, [#allocation15], 128, 128, 8
    $region45: #{tpu_custom_call.1} parent=1 // pred_fallthru
      _
    // Predicated region
    $region46: #{tpu_custom_call.1} parent=1 // pred_check
      _
    $region47: #{tpu_custom_call.1} parent=1 // pred_check_branch
      %115 = sbr.rel (0) target = $region49
    $region48: #{tpu_custom_call.1} parent=1 // pred_region
      %117 = vsyncadd [#allocation15], 0
      %s118 = sshll.u32 %s11, 4
      %s119 = int_to_ptr.hbm [resolvable:$true] %s118
      %s120 = sshll.u32 [#allocation16], 4
      %s121 = int_to_ptr.vmem [resolvable:$true] %s120
      %126 = dma.hbm_to_vmem [thread:$0]  %s119, 2048, %s121, [#allocation15], 128, 128, 8
    $region49: #{tpu_custom_call.1} parent=1 // pred_fallthru
      _
    // Predicated region
    $region50: #{tpu_custom_call.1} parent=1 // pred_check
      _
    $region51: #{tpu_custom_call.1} parent=1 // pred_check_branch
      %128 = sbr.rel (0) target = $region53
    $region52: #{tpu_custom_call.1} parent=1 // pred_region
      _
    $region53: #{tpu_custom_call.1} parent=1 // pred_fallthru
      _
    // Predicated region
    $region54: #{tpu_custom_call.1} parent=1 // pred_check
      _
    $region55: #{tpu_custom_call.1} parent=1 // pred_check_branch
      %130 = sbr.rel (0) target = $region57
    $region56: #{tpu_custom_call.1} parent=1 // pred_region
      %132 = vsyncadd [#allocation18], 0
      %s133 = sshll.u32 %s13, 4
      %s134 = int_to_ptr.hbm [resolvable:$true] %s133
      %s135 = sshll.u32 [#allocation17], 4
      %s136 = int_to_ptr.vmem [resolvable:$true] %s135
      %141 = dma.hbm_to_vmem [thread:$0]  %s134, 512, %s136, [#allocation18], 128, 128, 8
    $region57: #{tpu_custom_call.1} parent=1 // pred_fallthru
      _
    // Predicated region
    $region58: #{tpu_custom_call.1} parent=1 // pred_check
      _
    $region59: #{tpu_custom_call.1} parent=1 // pred_check_branch
      %143 = sbr.rel (0) target = $region61
    $region60: #{tpu_custom_call.1} parent=1 // pred_region
      _
    $region61: #{tpu_custom_call.1} parent=1 // pred_fallthru
      _
    // Predicated region
    $region62: #{tpu_custom_call.1} parent=1 // pred_check
      _
    $region63: #{tpu_custom_call.1} parent=1 // pred_check_branch
      %145 = sbr.rel (0) target = $region65
    $region64: #{tpu_custom_call.1} parent=1 // pred_region
      %147 = dma.done [#allocation6], 256
    $region65: #{tpu_custom_call.1} parent=1 // pred_fallthru
      _
    // Predicated region
    $region66: #{tpu_custom_call.1} parent=1 // pred_check
      _
    $region67: #{tpu_custom_call.1} parent=1 // pred_check_branch
      %149 = sbr.rel (0) target = $region69
    $region68: #{tpu_custom_call.1} parent=1 // pred_region
      %151 = dma.done [#allocation9], 512
    $region69: #{tpu_custom_call.1} parent=1 // pred_fallthru
      _
    // Predicated region
    $region70: #{tpu_custom_call.1} parent=1 // pred_check
      _
    $region71: #{tpu_custom_call.1} parent=1 // pred_check_branch
      %153 = sbr.rel (0) target = $region73
    $region72: #{tpu_custom_call.1} parent=1 // pred_region
      %155 = dma.done [#allocation9], 512
    $region73: #{tpu_custom_call.1} parent=1 // pred_fallthru
      _
    // Predicated region
    $region74: #{tpu_custom_call.1} parent=1 // pred_check
      _
    $region75: #{tpu_custom_call.1} parent=1 // pred_check_branch
      %157 = sbr.rel (0) target = $region77
    $region76: #{tpu_custom_call.1} parent=1 // pred_region
      %159 = dma.done [#allocation12], 512
    $region77: #{tpu_custom_call.1} parent=1 // pred_fallthru
      _
    // Predicated region
    $region78: #{tpu_custom_call.1} parent=1 // pred_check
      _
    $region79: #{tpu_custom_call.1} parent=1 // pred_check_branch
      %161 = sbr.rel (0) target = $region81
    $region80: #{tpu_custom_call.1} parent=1 // pred_region
      %163 = dma.done [#allocation12], 512
    $region81: #{tpu_custom_call.1} parent=1 // pred_fallthru
      _
    // Predicated region
    $region82: #{tpu_custom_call.1} parent=1 // pred_check
      _
    $region83: #{tpu_custom_call.1} parent=1 // pred_check_branch
      %165 = sbr.rel (0) target = $region85
    $region84: #{tpu_custom_call.1} parent=1 // pred_region
      %167 = dma.done [#allocation15], 512
    $region85: #{tpu_custom_call.1} parent=1 // pred_fallthru
      _
    // Predicated region
    $region86: #{tpu_custom_call.1} parent=1 // pred_check
      _
    $region87: #{tpu_custom_call.1} parent=1 // pred_check_branch
      %169 = sbr.rel (0) target = $region89
    $region88: #{tpu_custom_call.1} parent=1 // pred_region
      %171 = dma.done [#allocation15], 2048
    $region89: #{tpu_custom_call.1} parent=1 // pred_fallthru
      _
    // Predicated region
    $region90: #{tpu_custom_call.1} parent=1 // pred_check
      _
    $region91: #{tpu_custom_call.1} parent=1 // pred_check_branch
      %173 = sbr.rel (0) target = $region93
    $region92: #{tpu_custom_call.1} parent=1 // pred_region
      %175 = dma.done [#allocation18], 512
    $region93: #{tpu_custom_call.1} parent=1 // pred_fallthru
      _
    %v176 = vld [vmem:[%s8] sm:$0x1]
    %v177 = vld [vmem:[%s12] sm:$0x1]
    %v178 = vld [vmem:[%s14] sm:$0x1]
    %v179 = vld [vmem:[#allocation11] sm:$0xff]
    %v180 = vld [vmem:[#allocation11 + $0x8] sm:$0xff]
    %v181 = vld [vmem:[#allocation11 + $0x10] sm:$0xff]
    %v182 = vld [vmem:[#allocation11 + $0x18] sm:$0xff]
    %v183 = vlaneseq
    %v184 = vand.u32 %v183, 127
    %v185 = vld [vmem:[%s0] sm:$0xff]
    %v186 = vld [vmem:[%s0 + $0x8] sm:$0xff]
    %v187 = vld [vmem:[#allocation5] sm:$0xff]
    %v188 = vld [vmem:[#allocation5 + $0x8] sm:$0xff]
    %v189 = vld [vmem:[%s4] sm:$0x1]
    %v191 = vperm.slane %v189, 0
    %vm193 = vcmask 130048
    %v195 = vsel %vm193, %v185, 0
    %v198 = vsel %vm193, %v186, 0
    %200 = vmatpush.msra.mxu0 0.0
    %201 = vmatpush.msra.mxu0 0.0
    %202 = vmatpush.msra.mxu0 0.0
    %203 = vmatpush.msra.mxu0 0.0
    %204 = vmatpush.msra.mxu0 0.0
    %205 = vmatpush.msra.mxu0 0.0
    %206 = vmatpush.msra.mxu0 0.0
    %207 = vmatpush.msra.mxu0 0.0
    %208 = vmatpush.msra.mxu0 0.0
    %209 = vmatpush.msra.mxu0 0.0
    %210 = vmatpush.msra.mxu0 0.0
    %211 = vmatpush.msra.mxu0 0.0
    %212 = vmatpush.msra.mxu0 0.0
    %213 = vmatpush.msra.mxu0 0.0
    %214 = vmatpush.msra.mxu0 %v188
    %215 = vmatpush.msra.mxu0 %v187
    %216 = vmatmul.f32.gmra.mxu0 %v195
    %v217 = vpop.f32.mrf.mxu0
    %v218 = vadd.f32 %v191, %v217
    %219 = vmatmul.f32.gmra.mxu0 %v198
    %v220 = vpop.f32.mrf.mxu0
    %v221 = vadd.f32 %v191, %v220
    %222 = vdwg.mxu0
    %223 = vst [vmem:[#allocation2] sm:$0xff] %v218
    %224 = vst [vmem:[#allocation2 + $0x8] sm:$0xff] %v221
    %v225 = vld [vmem:[#allocation2] sm:$0x3]
    %v226 = vld [vmem:[#allocation8] sm:$0xff]
    %v227 = vld [vmem:[#allocation8 + $0x8] sm:$0xff]
    %v228 = vld [vmem:[#allocation8 + $0x10] sm:$0xff]
    %v229 = vld [vmem:[#allocation8 + $0x18] sm:$0xff]
    %vm230 = vcmask 261120
    %v232 = vsel %vm230, 0.0, 0
    %234 = vmatpush.msra.mxu0 0.0
    %235 = vmatpush.msra.mxu0 0.0
    %236 = vmatpush.msra.mxu0 0.0
    %237 = vmatpush.msra.mxu0 0.0
    %238 = vmatpush.msra.mxu0 0.0
    %239 = vmatpush.msra.mxu0 0.0
    %240 = vmatpush.msra.mxu0 0.0
    %241 = vmatpush.msra.mxu0 0.0
    %242 = vmatpush.msra.mxu0 0.0
    %243 = vmatpush.msra.mxu0 0.0
    %244 = vmatpush.msra.mxu0 0.0
    %245 = vmatpush.msra.mxu0 0.0
    %246 = vmatpush.msra.mxu0 %v229
    %247 = vmatpush.msra.mxu0 %v228
    %248 = vmatpush.msra.mxu0 %v227
    %249 = vmatpush.msra.mxu0 %v226
    %250 = vmatmul.f32.gmra.mxu0 %v232
    %v251 = vpop.f32.mrf.mxu0
    %v252 = vadd.f32 0.0, %v251
    %253 = vdwg.mxu0
    %v254 = vadd.f32 %v225, %v252
    %v255 = vxor.u32 %v254, 2147483648
    %v256 = vmul.f32 %v255, 1.442695
    %v257 = vpow.pop %v256
    %v258 = vadd.f32 %v257, 1.0
    %v259 = vrcp.pop %v258
    %v260 = vmul.f32 %v258, %v259
    %v261 = vsub.f32 1.0, %v260
    %v262 = vmul.f32 %v259, %v261
    %v263 = vadd.f32 %v259, %v262
    %vm264 = vweird.f32 %v258
    %vm265 = vweird.f32 %v259
    %vm266 = vmor %vm264, %vm265
    %v267 = vsel %vm266, %v259, %v263
    %v268 = vand.u32 2147483647, %v258
    %vm269 = vcmp.eq.f32.partialorder %v268, 8.507059e+37
    %v270 = vand.u32 %v258, 2147483648
    %v271 = vor.u32 1.1754944e-38, %v270
    %v272 = vsel %vm269, %v271, %v267
    %v273 = vmul.f32 1.0, %v272
    %v274 = vtanh.pop %v254
    %v275 = vmul.f32 %v273, 0.0
    %277 = vrot.lane.b32.xlu0 %v274, 64
    %v278 = vpop.permute.xlu0 %277
    %v280 = vmul.f32 %v273, %v278
    %282 = vrot.lane.b32.xlu0 %v280, 32
    %v283 = vpop.permute.xlu0 %282
    %v285 = vadd.f32 %v275, %v283
    %v286 = vtanh.pop %v285
    %288 = vrot.lane.b32.xlu0 %v286, 64
    %v289 = vpop.permute.xlu0 %288
    %v291 = vmul.f32 %v273, %v289
    %v293 = vrot.slane %v291, 1
    %v294 = vperm.slane %v291, 0
    %v295 = vperm.slane %v293, 0
    %296 = vrot.lane.b32.xlu0 %v294, 32
    %v297 = vpop.permute.xlu0 %296
    %298 = vrot.lane.b32.xlu0 %v295, 32
    %v299 = vpop.permute.xlu0 %298
    %vm302 = vcmask 253952
    %303 = vst.msk [vmem:[#allocation3] sm:$0x1] %vm302, %v297
    %304 = vst.msk [vmem:[#allocation3 + $0x8] sm:$0x1] %vm302, %v299
    %v305 = vld [vmem:[#allocation2 + $0x2] sm:$0x3]
    %v306 = vld [vmem:[#allocation8] sm:$0xff]
    %v307 = vld [vmem:[#allocation8 + $0x8] sm:$0xff]
    %v308 = vld [vmem:[#allocation8 + $0x10] sm:$0xff]
    %v309 = vld [vmem:[#allocation8 + $0x18] sm:$0xff]
    %310 = vrot.lane.b32.xlu0 %v291, 32
    %v311 = vpop.permute.xlu0 %310
    %v312 = vsel %vm230, %v311, 0
    %314 = vmatpush.msra.mxu0 0.0
    %315 = vmatpush.msra.mxu0 0.0
    %316 = vmatpush.msra.mxu0 0.0
    %317 = vmatpush.msra.mxu0 0.0
    %318 = vmatpush.msra.mxu0 0.0
    %319 = vmatpush.msra.mxu0 0.0
    %320 = vmatpush.msra.mxu0 0.0
    %321 = vmatpush.msra.mxu0 0.0
    %322 = vmatpush.msra.mxu0 0.0
    %323 = vmatpush.msra.mxu0 0.0
    %324 = vmatpush.msra.mxu0 0.0
    %325 = vmatpush.msra.mxu0 0.0
    %326 = vmatpush.msra.mxu0 %v309
    %327 = vmatpush.msra.mxu0 %v308
    %328 = vmatpush.msra.mxu0 %v307
    %329 = vmatpush.msra.mxu0 %v306
    %330 = vmatmul.f32.gmra.mxu0 %v312
    %v331 = vpop.f32.mrf.mxu0
    %v332 = vadd.f32 0.0, %v331
    %333 = vdwg.mxu0
    %v334 = vadd.f32 %v305, %v332
    %v335 = vxor.u32 %v334, 2147483648
    %v336 = vmul.f32 %v335, 1.442695
    %v337 = vpow.pop %v336
    %v338 = vadd.f32 %v337, 1.0
    %v339 = vrcp.pop %v338
    %v340 = vmul.f32 %v338, %v339
    %v341 = vsub.f32 1.0, %v340
    %v342 = vmul.f32 %v339, %v341
    %v343 = vadd.f32 %v339, %v342
    %vm344 = vweird.f32 %v338
    %vm345 = vweird.f32 %v339
    %vm346 = vmor %vm344, %vm345
    %v347 = vsel %vm346, %v339, %v343
    %v348 = vand.u32 2147483647, %v338
    %vm349 = vcmp.eq.f32.partialorder %v348, 8.507059e+37
    %v350 = vand.u32 %v338, 2147483648
    %v351 = vor.u32 1.1754944e-38, %v350
    %v352 = vsel %vm349, %v351, %v347
    %v353 = vmul.f32 1.0, %v352
    %v354 = vtanh.pop %v334
    %v355 = vmul.f32 %v353, %v285
    %357 = vrot.lane.b32.xlu0 %v354, 64
    %v358 = vpop.permute.xlu0 %357
    %v360 = vmul.f32 %v353, %v358
    %362 = vrot.lane.b32.xlu0 %v360, 32
    %v363 = vpop.permute.xlu0 %362
    %v365 = vadd.f32 %v355, %v363
    %v366 = vtanh.pop %v365
    %368 = vrot.lane.b32.xlu0 %v366, 64
    %v369 = vpop.permute.xlu0 %368
    %v371 = vmul.f32 %v353, %v369
    %v373 = vrot.slane %v371, 1
    %v374 = vperm.slane %v371, 0
    %v375 = vperm.slane %v373, 0
    %376 = vrot.lane.b32.xlu0 %v374, 32
    %v377 = vpop.permute.xlu0 %376
    %378 = vrot.lane.b32.xlu0 %v375, 32
    %v379 = vpop.permute.xlu0 %378
    %382 = vst.msk [vmem:[#allocation3 + $0x1] sm:$0x1] %vm302, %v377
    %383 = vst.msk [vmem:[#allocation3 + $0x9] sm:$0x1] %vm302, %v379
    %v384 = vld [vmem:[#allocation2 + $0x4] sm:$0x3]
    %v385 = vld [vmem:[#allocation8] sm:$0xff]
    %v386 = vld [vmem:[#allocation8 + $0x8] sm:$0xff]
    %v387 = vld [vmem:[#allocation8 + $0x10] sm:$0xff]
    %v388 = vld [vmem:[#allocation8 + $0x18] sm:$0xff]
    %389 = vrot.lane.b32.xlu0 %v371, 32
    %v390 = vpop.permute.xlu0 %389
    %v391 = vsel %vm230, %v390, 0
    %393 = vmatpush.msra.mxu0 0.0
    %394 = vmatpush.msra.mxu0 0.0
    %395 = vmatpush.msra.mxu0 0.0
    %396 = vmatpush.msra.mxu0 0.0
    %397 = vmatpush.msra.mxu0 0.0
    %398 = vmatpush.msra.mxu0 0.0
    %399 = vmatpush.msra.mxu0 0.0
    %400 = vmatpush.msra.mxu0 0.0
    %401 = vmatpush.msra.mxu0 0.0
    %402 = vmatpush.msra.mxu0 0.0
    %403 = vmatpush.msra.mxu0 0.0
    %404 = vmatpush.msra.mxu0 0.0
    %405 = vmatpush.msra.mxu0 %v388
    %406 = vmatpush.msra.mxu0 %v387
    %407 = vmatpush.msra.mxu0 %v386
    %408 = vmatpush.msra.mxu0 %v385
    %409 = vmatmul.f32.gmra.mxu0 %v391
    %v410 = vpop.f32.mrf.mxu0
    %v411 = vadd.f32 0.0, %v410
    %412 = vdwg.mxu0
    %v413 = vadd.f32 %v384, %v411
    %v414 = vxor.u32 %v413, 2147483648
    %v415 = vmul.f32 %v414, 1.442695
    %v416 = vpow.pop %v415
    %v417 = vadd.f32 %v416, 1.0
    %v418 = vrcp.pop %v417
    %v419 = vmul.f32 %v417, %v418
    %v420 = vsub.f32 1.0, %v419
    %v421 = vmul.f32 %v418, %v420
    %v422 = vadd.f32 %v418, %v421
    %vm423 = vweird.f32 %v417
    %vm424 = vweird.f32 %v418
    %vm425 = vmor %vm423, %vm424
    %v426 = vsel %vm425, %v418, %v422
    %v427 = vand.u32 2147483647, %v417
    %vm428 = vcmp.eq.f32.partialorder %v427, 8.507059e+37
    %v429 = vand.u32 %v417, 2147483648
    %v430 = vor.u32 1.1754944e-38, %v429
    %v431 = vsel %vm428, %v430, %v426
    %v432 = vmul.f32 1.0, %v431
    %v433 = vtanh.pop %v413
    %v434 = vmul.f32 %v432, %v365
    %436 = vrot.lane.b32.xlu0 %v433, 64
    %v437 = vpop.permute.xlu0 %436
    %v439 = vmul.f32 %v432, %v437
    %441 = vrot.lane.b32.xlu0 %v439, 32
    %v442 = vpop.permute.xlu0 %441
    %v444 = vadd.f32 %v434, %v442
    %v445 = vtanh.pop %v444
    %447 = vrot.lane.b32.xlu0 %v445, 64
    %v448 = vpop.permute.xlu0 %447
    %v450 = vmul.f32 %v432, %v448
    %v452 = vrot.slane %v450, 1
    %v453 = vperm.slane %v450, 0
    %v454 = vperm.slane %v452, 0
    %455 = vrot.lane.b32.xlu0 %v453, 32
    %v456 = vpop.permute.xlu0 %455
    %457 = vrot.lane.b32.xlu0 %v454, 32
    %v458 = vpop.permute.xlu0 %457
    %461 = vst.msk [vmem:[#allocation3 + $0x2] sm:$0x1] %vm302, %v456
    %462 = vst.msk [vmem:[#allocation3 + $0xa] sm:$0x1] %vm302, %v458
    %v463 = vld [vmem:[#allocation2 + $0x6] sm:$0x3]
    %v464 = vld [vmem:[#allocation8] sm:$0xff]
    %v465 = vld [vmem:[#allocation8 + $0x8] sm:$0xff]
    %v466 = vld [vmem:[#allocation8 + $0x10] sm:$0xff]
    %v467 = vld [vmem:[#allocation8 + $0x18] sm:$0xff]
    %468 = vrot.lane.b32.xlu0 %v450, 32
    %v469 = vpop.permute.xlu0 %468
    %v470 = vsel %vm230, %v469, 0
    %472 = vmatpush.msra.mxu0 0.0
    %473 = vmatpush.msra.mxu0 0.0
    %474 = vmatpush.msra.mxu0 0.0
    %475 = vmatpush.msra.mxu0 0.0
    %476 = vmatpush.msra.mxu0 0.0
    %477 = vmatpush.msra.mxu0 0.0
    %478 = vmatpush.msra.mxu0 0.0
    %479 = vmatpush.msra.mxu0 0.0
    %480 = vmatpush.msra.mxu0 0.0
    %481 = vmatpush.msra.mxu0 0.0
    %482 = vmatpush.msra.mxu0 0.0
    %483 = vmatpush.msra.mxu0 0.0
    %484 = vmatpush.msra.mxu0 %v467
    %485 = vmatpush.msra.mxu0 %v466
    %486 = vmatpush.msra.mxu0 %v465
    %487 = vmatpush.msra.mxu0 %v464
    %488 = vmatmul.f32.gmra.mxu0 %v470
    %v489 = vpop.f32.mrf.mxu0
    %v490 = vadd.f32 0.0, %v489
    %491 = vdwg.mxu0
    %v492 = vadd.f32 %v463, %v490
    %v493 = vxor.u32 %v492, 2147483648
    %v494 = vmul.f32 %v493, 1.442695
    %v495 = vpow.pop %v494
    %v496 = vadd.f32 %v495, 1.0
    %v497 = vrcp.pop %v496
    %v498 = vmul.f32 %v496, %v497
    %v499 = vsub.f32 1.0, %v498
    %v500 = vmul.f32 %v497, %v499
    %v501 = vadd.f32 %v497, %v500
    %vm502 = vweird.f32 %v496
    %vm503 = vweird.f32 %v497
    %vm504 = vmor %vm502, %vm503
    %v505 = vsel %vm504, %v497, %v501
    %v506 = vand.u32 2147483647, %v496
    %vm507 = vcmp.eq.f32.partialorder %v506, 8.507059e+37
    %v508 = vand.u32 %v496, 2147483648
    %v509 = vor.u32 1.1754944e-38, %v508
    %v510 = vsel %vm507, %v509, %v505
    %v511 = vmul.f32 1.0, %v510
    %v512 = vtanh.pop %v492
    %v513 = vmul.f32 %v511, %v444
    %515 = vrot.lane.b32.xlu0 %v512, 64
    %v516 = vpop.permute.xlu0 %515
    %v518 = vmul.f32 %v511, %v516
    %520 = vrot.lane.b32.xlu0 %v518, 32
    %v521 = vpop.permute.xlu0 %520
    %v523 = vadd.f32 %v513, %v521
    %v524 = vtanh.pop %v523
    %526 = vrot.lane.b32.xlu0 %v524, 64
    %v527 = vpop.permute.xlu0 %526
    %v529 = vmul.f32 %v511, %v527
    %v531 = vrot.slane %v529, 1
    %v532 = vperm.slane %v529, 0
    %v533 = vperm.slane %v531, 0
    %534 = vrot.lane.b32.xlu0 %v532, 32
    %v535 = vpop.permute.xlu0 %534
    %536 = vrot.lane.b32.xlu0 %v533, 32
    %v537 = vpop.permute.xlu0 %536
    %540 = vst.msk [vmem:[#allocation3 + $0x3] sm:$0x1] %vm302, %v535
    %541 = vst.msk [vmem:[#allocation3 + $0xb] sm:$0x1] %vm302, %v537
    %v542 = vld [vmem:[#allocation2 + $0x8] sm:$0x3]
    %v543 = vld [vmem:[#allocation8] sm:$0xff]
    %v544 = vld [vmem:[#allocation8 + $0x8] sm:$0xff]
    %v545 = vld [vmem:[#allocation8 + $0x10] sm:$0xff]
    %v546 = vld [vmem:[#allocation8 + $0x18] sm:$0xff]
    %547 = vrot.lane.b32.xlu0 %v529, 32
    %v548 = vpop.permute.xlu0 %547
    %v549 = vsel %vm230, %v548, 0
    %551 = vmatpush.msra.mxu0 0.0
    %552 = vmatpush.msra.mxu0 0.0
    %553 = vmatpush.msra.mxu0 0.0
    %554 = vmatpush.msra.mxu0 0.0
    %555 = vmatpush.msra.mxu0 0.0
    %556 = vmatpush.msra.mxu0 0.0
    %557 = vmatpush.msra.mxu0 0.0
    %558 = vmatpush.msra.mxu0 0.0
    %559 = vmatpush.msra.mxu0 0.0
    %560 = vmatpush.msra.mxu0 0.0
    %561 = vmatpush.msra.mxu0 0.0
    %562 = vmatpush.msra.mxu0 0.0
    %563 = vmatpush.msra.mxu0 %v546
    %564 = vmatpush.msra.mxu0 %v545
    %565 = vmatpush.msra.mxu0 %v544
    %566 = vmatpush.msra.mxu0 %v543
    %567 = vmatmul.f32.gmra.mxu0 %v549
    %v568 = vpop.f32.mrf.mxu0
    %v569 = vadd.f32 0.0, %v568
    %570 = vdwg.mxu0
    %v571 = vadd.f32 %v542, %v569
    %v572 = vxor.u32 %v571, 2147483648
    %v573 = vmul.f32 %v572, 1.442695
    %v574 = vpow.pop %v573
    %v575 = vadd.f32 %v574, 1.0
    %v576 = vrcp.pop %v575
    %v577 = vmul.f32 %v575, %v576
    %v578 = vsub.f32 1.0, %v577
    %v579 = vmul.f32 %v576, %v578
    %v580 = vadd.f32 %v576, %v579
    %vm581 = vweird.f32 %v575
    %vm582 = vweird.f32 %v576
    %vm583 = vmor %vm581, %vm582
    %v584 = vsel %vm583, %v576, %v580
    %v585 = vand.u32 2147483647, %v575
    %vm586 = vcmp.eq.f32.partialorder %v585, 8.507059e+37
    %v587 = vand.u32 %v575, 2147483648
    %v588 = vor.u32 1.1754944e-38, %v587
    %v589 = vsel %vm586, %v588, %v584
    %v590 = vmul.f32 1.0, %v589
    %v591 = vtanh.pop %v571
    %v592 = vmul.f32 %v590, %v523
    %594 = vrot.lane.b32.xlu0 %v591, 64
    %v595 = vpop.permute.xlu0 %594
    %v597 = vmul.f32 %v590, %v595
    %599 = vrot.lane.b32.xlu0 %v597, 32
    %v600 = vpop.permute.xlu0 %599
    %v602 = vadd.f32 %v592, %v600
    %v603 = vtanh.pop %v602
    %605 = vrot.lane.b32.xlu0 %v603, 64
    %v606 = vpop.permute.xlu0 %605
    %v608 = vmul.f32 %v590, %v606
    %v610 = vrot.slane %v608, 1
    %v611 = vperm.slane %v608, 0
    %v612 = vperm.slane %v610, 0
    %613 = vrot.lane.b32.xlu0 %v611, 32
    %v614 = vpop.permute.xlu0 %613
    %615 = vrot.lane.b32.xlu0 %v612, 32
    %v616 = vpop.permute.xlu0 %615
    %619 = vst.msk [vmem:[#allocation3 + $0x4] sm:$0x1] %vm302, %v614
    %620 = vst.msk [vmem:[#allocation3 + $0xc] sm:$0x1] %vm302, %v616
    %v621 = vld [vmem:[#allocation2 + $0xa] sm:$0x3]
    %v622 = vld [vmem:[#allocation8] sm:$0xff]
    %v623 = vld [vmem:[#allocation8 + $0x8] sm:$0xff]
    %v624 = vld [vmem:[#allocation8 + $0x10] sm:$0xff]
    %v625 = vld [vmem:[#allocation8 + $0x18] sm:$0xff]
    %626 = vrot.lane.b32.xlu0 %v608, 32
    %v627 = vpop.permute.xlu0 %626
    %v628 = vsel %vm230, %v627, 0
    %630 = vmatpush.msra.mxu0 0.0
    %631 = vmatpush.msra.mxu0 0.0
    %632 = vmatpush.msra.mxu0 0.0
    %633 = vmatpush.msra.mxu0 0.0
    %634 = vmatpush.msra.mxu0 0.0
    %635 = vmatpush.msra.mxu0 0.0
    %636 = vmatpush.msra.mxu0 0.0
    %637 = vmatpush.msra.mxu0 0.0
    %638 = vmatpush.msra.mxu0 0.0
    %639 = vmatpush.msra.mxu0 0.0
    %640 = vmatpush.msra.mxu0 0.0
    %641 = vmatpush.msra.mxu0 0.0
    %642 = vmatpush.msra.mxu0 %v625
    %643 = vmatpush.msra.mxu0 %v624
    %644 = vmatpush.msra.mxu0 %v623
    %645 = vmatpush.msra.mxu0 %v622
    %646 = vmatmul.f32.gmra.mxu0 %v628
    %v647 = vpop.f32.mrf.mxu0
    %v648 = vadd.f32 0.0, %v647
    %649 = vdwg.mxu0
    %v650 = vadd.f32 %v621, %v648
    %v651 = vxor.u32 %v650, 2147483648
    %v652 = vmul.f32 %v651, 1.442695
    %v653 = vpow.pop %v652
    %v654 = vadd.f32 %v653, 1.0
    %v655 = vrcp.pop %v654
    %v656 = vmul.f32 %v654, %v655
    %v657 = vsub.f32 1.0, %v656
    %v658 = vmul.f32 %v655, %v657
    %v659 = vadd.f32 %v655, %v658
    %vm660 = vweird.f32 %v654
    %vm661 = vweird.f32 %v655
    %vm662 = vmor %vm660, %vm661
    %v663 = vsel %vm662, %v655, %v659
    %v664 = vand.u32 2147483647, %v654
    %vm665 = vcmp.eq.f32.partialorder %v664, 8.507059e+37
    %v666 = vand.u32 %v654, 2147483648
    %v667 = vor.u32 1.1754944e-38, %v666
    %v668 = vsel %vm665, %v667, %v663
    %v669 = vmul.f32 1.0, %v668
    %v670 = vtanh.pop %v650
    %v671 = vmul.f32 %v669, %v602
    %673 = vrot.lane.b32.xlu0 %v670, 64
    %v674 = vpop.permute.xlu0 %673
    %v676 = vmul.f32 %v669, %v674
    %678 = vrot.lane.b32.xlu0 %v676, 32
    %v679 = vpop.permute.xlu0 %678
    %v681 = vadd.f32 %v671, %v679
    %v682 = vtanh.pop %v681
    %684 = vrot.lane.b32.xlu0 %v682, 64
    %v685 = vpop.permute.xlu0 %684
    %v687 = vmul.f32 %v669, %v685
    %v689 = vrot.slane %v687, 1
    %v690 = vperm.slane %v687, 0
    %v691 = vperm.slane %v689, 0
    %692 = vrot.lane.b32.xlu0 %v690, 32
    %v693 = vpop.permute.xlu0 %692
    %694 = vrot.lane.b32.xlu0 %v691, 32
    %v695 = vpop.permute.xlu0 %694
    %698 = vst.msk [vmem:[#allocation3 + $0x5] sm:$0x1] %vm302, %v693
    %699 = vst.msk [vmem:[#allocation3 + $0xd] sm:$0x1] %vm302, %v695
    %v700 = vld [vmem:[#allocation2 + $0xc] sm:$0x3]
    %v701 = vld [vmem:[#allocation8] sm:$0xff]
    %v702 = vld [vmem:[#allocation8 + $0x8] sm:$0xff]
    %v703 = vld [vmem:[#allocation8 + $0x10] sm:$0xff]
    %v704 = vld [vmem:[#allocation8 + $0x18] sm:$0xff]
    %705 = vrot.lane.b32.xlu0 %v687, 32
    %v706 = vpop.permute.xlu0 %705
    %v707 = vsel %vm230, %v706, 0
    %709 = vmatpush.msra.mxu0 0.0
    %710 = vmatpush.msra.mxu0 0.0
    %711 = vmatpush.msra.mxu0 0.0
    %712 = vmatpush.msra.mxu0 0.0
    %713 = vmatpush.msra.mxu0 0.0
    %714 = vmatpush.msra.mxu0 0.0
    %715 = vmatpush.msra.mxu0 0.0
    %716 = vmatpush.msra.mxu0 0.0
    %717 = vmatpush.msra.mxu0 0.0
    %718 = vmatpush.msra.mxu0 0.0
    %719 = vmatpush.msra.mxu0 0.0
    %720 = vmatpush.msra.mxu0 0.0
    %721 = vmatpush.msra.mxu0 %v704
    %722 = vmatpush.msra.mxu0 %v703
    %723 = vmatpush.msra.mxu0 %v702
    %724 = vmatpush.msra.mxu0 %v701
    %725 = vmatmul.f32.gmra.mxu0 %v707
    %v726 = vpop.f32.mrf.mxu0
    %v727 = vadd.f32 0.0, %v726
    %728 = vdwg.mxu0
    %v729 = vadd.f32 %v700, %v727
    %v730 = vxor.u32 %v729, 2147483648
    %v731 = vmul.f32 %v730, 1.442695
    %v732 = vpow.pop %v731
    %v733 = vadd.f32 %v732, 1.0
    %v734 = vrcp.pop %v733
    %v735 = vmul.f32 %v733, %v734
    %v736 = vsub.f32 1.0, %v735
    %v737 = vmul.f32 %v734, %v736
    %v738 = vadd.f32 %v734, %v737
    %vm739 = vweird.f32 %v733
    %vm740 = vweird.f32 %v734
    %vm741 = vmor %vm739, %vm740
    %v742 = vsel %vm741, %v734, %v738
    %v743 = vand.u32 2147483647, %v733
    %vm744 = vcmp.eq.f32.partialorder %v743, 8.507059e+37
    %v745 = vand.u32 %v733, 2147483648
    %v746 = vor.u32 1.1754944e-38, %v745
    %v747 = vsel %vm744, %v746, %v742
    %v748 = vmul.f32 1.0, %v747
    %v749 = vtanh.pop %v729
    %v750 = vmul.f32 %v748, %v681
    %752 = vrot.lane.b32.xlu0 %v749, 64
    %v753 = vpop.permute.xlu0 %752
    %v755 = vmul.f32 %v748, %v753
    %757 = vrot.lane.b32.xlu0 %v755, 32
    %v758 = vpop.permute.xlu0 %757
    %v760 = vadd.f32 %v750, %v758
    %v761 = vtanh.pop %v760
    %763 = vrot.lane.b32.xlu0 %v761, 64
    %v764 = vpop.permute.xlu0 %763
    %v766 = vmul.f32 %v748, %v764
    %v768 = vrot.slane %v766, 1
    %v769 = vperm.slane %v766, 0
    %v770 = vperm.slane %v768, 0
    %771 = vrot.lane.b32.xlu0 %v769, 32
    %v772 = vpop.permute.xlu0 %771
    %773 = vrot.lane.b32.xlu0 %v770, 32
    %v774 = vpop.permute.xlu0 %773
    %777 = vst.msk [vmem:[#allocation3 + $0x6] sm:$0x1] %vm302, %v772
    %778 = vst.msk [vmem:[#allocation3 + $0xe] sm:$0x1] %vm302, %v774
    %v779 = vld [vmem:[#allocation2 + $0xe] sm:$0x3]
    %v780 = vld [vmem:[#allocation8] sm:$0xff]
    %v781 = vld [vmem:[#allocation8 + $0x8] sm:$0xff]
    %v782 = vld [vmem:[#allocation8 + $0x10] sm:$0xff]
    %v783 = vld [vmem:[#allocation8 + $0x18] sm:$0xff]
    %784 = vrot.lane.b32.xlu0 %v766, 32
    %v785 = vpop.permute.xlu0 %784
    %v786 = vsel %vm230, %v785, 0
    %788 = vmatpush.msra.mxu0 0.0
    %789 = vmatpush.msra.mxu0 0.0
    %790 = vmatpush.msra.mxu0 0.0
    %791 = vmatpush.msra.mxu0 0.0
    %792 = vmatpush.msra.mxu0 0.0
    %793 = vmatpush.msra.mxu0 0.0
    %794 = vmatpush.msra.mxu0 0.0
    %795 = vmatpush.msra.mxu0 0.0
    %796 = vmatpush.msra.mxu0 0.0
    %797 = vmatpush.msra.mxu0 0.0
    %798 = vmatpush.msra.mxu0 0.0
    %799 = vmatpush.msra.mxu0 0.0
    %800 = vmatpush.msra.mxu0 %v783
    %801 = vmatpush.msra.mxu0 %v782
    %802 = vmatpush.msra.mxu0 %v781
    %803 = vmatpush.msra.mxu0 %v780
    %804 = vmatmul.f32.gmra.mxu0 %v786
    %v805 = vpop.f32.mrf.mxu0
    %v806 = vadd.f32 0.0, %v805
    %807 = vdwg.mxu0
    %v808 = vadd.f32 %v779, %v806
    %v809 = vxor.u32 %v808, 2147483648
    %v810 = vmul.f32 %v809, 1.442695
    %v811 = vpow.pop %v810
    %v812 = vadd.f32 %v811, 1.0
    %v813 = vrcp.pop %v812
    %v814 = vmul.f32 %v812, %v813
    %v815 = vsub.f32 1.0, %v814
    %v816 = vmul.f32 %v813, %v815
    %v817 = vadd.f32 %v813, %v816
    %vm818 = vweird.f32 %v812
    %vm819 = vweird.f32 %v813
    %vm820 = vmor %vm818, %vm819
    %v821 = vsel %vm820, %v813, %v817
    %v822 = vand.u32 2147483647, %v812
    %vm823 = vcmp.eq.f32.partialorder %v822, 8.507059e+37
    %v824 = vand.u32 %v812, 2147483648
    %v825 = vor.u32 1.1754944e-38, %v824
    %v826 = vsel %vm823, %v825, %v821
    %v827 = vmul.f32 1.0, %v826
    %v828 = vtanh.pop %v808
    %v829 = vmul.f32 %v827, %v760
    %831 = vrot.lane.b32.xlu0 %v828, 64
    %v832 = vpop.permute.xlu0 %831
    %v834 = vmul.f32 %v827, %v832
    %836 = vrot.lane.b32.xlu0 %v834, 32
    %v837 = vpop.permute.xlu0 %836
    %v839 = vadd.f32 %v829, %v837
    %v840 = vtanh.pop %v839
    %842 = vrot.lane.b32.xlu0 %v840, 64
    %v843 = vpop.permute.xlu0 %842
    %v845 = vmul.f32 %v827, %v843
    %v847 = vrot.slane %v845, 1
    %v848 = vperm.slane %v845, 0
    %v849 = vperm.slane %v847, 0
    %850 = vrot.lane.b32.xlu0 %v848, 32
    %v851 = vpop.permute.xlu0 %850
    %852 = vrot.lane.b32.xlu0 %v849, 32
    %v853 = vpop.permute.xlu0 %852
    %856 = vst.msk [vmem:[#allocation3 + $0x7] sm:$0x1] %vm302, %v851
    %857 = vst.msk [vmem:[#allocation3 + $0xf] sm:$0x1] %vm302, %v853
    %v858 = vld [vmem:[#allocation3] sm:$0xff]
    %v859 = vld [vmem:[#allocation3 + $0x8] sm:$0xff]
    %v860 = vld [vmem:[#allocation10] sm:$0xff]
    %v861 = vld [vmem:[#allocation10 + $0x8] sm:$0xff]
    %v862 = vld [vmem:[#allocation10 + $0x10] sm:$0xff]
    %v863 = vld [vmem:[#allocation10 + $0x18] sm:$0xff]
    %v864 = vld [vmem:[%s6] sm:$0x1]
    %v866 = vperm.slane %v864, 0
    %v869 = vsel %vm230, %v858, 0
    %v872 = vsel %vm230, %v859, 0
    %874 = vmatpush.msra.mxu0 0.0
    %875 = vmatpush.msra.mxu0 0.0
    %876 = vmatpush.msra.mxu0 0.0
    %877 = vmatpush.msra.mxu0 0.0
    %878 = vmatpush.msra.mxu0 0.0
    %879 = vmatpush.msra.mxu0 0.0
    %880 = vmatpush.msra.mxu0 0.0
    %881 = vmatpush.msra.mxu0 0.0
    %882 = vmatpush.msra.mxu0 0.0
    %883 = vmatpush.msra.mxu0 0.0
    %884 = vmatpush.msra.mxu0 0.0
    %885 = vmatpush.msra.mxu0 0.0
    %886 = vmatpush.msra.mxu0 %v863
    %887 = vmatpush.msra.mxu0 %v862
    %888 = vmatpush.msra.mxu0 %v861
    %889 = vmatpush.msra.mxu0 %v860
    %890 = vmatmul.f32.gmra.mxu0 %v869
    %v891 = vpop.f32.mrf.mxu0
    %v892 = vadd.f32 %v866, %v891
    %893 = vmatmul.f32.gmra.mxu0 %v872
    %v894 = vpop.f32.mrf.mxu0
    %v895 = vadd.f32 %v866, %v894
    %896 = vdwg.mxu0
    %897 = vst.msk [vmem:[#allocation4] sm:$0xff] %vm230, %v892
    %898 = vst.msk [vmem:[#allocation4 + $0x8] sm:$0xff] %vm230, %v895
    %v899 = vld [vmem:[#allocation3] sm:$0xff]
    %v900 = vld [vmem:[#allocation3 + $0x8] sm:$0xff]
    %v901 = vld [vmem:[#allocation4] sm:$0xff]
    %v902 = vld [vmem:[#allocation4 + $0x8] sm:$0xff]
    %903 = vrot.lane.b32.xlu0 %v845, 32
    %v904 = vpop.permute.xlu0 %903
    %v905 = vsel %vm230, %v904, 0
    %907 = vmatpush.msra.mxu0 0.0
    %908 = vmatpush.msra.mxu0 0.0
    %909 = vmatpush.msra.mxu0 0.0
    %910 = vmatpush.msra.mxu0 0.0
    %911 = vmatpush.msra.mxu0 0.0
    %912 = vmatpush.msra.mxu0 0.0
    %913 = vmatpush.msra.mxu0 0.0
    %914 = vmatpush.msra.mxu0 0.0
    %915 = vmatpush.msra.mxu0 0.0
    %916 = vmatpush.msra.mxu0 0.0
    %917 = vmatpush.msra.mxu0 0.0
    %918 = vmatpush.msra.mxu0 0.0
    %919 = vmatpush.msra.mxu0 %v182
    %920 = vmatpush.msra.mxu0 %v181
    %921 = vmatpush.msra.mxu0 %v180
    %922 = vmatpush.msra.mxu0 %v179
    %923 = vmatmul.f32.gmra.mxu0 %v905
    %v924 = vpop.f32.mrf.mxu0
    %v925 = vadd.f32 0.0, %v924
    %926 = vdwg.mxu0
    %v928 = vrot.slane %v925, 1
    %v929 = vperm.slane %v925, 0
    %v930 = vperm.slane %v928, 0
    %v933 = vadd.f32 %v901, %v929
    %v934 = vadd.f32 %v902, %v930
    %v935 = vtanh.pop %v933
    %v936 = vtanh.pop %v934
    %v938 = vperm.slane %v176, 0
    %v940 = vmul.f32 %v935, %v938
    %v941 = vmul.f32 %v936, %v938
    %v942 = vsel %vm230, %v940, 0.0
    %943 = vadd.xlane.f32.xlu0 %v942
    %v944 = vpop.xlane.xlu0 %943
    %v945 = vsel %vm230, %v941, 0.0
    %946 = vadd.xlane.f32.xlu0 %v945
    %v947 = vpop.xlane.xlu0 %946
    %v948 = vmul.f32 %v944, 1.442695
    %v949 = vpow.pop %v948
    %v950 = vmul.f32 %v947, 1.442695
    %v951 = vpow.pop %v950
    %v952 = vrot.slane %v949, 4
    %v953 = vadd.f32 %v949, %v952
    %v954 = vrot.slane %v953, 2
    %v955 = vadd.f32 %v953, %v954
    %v956 = vrot.slane %v955, 1
    %v957 = vadd.f32 %v955, %v956
    %v958 = vrot.slane %v951, 4
    %v959 = vadd.f32 %v951, %v958
    %v960 = vrot.slane %v959, 2
    %v961 = vadd.f32 %v959, %v960
    %v962 = vrot.slane %v961, 1
    %v963 = vadd.f32 %v961, %v962
    %v964 = vrcp.pop %v957
    %v965 = vrcp.pop %v963
    %v966 = vmul.f32 %v949, %v964
    %v967 = vmul.f32 %v951, %v965
    %v968 = vmul.f32 %v966, %v899
    %v969 = vmul.f32 %v967, %v900
    %v970 = vsel %vm230, %v968, 0.0
    %v971 = vrot.slane %v970, 4
    %v972 = vadd.f32 %v970, %v971
    %v973 = vrot.slane %v972, 2
    %v974 = vadd.f32 %v972, %v973
    %v975 = vrot.slane %v974, 1
    %v976 = vadd.f32 %v974, %v975
    %v977 = vsel %vm230, %v969, 0.0
    %v978 = vrot.slane %v977, 4
    %v979 = vadd.f32 %v977, %v978
    %v980 = vrot.slane %v979, 2
    %v981 = vadd.f32 %v979, %v980
    %v982 = vrot.slane %v981, 1
    %v983 = vadd.f32 %v981, %v982
    %vm984 = vcmp.eq.s32.totalorder %v184, 1
    %v985 = vsel %vm984, 1, 0
    %v986 = vcvt.s32.f32 %v985
    %v987 = vld [vmem:[#allocation13] sm:$0xff]
    %v988 = vld [vmem:[#allocation13 + $0x8] sm:$0xff]
    %v989 = vld [vmem:[#allocation13 + $0x10] sm:$0xff]
    %v990 = vld [vmem:[#allocation13 + $0x18] sm:$0xff]
    %v991 = vld [vmem:[#allocation14] sm:$0xff]
    %v992 = vld [vmem:[#allocation14 + $0x8] sm:$0xff]
    %v993 = vld [vmem:[#allocation14 + $0x10] sm:$0xff]
    %v994 = vld [vmem:[#allocation14 + $0x18] sm:$0xff]
    %995 = vmatpush.msra.mxu0 0.0
    %996 = vmatpush.msra.mxu0 0.0
    %997 = vmatpush.msra.mxu0 0.0
    %998 = vmatpush.msra.mxu0 0.0
    %999 = vmatpush.msra.mxu0 0.0
    %1000 = vmatpush.msra.mxu0 0.0
    %1001 = vmatpush.msra.mxu0 0.0
    %1002 = vmatpush.msra.mxu0 0.0
    %1003 = vmatpush.msra.mxu0 0.0
    %1004 = vmatpush.msra.mxu0 0.0
    %1005 = vmatpush.msra.mxu0 0.0
    %1006 = vmatpush.msra.mxu0 0.0
    %1007 = vmatpush.msra.mxu0 %v994
    %1008 = vmatpush.msra.mxu0 %v993
    %1009 = vmatpush.msra.mxu0 %v992
    %1010 = vmatpush.msra.mxu0 %v991
    %1011 = vmatmul.f32.gmra.mxu0 %v905
    %v1012 = vpop.f32.mrf.mxu0
    %v1013 = vadd.f32 0.0, %v1012
    %1014 = vdwg.mxu0
    %vm1017 = vcmask 1041409
    %v1018 = vsel %vm1017, %v983, %v976
    %v1019 = vsel %vm230, %v1018, 0
    %1021 = vmatpush.msra.mxu0 0.0
    %1022 = vmatpush.msra.mxu0 0.0
    %1023 = vmatpush.msra.mxu0 0.0
    %1024 = vmatpush.msra.mxu0 0.0
    %1025 = vmatpush.msra.mxu0 0.0
    %1026 = vmatpush.msra.mxu0 0.0
    %1027 = vmatpush.msra.mxu0 0.0
    %1028 = vmatpush.msra.mxu0 0.0
    %1029 = vmatpush.msra.mxu0 0.0
    %1030 = vmatpush.msra.mxu0 0.0
    %1031 = vmatpush.msra.mxu0 0.0
    %1032 = vmatpush.msra.mxu0 0.0
    %1033 = vmatpush.msra.mxu0 %v990
    %1034 = vmatpush.msra.mxu0 %v989
    %1035 = vmatpush.msra.mxu0 %v988
    %1036 = vmatpush.msra.mxu0 %v987
    %1037 = vmatmul.f32.gmra.mxu0 %v1019
    %v1038 = vpop.f32.mrf.mxu0
    %v1039 = vadd.f32 %v1013, %v1038
    %1040 = vdwg.mxu0
    %v1041 = vld [vmem:[#allocation16] sm:$0xff]
    %v1042 = vld [vmem:[#allocation16 + $0x8] sm:$0xff]
    %v1043 = vld [vmem:[#allocation16 + $0x10] sm:$0xff]
    %v1044 = vld [vmem:[#allocation16 + $0x18] sm:$0xff]
    %v1045 = vld [vmem:[#allocation16 + $0x20] sm:$0xff]
    %v1046 = vld [vmem:[#allocation16 + $0x28] sm:$0xff]
    %v1047 = vld [vmem:[#allocation16 + $0x30] sm:$0xff]
    %v1048 = vld [vmem:[#allocation16 + $0x38] sm:$0xff]
    %v1049 = vld [vmem:[#allocation16 + $0x40] sm:$0xff]
    %v1050 = vld [vmem:[#allocation16 + $0x48] sm:$0xff]
    %v1051 = vld [vmem:[#allocation16 + $0x50] sm:$0xff]
    %v1052 = vld [vmem:[#allocation16 + $0x58] sm:$0xff]
    %v1053 = vld [vmem:[#allocation16 + $0x60] sm:$0xff]
    %v1054 = vld [vmem:[#allocation16 + $0x68] sm:$0xff]
    %v1055 = vld [vmem:[#allocation16 + $0x70] sm:$0xff]
    %v1056 = vld [vmem:[#allocation16 + $0x78] sm:$0xff]
    %1057 = vmatpush.msra.mxu0 %v1056
    %1058 = vmatpush.msra.mxu0 %v1055
    %1059 = vmatpush.msra.mxu0 %v1054
    %1060 = vmatpush.msra.mxu0 %v1053
    %1061 = vmatpush.msra.mxu0 %v1052
    %1062 = vmatpush.msra.mxu0 %v1051
    %1063 = vmatpush.msra.mxu0 %v1050
    %1064 = vmatpush.msra.mxu0 %v1049
    %1065 = vmatpush.msra.mxu0 %v1048
    %1066 = vmatpush.msra.mxu0 %v1047
    %1067 = vmatpush.msra.mxu0 %v1046
    %1068 = vmatpush.msra.mxu0 %v1045
    %1069 = vmatpush.msra.mxu0 %v1044
    %1070 = vmatpush.msra.mxu0 %v1043
    %1071 = vmatpush.msra.mxu0 %v1042
    %1072 = vmatpush.msra.mxu0 %v1041
    %1073 = vmatmul.f32.gmra.mxu0 %v986
    %v1074 = vpop.f32.mrf.mxu0
    %v1075 = vadd.f32 0.0, %v1074
    %1076 = vdwg.mxu0
    %v1077 = vadd.f32 %v1039, %v1075
    %v1079 = vperm.slane %v177, 0
    %v1081 = vadd.f32 %v1077, %v1079
    %v1082 = vxor.u32 %v1081, 2147483648
    %v1083 = vmul.f32 %v1082, 1.442695
    %v1084 = vpow.pop %v1083
    %v1085 = vadd.f32 %v1084, 1.0
    %v1086 = vrcp.pop %v1085
    %v1087 = vmul.f32 %v1085, %v1086
    %v1088 = vsub.f32 1.0, %v1087
    %v1089 = vmul.f32 %v1086, %v1088
    %v1090 = vadd.f32 %v1086, %v1089
    %vm1091 = vweird.f32 %v1085
    %vm1092 = vweird.f32 %v1086
    %vm1093 = vmor %vm1091, %vm1092
    %v1094 = vsel %vm1093, %v1086, %v1090
    %v1095 = vand.u32 2147483647, %v1085
    %vm1096 = vcmp.eq.f32.partialorder %v1095, 8.507059e+37
    %v1097 = vand.u32 %v1085, 2147483648
    %v1098 = vor.u32 1.1754944e-38, %v1097
    %v1099 = vsel %vm1096, %v1098, %v1094
    %v1100 = vmul.f32 1.0, %v1099
    %v1101 = vtanh.pop %v1081
    %v1102 = vmul.f32 %v1100, %v839
    %1104 = vrot.lane.b32.xlu0 %v1101, 64
    %v1105 = vpop.permute.xlu0 %1104
    %v1107 = vmul.f32 %v1100, %v1105
    %1109 = vrot.lane.b32.xlu0 %v1107, 32
    %v1110 = vpop.permute.xlu0 %1109
    %v1112 = vadd.f32 %v1102, %v1110
    %v1113 = vtanh.pop %v1112
    %1115 = vrot.lane.b32.xlu0 %v1113, 64
    %v1116 = vpop.permute.xlu0 %1115
    %v1118 = vmul.f32 %v1100, %v1116
    %v1119 = vld [vmem:[#allocation17] sm:$0xff]
    %v1120 = vld [vmem:[#allocation17 + $0x8] sm:$0xff]
    %v1121 = vld [vmem:[#allocation17 + $0x10] sm:$0xff]
    %v1122 = vld [vmem:[#allocation17 + $0x18] sm:$0xff]
    %v1124 = vperm.slane %v178, 0
    %1127 = vrot.lane.b32.xlu0 %v1118, 32
    %v1128 = vpop.permute.xlu0 %1127
    %v1129 = vsel %vm230, %v1128, 0
    %1131 = vmatpush.msra.mxu0 0.0
    %1132 = vmatpush.msra.mxu0 0.0
    %1133 = vmatpush.msra.mxu0 0.0
    %1134 = vmatpush.msra.mxu0 0.0
    %1135 = vmatpush.msra.mxu0 0.0
    %1136 = vmatpush.msra.mxu0 0.0
    %1137 = vmatpush.msra.mxu0 0.0
    %1138 = vmatpush.msra.mxu0 0.0
    %1139 = vmatpush.msra.mxu0 0.0
    %1140 = vmatpush.msra.mxu0 0.0
    %1141 = vmatpush.msra.mxu0 0.0
    %1142 = vmatpush.msra.mxu0 0.0
    %1143 = vmatpush.msra.mxu0 %v1122
    %1144 = vmatpush.msra.mxu0 %v1121
    %1145 = vmatpush.msra.mxu0 %v1120
    %1146 = vmatpush.msra.mxu0 %v1119
    %1147 = vmatmul.f32.gmra.mxu0 %v1129
    %v1148 = vpop.f32.mrf.mxu0
    %v1149 = vadd.f32 %v1124, %v1148
    %1150 = vdwg.mxu0
    %1151 = vst [vmem:[#allocation19] sm:$0x3] %v1149
    %vm1152 = vcmask 1041408
    %v1153 = vsel %vm1152, %v1149, -inf
    %1154 = vmax.xlane.f32.xlu0 %v1153
    %v1155 = vpop.xlane.xlu0 %1154
    %vm1156 = vcmp.eq.f32.partialorder %v1149, %v1155
    %v1157 = vsel %vm1156, %v184, 128
    %v1158 = vsel %vm1152, %v1157, 2147483647
    %v1159 = vand.u32 %v1158, 65535
    %v1160 = vshra.s32 %v1158, 16
    %v1161 = vcvt.s32.f32 %v1159
    %v1162 = vcvt.s32.f32 %v1160
    %1163 = vmin.xlane.f32.xlu0 %v1162
    %v1164 = vpop.xlane.xlu0 %1163
    %vm1165 = vcmp.eq.f32.partialorder %v1162, %v1164
    %v1166 = vsel %vm1165, %v1161, inf
    %1167 = vmin.xlane.f32.xlu0 %v1166
    %v1168 = vpop.xlane.xlu0 %1167
    %v1169 = vcvt.f32.s32 %v1168
    %v1170 = vcvt.f32.s32 %v1164
    %v1171 = vshll.u32 %v1170, 16
    %v1172 = vadd.s32 %v1171, %v1169
    %v1173 = vld [vmem:[#allocation3] sm:$0xff]
    %v1174 = vld [vmem:[#allocation3 + $0x8] sm:$0xff]
    %v1175 = vld [vmem:[#allocation4] sm:$0xff]
    %v1176 = vld [vmem:[#allocation4 + $0x8] sm:$0xff]
    %1177 = vmatpush.msra.mxu0 0.0
    %1178 = vmatpush.msra.mxu0 0.0
    %1179 = vmatpush.msra.mxu0 0.0
    %1180 = vmatpush.msra.mxu0 0.0
    %1181 = vmatpush.msra.mxu0 0.0
    %1182 = vmatpush.msra.mxu0 0.0
    %1183 = vmatpush.msra.mxu0 0.0
    %1184 = vmatpush.msra.mxu0 0.0
    %1185 = vmatpush.msra.mxu0 0.0
    %1186 = vmatpush.msra.mxu0 0.0
    %1187 = vmatpush.msra.mxu0 0.0
    %1188 = vmatpush.msra.mxu0 0.0
    %1189 = vmatpush.msra.mxu0 %v182
    %1190 = vmatpush.msra.mxu0 %v181
    %1191 = vmatpush.msra.mxu0 %v180
    %1192 = vmatpush.msra.mxu0 %v179
    %1193 = vmatmul.f32.gmra.mxu0 %v1129
    %v1194 = vpop.f32.mrf.mxu0
    %v1195 = vadd.f32 0.0, %v1194
    %1196 = vdwg.mxu0
    %v1198 = vrot.slane %v1195, 1
    %v1199 = vperm.slane %v1195, 0
    %v1200 = vperm.slane %v1198, 0
    %v1203 = vadd.f32 %v1175, %v1199
    %v1204 = vadd.f32 %v1176, %v1200
    %v1205 = vtanh.pop %v1203
    %v1206 = vtanh.pop %v1204
    %v1207 = vmul.f32 %v1205, %v938
    %v1208 = vmul.f32 %v1206, %v938
    %v1209 = vsel %vm230, %v1207, 0.0
    %1210 = vadd.xlane.f32.xlu0 %v1209
    %v1211 = vpop.xlane.xlu0 %1210
    %v1212 = vsel %vm230, %v1208, 0.0
    %1213 = vadd.xlane.f32.xlu0 %v1212
    %v1214 = vpop.xlane.xlu0 %1213
    %v1215 = vmul.f32 %v1211, 1.442695
    %v1216 = vpow.pop %v1215
    %v1217 = vmul.f32 %v1214, 1.442695
    %v1218 = vpow.pop %v1217
    %v1219 = vrot.slane %v1216, 4
    %v1220 = vadd.f32 %v1216, %v1219
    %v1221 = vrot.slane %v1220, 2
    %v1222 = vadd.f32 %v1220, %v1221
    %v1223 = vrot.slane %v1222, 1
    %v1224 = vadd.f32 %v1222, %v1223
    %v1225 = vrot.slane %v1218, 4
    %v1226 = vadd.f32 %v1218, %v1225
    %v1227 = vrot.slane %v1226, 2
    %v1228 = vadd.f32 %v1226, %v1227
    %v1229 = vrot.slane %v1228, 1
    %v1230 = vadd.f32 %v1228, %v1229
    %v1231 = vrcp.pop %v1224
    %v1232 = vrcp.pop %v1230
    %v1233 = vmul.f32 %v1216, %v1231
    %v1234 = vmul.f32 %v1218, %v1232
    %v1235 = vmul.f32 %v1233, %v1173
    %v1236 = vmul.f32 %v1234, %v1174
    %v1237 = vsel %vm230, %v1235, 0.0
    %v1238 = vrot.slane %v1237, 4
    %v1239 = vadd.f32 %v1237, %v1238
    %v1240 = vrot.slane %v1239, 2
    %v1241 = vadd.f32 %v1239, %v1240
    %v1242 = vrot.slane %v1241, 1
    %v1243 = vadd.f32 %v1241, %v1242
    %v1244 = vsel %vm230, %v1236, 0.0
    %v1245 = vrot.slane %v1244, 4
    %v1246 = vadd.f32 %v1244, %v1245
    %v1247 = vrot.slane %v1246, 2
    %v1248 = vadd.f32 %v1246, %v1247
    %v1249 = vrot.slane %v1248, 1
    %v1250 = vadd.f32 %v1248, %v1249
    %vm1251 = vcmp.eq.s32.totalorder %v184, %v1172
    %v1252 = vsel %vm1251, 1, 0
    %v1253 = vcvt.s32.f32 %v1252
    %v1254 = vld [vmem:[#allocation13] sm:$0xff]
    %v1255 = vld [vmem:[#allocation13 + $0x8] sm:$0xff]
    %v1256 = vld [vmem:[#allocation13 + $0x10] sm:$0xff]
    %v1257 = vld [vmem:[#allocation13 + $0x18] sm:$0xff]
    %v1258 = vld [vmem:[#allocation14] sm:$0xff]
    %v1259 = vld [vmem:[#allocation14 + $0x8] sm:$0xff]
    %v1260 = vld [vmem:[#allocation14 + $0x10] sm:$0xff]
    %v1261 = vld [vmem:[#allocation14 + $0x18] sm:$0xff]
    %1262 = vmatpush.msra.mxu0 0.0
    %1263 = vmatpush.msra.mxu0 0.0
    %1264 = vmatpush.msra.mxu0 0.0
    %1265 = vmatpush.msra.mxu0 0.0
    %1266 = vmatpush.msra.mxu0 0.0
    %1267 = vmatpush.msra.mxu0 0.0
    %1268 = vmatpush.msra.mxu0 0.0
    %1269 = vmatpush.msra.mxu0 0.0
    %1270 = vmatpush.msra.mxu0 0.0
    %1271 = vmatpush.msra.mxu0 0.0
    %1272 = vmatpush.msra.mxu0 0.0
    %1273 = vmatpush.msra.mxu0 0.0
    %1274 = vmatpush.msra.mxu0 %v1261
    %1275 = vmatpush.msra.mxu0 %v1260
    %1276 = vmatpush.msra.mxu0 %v1259
    %1277 = vmatpush.msra.mxu0 %v1258
    %1278 = vmatmul.f32.gmra.mxu0 %v1129
    %v1279 = vpop.f32.mrf.mxu0
    %v1280 = vadd.f32 0.0, %v1279
    %1281 = vdwg.mxu0
    %v1284 = vsel %vm1017, %v1250, %v1243
    %v1285 = vsel %vm230, %v1284, 0
    %1287 = vmatpush.msra.mxu0 0.0
    %1288 = vmatpush.msra.mxu0 0.0
    %1289 = vmatpush.msra.mxu0 0.0
    %1290 = vmatpush.msra.mxu0 0.0
    %1291 = vmatpush.msra.mxu0 0.0
    %1292 = vmatpush.msra.mxu0 0.0
    %1293 = vmatpush.msra.mxu0 0.0
    %1294 = vmatpush.msra.mxu0 0.0
    %1295 = vmatpush.msra.mxu0 0.0
    %1296 = vmatpush.msra.mxu0 0.0
    %1297 = vmatpush.msra.mxu0 0.0
    %1298 = vmatpush.msra.mxu0 0.0
    %1299 = vmatpush.msra.mxu0 %v1257
    %1300 = vmatpush.msra.mxu0 %v1256
    %1301 = vmatpush.msra.mxu0 %v1255
    %1302 = vmatpush.msra.mxu0 %v1254
    %1303 = vmatmul.f32.gmra.mxu0 %v1285
    %v1304 = vpop.f32.mrf.mxu0
    %v1305 = vadd.f32 %v1280, %v1304
    %1306 = vdwg.mxu0
    %v1307 = vld [vmem:[#allocation16] sm:$0xff]
    %v1308 = vld [vmem:[#allocation16 + $0x8] sm:$0xff]
    %v1309 = vld [vmem:[#allocation16 + $0x10] sm:$0xff]
    %v1310 = vld [vmem:[#allocation16 + $0x18] sm:$0xff]
    %v1311 = vld [vmem:[#allocation16 + $0x20] sm:$0xff]
    %v1312 = vld [vmem:[#allocation16 + $0x28] sm:$0xff]
    %v1313 = vld [vmem:[#allocation16 + $0x30] sm:$0xff]
    %v1314 = vld [vmem:[#allocation16 + $0x38] sm:$0xff]
    %v1315 = vld [vmem:[#allocation16 + $0x40] sm:$0xff]
    %v1316 = vld [vmem:[#allocation16 + $0x48] sm:$0xff]
    %v1317 = vld [vmem:[#allocation16 + $0x50] sm:$0xff]
    %v1318 = vld [vmem:[#allocation16 + $0x58] sm:$0xff]
    %v1319 = vld [vmem:[#allocation16 + $0x60] sm:$0xff]
    %v1320 = vld [vmem:[#allocation16 + $0x68] sm:$0xff]
    %v1321 = vld [vmem:[#allocation16 + $0x70] sm:$0xff]
    %v1322 = vld [vmem:[#allocation16 + $0x78] sm:$0xff]
    %1323 = vmatpush.msra.mxu0 %v1322
    %1324 = vmatpush.msra.mxu0 %v1321
    %1325 = vmatpush.msra.mxu0 %v1320
    %1326 = vmatpush.msra.mxu0 %v1319
    %1327 = vmatpush.msra.mxu0 %v1318
    %1328 = vmatpush.msra.mxu0 %v1317
    %1329 = vmatpush.msra.mxu0 %v1316
    %1330 = vmatpush.msra.mxu0 %v1315
    %1331 = vmatpush.msra.mxu0 %v1314
    %1332 = vmatpush.msra.mxu0 %v1313
    %1333 = vmatpush.msra.mxu0 %v1312
    %1334 = vmatpush.msra.mxu0 %v1311
    %1335 = vmatpush.msra.mxu0 %v1310
    %1336 = vmatpush.msra.mxu0 %v1309
    %1337 = vmatpush.msra.mxu0 %v1308
    %1338 = vmatpush.msra.mxu0 %v1307
    %1339 = vmatmul.f32.gmra.mxu0 %v1253
    %v1340 = vpop.f32.mrf.mxu0
    %v1341 = vadd.f32 0.0, %v1340
    %1342 = vdwg.mxu0
    %v1343 = vadd.f32 %v1305, %v1341
    %v1344 = vadd.f32 %v1343, %v1079
    %v1345 = vxor.u32 %v1344, 2147483648
    %v1346 = vmul.f32 %v1345, 1.442695
    %v1347 = vpow.pop %v1346
    %v1348 = vadd.f32 %v1347, 1.0
    %v1349 = vrcp.pop %v1348
    %v1350 = vmul.f32 %v1348, %v1349
    %v1351 = vsub.f32 1.0, %v1350
    %v1352 = vmul.f32 %v1349, %v1351
    %v1353 = vadd.f32 %v1349, %v1352
    %vm1354 = vweird.f32 %v1348
    %vm1355 = vweird.f32 %v1349
    %vm1356 = vmor %vm1354, %vm1355
    %v1357 = vsel %vm1356, %v1349, %v1353
    %v1358 = vand.u32 2147483647, %v1348
    %vm1359 = vcmp.eq.f32.partialorder %v1358, 8.507059e+37
    %v1360 = vand.u32 %v1348, 2147483648
    %v1361 = vor.u32 1.1754944e-38, %v1360
    %v1362 = vsel %vm1359, %v1361, %v1357
    %v1363 = vmul.f32 1.0, %v1362
    %v1364 = vtanh.pop %v1344
    %v1365 = vmul.f32 %v1363, %v1112
    %1367 = vrot.lane.b32.xlu0 %v1364, 64
    %v1368 = vpop.permute.xlu0 %1367
    %v1370 = vmul.f32 %v1363, %v1368
    %1372 = vrot.lane.b32.xlu0 %v1370, 32
    %v1373 = vpop.permute.xlu0 %1372
    %v1375 = vadd.f32 %v1365, %v1373
    %v1376 = vtanh.pop %v1375
    %1378 = vrot.lane.b32.xlu0 %v1376, 64
    %v1379 = vpop.permute.xlu0 %1378
    %v1381 = vmul.f32 %v1363, %v1379
    %v1382 = vld [vmem:[#allocation17] sm:$0xff]
    %v1383 = vld [vmem:[#allocation17 + $0x8] sm:$0xff]
    %v1384 = vld [vmem:[#allocation17 + $0x10] sm:$0xff]
    %v1385 = vld [vmem:[#allocation17 + $0x18] sm:$0xff]
    %1387 = vrot.lane.b32.xlu0 %v1381, 32
    %v1388 = vpop.permute.xlu0 %1387
    %v1389 = vsel %vm230, %v1388, 0
    %1391 = vmatpush.msra.mxu0 0.0
    %1392 = vmatpush.msra.mxu0 0.0
    %1393 = vmatpush.msra.mxu0 0.0
    %1394 = vmatpush.msra.mxu0 0.0
    %1395 = vmatpush.msra.mxu0 0.0
    %1396 = vmatpush.msra.mxu0 0.0
    %1397 = vmatpush.msra.mxu0 0.0
    %1398 = vmatpush.msra.mxu0 0.0
    %1399 = vmatpush.msra.mxu0 0.0
    %1400 = vmatpush.msra.mxu0 0.0
    %1401 = vmatpush.msra.mxu0 0.0
    %1402 = vmatpush.msra.mxu0 0.0
    %1403 = vmatpush.msra.mxu0 %v1385
    %1404 = vmatpush.msra.mxu0 %v1384
    %1405 = vmatpush.msra.mxu0 %v1383
    %1406 = vmatpush.msra.mxu0 %v1382
    %1407 = vmatmul.f32.gmra.mxu0 %v1389
    %v1408 = vpop.f32.mrf.mxu0
    %v1409 = vadd.f32 %v1124, %v1408
    %1410 = vdwg.mxu0
    %1411 = vst [vmem:[#allocation19 + $0x2] sm:$0x3] %v1409
    %v1412 = vsel %vm1152, %v1409, -inf
    %1413 = vmax.xlane.f32.xlu0 %v1412
    %v1414 = vpop.xlane.xlu0 %1413
    %vm1415 = vcmp.eq.f32.partialorder %v1409, %v1414
    %v1416 = vsel %vm1415, %v184, 128
    %v1417 = vsel %vm1152, %v1416, 2147483647
    %v1418 = vand.u32 %v1417, 65535
    %v1419 = vshra.s32 %v1417, 16
    %v1420 = vcvt.s32.f32 %v1418
    %v1421 = vcvt.s32.f32 %v1419
    %1422 = vmin.xlane.f32.xlu0 %v1421
    %v1423 = vpop.xlane.xlu0 %1422
    %vm1424 = vcmp.eq.f32.partialorder %v1421, %v1423
    %v1425 = vsel %vm1424, %v1420, inf
    %1426 = vmin.xlane.f32.xlu0 %v1425
    %v1427 = vpop.xlane.xlu0 %1426
    %v1428 = vcvt.f32.s32 %v1427
    %v1429 = vcvt.f32.s32 %v1423
    %v1430 = vshll.u32 %v1429, 16
    %v1431 = vadd.s32 %v1430, %v1428
    %v1432 = vld [vmem:[#allocation3] sm:$0xff]
    %v1433 = vld [vmem:[#allocation3 + $0x8] sm:$0xff]
    %v1434 = vld [vmem:[#allocation4] sm:$0xff]
    %v1435 = vld [vmem:[#allocation4 + $0x8] sm:$0xff]
    %1436 = vmatpush.msra.mxu0 0.0
    %1437 = vmatpush.msra.mxu0 0.0
    %1438 = vmatpush.msra.mxu0 0.0
    %1439 = vmatpush.msra.mxu0 0.0
    %1440 = vmatpush.msra.mxu0 0.0
    %1441 = vmatpush.msra.mxu0 0.0
    %1442 = vmatpush.msra.mxu0 0.0
    %1443 = vmatpush.msra.mxu0 0.0
    %1444 = vmatpush.msra.mxu0 0.0
    %1445 = vmatpush.msra.mxu0 0.0
    %1446 = vmatpush.msra.mxu0 0.0
    %1447 = vmatpush.msra.mxu0 0.0
    %1448 = vmatpush.msra.mxu0 %v182
    %1449 = vmatpush.msra.mxu0 %v181
    %1450 = vmatpush.msra.mxu0 %v180
    %1451 = vmatpush.msra.mxu0 %v179
    %1452 = vmatmul.f32.gmra.mxu0 %v1389
    %v1453 = vpop.f32.mrf.mxu0
    %v1454 = vadd.f32 0.0, %v1453
    %1455 = vdwg.mxu0
    %v1457 = vrot.slane %v1454, 1
    %v1458 = vperm.slane %v1454, 0
    %v1459 = vperm.slane %v1457, 0
    %v1462 = vadd.f32 %v1434, %v1458
    %v1463 = vadd.f32 %v1435, %v1459
    %v1464 = vtanh.pop %v1462
    %v1465 = vtanh.pop %v1463
    %v1466 = vmul.f32 %v1464, %v938
    %v1467 = vmul.f32 %v1465, %v938
    %v1468 = vsel %vm230, %v1466, 0.0
    %1469 = vadd.xlane.f32.xlu0 %v1468
    %v1470 = vpop.xlane.xlu0 %1469
    %v1471 = vsel %vm230, %v1467, 0.0
    %1472 = vadd.xlane.f32.xlu0 %v1471
    %v1473 = vpop.xlane.xlu0 %1472
    %v1474 = vmul.f32 %v1470, 1.442695
    %v1475 = vpow.pop %v1474
    %v1476 = vmul.f32 %v1473, 1.442695
    %v1477 = vpow.pop %v1476
    %v1478 = vrot.slane %v1475, 4
    %v1479 = vadd.f32 %v1475, %v1478
    %v1480 = vrot.slane %v1479, 2
    %v1481 = vadd.f32 %v1479, %v1480
    %v1482 = vrot.slane %v1481, 1
    %v1483 = vadd.f32 %v1481, %v1482
    %v1484 = vrot.slane %v1477, 4
    %v1485 = vadd.f32 %v1477, %v1484
    %v1486 = vrot.slane %v1485, 2
    %v1487 = vadd.f32 %v1485, %v1486
    %v1488 = vrot.slane %v1487, 1
    %v1489 = vadd.f32 %v1487, %v1488
    %v1490 = vrcp.pop %v1483
    %v1491 = vrcp.pop %v1489
    %v1492 = vmul.f32 %v1475, %v1490
    %v1493 = vmul.f32 %v1477, %v1491
    %v1494 = vmul.f32 %v1492, %v1432
    %v1495 = vmul.f32 %v1493, %v1433
    %v1496 = vsel %vm230, %v1494, 0.0
    %v1497 = vrot.slane %v1496, 4
    %v1498 = vadd.f32 %v1496, %v1497
    %v1499 = vrot.slane %v1498, 2
    %v1500 = vadd.f32 %v1498, %v1499
    %v1501 = vrot.slane %v1500, 1
    %v1502 = vadd.f32 %v1500, %v1501
    %v1503 = vsel %vm230, %v1495, 0.0
    %v1504 = vrot.slane %v1503, 4
    %v1505 = vadd.f32 %v1503, %v1504
    %v1506 = vrot.slane %v1505, 2
    %v1507 = vadd.f32 %v1505, %v1506
    %v1508 = vrot.slane %v1507, 1
    %v1509 = vadd.f32 %v1507, %v1508
    %vm1510 = vcmp.eq.s32.totalorder %v184, %v1431
    %v1511 = vsel %vm1510, 1, 0
    %v1512 = vcvt.s32.f32 %v1511
    %v1513 = vld [vmem:[#allocation13] sm:$0xff]
    %v1514 = vld [vmem:[#allocation13 + $0x8] sm:$0xff]
    %v1515 = vld [vmem:[#allocation13 + $0x10] sm:$0xff]
    %v1516 = vld [vmem:[#allocation13 + $0x18] sm:$0xff]
    %v1517 = vld [vmem:[#allocation14] sm:$0xff]
    %v1518 = vld [vmem:[#allocation14 + $0x8] sm:$0xff]
    %v1519 = vld [vmem:[#allocation14 + $0x10] sm:$0xff]
    %v1520 = vld [vmem:[#allocation14 + $0x18] sm:$0xff]
    %1521 = vmatpush.msra.mxu0 0.0
    %1522 = vmatpush.msra.mxu0 0.0
    %1523 = vmatpush.msra.mxu0 0.0
    %1524 = vmatpush.msra.mxu0 0.0
    %1525 = vmatpush.msra.mxu0 0.0
    %1526 = vmatpush.msra.mxu0 0.0
    %1527 = vmatpush.msra.mxu0 0.0
    %1528 = vmatpush.msra.mxu0 0.0
    %1529 = vmatpush.msra.mxu0 0.0
    %1530 = vmatpush.msra.mxu0 0.0
    %1531 = vmatpush.msra.mxu0 0.0
    %1532 = vmatpush.msra.mxu0 0.0
    %1533 = vmatpush.msra.mxu0 %v1520
    %1534 = vmatpush.msra.mxu0 %v1519
    %1535 = vmatpush.msra.mxu0 %v1518
    %1536 = vmatpush.msra.mxu0 %v1517
    %1537 = vmatmul.f32.gmra.mxu0 %v1389
    %v1538 = vpop.f32.mrf.mxu0
    %v1539 = vadd.f32 0.0, %v1538
    %1540 = vdwg.mxu0
    %v1543 = vsel %vm1017, %v1509, %v1502
    %v1544 = vsel %vm230, %v1543, 0
    %1546 = vmatpush.msra.mxu0 0.0
    %1547 = vmatpush.msra.mxu0 0.0
    %1548 = vmatpush.msra.mxu0 0.0
    %1549 = vmatpush.msra.mxu0 0.0
    %1550 = vmatpush.msra.mxu0 0.0
    %1551 = vmatpush.msra.mxu0 0.0
    %1552 = vmatpush.msra.mxu0 0.0
    %1553 = vmatpush.msra.mxu0 0.0
    %1554 = vmatpush.msra.mxu0 0.0
    %1555 = vmatpush.msra.mxu0 0.0
    %1556 = vmatpush.msra.mxu0 0.0
    %1557 = vmatpush.msra.mxu0 0.0
    %1558 = vmatpush.msra.mxu0 %v1516
    %1559 = vmatpush.msra.mxu0 %v1515
    %1560 = vmatpush.msra.mxu0 %v1514
    %1561 = vmatpush.msra.mxu0 %v1513
    %1562 = vmatmul.f32.gmra.mxu0 %v1544
    %v1563 = vpop.f32.mrf.mxu0
    %v1564 = vadd.f32 %v1539, %v1563
    %1565 = vdwg.mxu0
    %v1566 = vld [vmem:[#allocation16] sm:$0xff]
    %v1567 = vld [vmem:[#allocation16 + $0x8] sm:$0xff]
    %v1568 = vld [vmem:[#allocation16 + $0x10] sm:$0xff]
    %v1569 = vld [vmem:[#allocation16 + $0x18] sm:$0xff]
    %v1570 = vld [vmem:[#allocation16 + $0x20] sm:$0xff]
    %v1571 = vld [vmem:[#allocation16 + $0x28] sm:$0xff]
    %v1572 = vld [vmem:[#allocation16 + $0x30] sm:$0xff]
    %v1573 = vld [vmem:[#allocation16 + $0x38] sm:$0xff]
    %v1574 = vld [vmem:[#allocation16 + $0x40] sm:$0xff]
    %v1575 = vld [vmem:[#allocation16 + $0x48] sm:$0xff]
    %v1576 = vld [vmem:[#allocation16 + $0x50] sm:$0xff]
    %v1577 = vld [vmem:[#allocation16 + $0x58] sm:$0xff]
    %v1578 = vld [vmem:[#allocation16 + $0x60] sm:$0xff]
    %v1579 = vld [vmem:[#allocation16 + $0x68] sm:$0xff]
    %v1580 = vld [vmem:[#allocation16 + $0x70] sm:$0xff]
    %v1581 = vld [vmem:[#allocation16 + $0x78] sm:$0xff]
    %1582 = vmatpush.msra.mxu0 %v1581
    %1583 = vmatpush.msra.mxu0 %v1580
    %1584 = vmatpush.msra.mxu0 %v1579
    %1585 = vmatpush.msra.mxu0 %v1578
    %1586 = vmatpush.msra.mxu0 %v1577
    %1587 = vmatpush.msra.mxu0 %v1576
    %1588 = vmatpush.msra.mxu0 %v1575
    %1589 = vmatpush.msra.mxu0 %v1574
    %1590 = vmatpush.msra.mxu0 %v1573
    %1591 = vmatpush.msra.mxu0 %v1572
    %1592 = vmatpush.msra.mxu0 %v1571
    %1593 = vmatpush.msra.mxu0 %v1570
    %1594 = vmatpush.msra.mxu0 %v1569
    %1595 = vmatpush.msra.mxu0 %v1568
    %1596 = vmatpush.msra.mxu0 %v1567
    %1597 = vmatpush.msra.mxu0 %v1566
    %1598 = vmatmul.f32.gmra.mxu0 %v1512
    %v1599 = vpop.f32.mrf.mxu0
    %v1600 = vadd.f32 0.0, %v1599
    %1601 = vdwg.mxu0
    %v1602 = vadd.f32 %v1564, %v1600
    %v1603 = vadd.f32 %v1602, %v1079
    %v1604 = vxor.u32 %v1603, 2147483648
    %v1605 = vmul.f32 %v1604, 1.442695
    %v1606 = vpow.pop %v1605
    %v1607 = vadd.f32 %v1606, 1.0
    %v1608 = vrcp.pop %v1607
    %v1609 = vmul.f32 %v1607, %v1608
    %v1610 = vsub.f32 1.0, %v1609
    %v1611 = vmul.f32 %v1608, %v1610
    %v1612 = vadd.f32 %v1608, %v1611
    %vm1613 = vweird.f32 %v1607
    %vm1614 = vweird.f32 %v1608
    %vm1615 = vmor %vm1613, %vm1614
    %v1616 = vsel %vm1615, %v1608, %v1612
    %v1617 = vand.u32 2147483647, %v1607
    %vm1618 = vcmp.eq.f32.partialorder %v1617, 8.507059e+37
    %v1619 = vand.u32 %v1607, 2147483648
    %v1620 = vor.u32 1.1754944e-38, %v1619
    %v1621 = vsel %vm1618, %v1620, %v1616
    %v1622 = vmul.f32 1.0, %v1621
    %v1623 = vtanh.pop %v1603
    %v1624 = vmul.f32 %v1622, %v1375
    %1626 = vrot.lane.b32.xlu0 %v1623, 64
    %v1627 = vpop.permute.xlu0 %1626
    %v1629 = vmul.f32 %v1622, %v1627
    %1631 = vrot.lane.b32.xlu0 %v1629, 32
    %v1632 = vpop.permute.xlu0 %1631
    %v1634 = vadd.f32 %v1624, %v1632
    %v1635 = vtanh.pop %v1634
    %1637 = vrot.lane.b32.xlu0 %v1635, 64
    %v1638 = vpop.permute.xlu0 %1637
    %v1640 = vmul.f32 %v1622, %v1638
    %v1641 = vld [vmem:[#allocation17] sm:$0xff]
    %v1642 = vld [vmem:[#allocation17 + $0x8] sm:$0xff]
    %v1643 = vld [vmem:[#allocation17 + $0x10] sm:$0xff]
    %v1644 = vld [vmem:[#allocation17 + $0x18] sm:$0xff]
    %1646 = vrot.lane.b32.xlu0 %v1640, 32
    %v1647 = vpop.permute.xlu0 %1646
    %v1648 = vsel %vm230, %v1647, 0
    %1650 = vmatpush.msra.mxu0 0.0
    %1651 = vmatpush.msra.mxu0 0.0
    %1652 = vmatpush.msra.mxu0 0.0
    %1653 = vmatpush.msra.mxu0 0.0
    %1654 = vmatpush.msra.mxu0 0.0
    %1655 = vmatpush.msra.mxu0 0.0
    %1656 = vmatpush.msra.mxu0 0.0
    %1657 = vmatpush.msra.mxu0 0.0
    %1658 = vmatpush.msra.mxu0 0.0
    %1659 = vmatpush.msra.mxu0 0.0
    %1660 = vmatpush.msra.mxu0 0.0
    %1661 = vmatpush.msra.mxu0 0.0
    %1662 = vmatpush.msra.mxu0 %v1644
    %1663 = vmatpush.msra.mxu0 %v1643
    %1664 = vmatpush.msra.mxu0 %v1642
    %1665 = vmatpush.msra.mxu0 %v1641
    %1666 = vmatmul.f32.gmra.mxu0 %v1648
    %v1667 = vpop.f32.mrf.mxu0
    %v1668 = vadd.f32 %v1124, %v1667
    %1669 = vdwg.mxu0
    %1670 = vst [vmem:[#allocation19 + $0x4] sm:$0x3] %v1668
    %v1671 = vld [vmem:[%s1 + $0x4] sm:$0x3]
    %v1672 = vld [vmem:[#allocation3] sm:$0xff]
    %v1673 = vld [vmem:[#allocation3 + $0x8] sm:$0xff]
    %v1674 = vld [vmem:[#allocation4] sm:$0xff]
    %v1675 = vld [vmem:[#allocation4 + $0x8] sm:$0xff]
    %1676 = vmatpush.msra.mxu0 0.0
    %1677 = vmatpush.msra.mxu0 0.0
    %1678 = vmatpush.msra.mxu0 0.0
    %1679 = vmatpush.msra.mxu0 0.0
    %1680 = vmatpush.msra.mxu0 0.0
    %1681 = vmatpush.msra.mxu0 0.0
    %1682 = vmatpush.msra.mxu0 0.0
    %1683 = vmatpush.msra.mxu0 0.0
    %1684 = vmatpush.msra.mxu0 0.0
    %1685 = vmatpush.msra.mxu0 0.0
    %1686 = vmatpush.msra.mxu0 0.0
    %1687 = vmatpush.msra.mxu0 0.0
    %1688 = vmatpush.msra.mxu0 %v182
    %1689 = vmatpush.msra.mxu0 %v181
    %1690 = vmatpush.msra.mxu0 %v180
    %1691 = vmatpush.msra.mxu0 %v179
    %1692 = vmatmul.f32.gmra.mxu0 %v1648
    %v1693 = vpop.f32.mrf.mxu0
    %v1694 = vadd.f32 0.0, %v1693
    %1695 = vdwg.mxu0
    %v1697 = vrot.slane %v1694, 1
    %v1698 = vperm.slane %v1694, 0
    %v1699 = vperm.slane %v1697, 0
    %v1702 = vadd.f32 %v1674, %v1698
    %v1703 = vadd.f32 %v1675, %v1699
    %v1704 = vtanh.pop %v1702
    %v1705 = vtanh.pop %v1703
    %v1706 = vmul.f32 %v1704, %v938
    %v1707 = vmul.f32 %v1705, %v938
    %v1708 = vsel %vm230, %v1706, 0.0
    %1709 = vadd.xlane.f32.xlu0 %v1708
    %v1710 = vpop.xlane.xlu0 %1709
    %v1711 = vsel %vm230, %v1707, 0.0
    %1712 = vadd.xlane.f32.xlu0 %v1711
    %v1713 = vpop.xlane.xlu0 %1712
    %v1714 = vmul.f32 %v1710, 1.442695
    %v1715 = vpow.pop %v1714
    %v1716 = vmul.f32 %v1713, 1.442695
    %v1717 = vpow.pop %v1716
    %v1718 = vrot.slane %v1715, 4
    %v1719 = vadd.f32 %v1715, %v1718
    %v1720 = vrot.slane %v1719, 2
    %v1721 = vadd.f32 %v1719, %v1720
    %v1722 = vrot.slane %v1721, 1
    %v1723 = vadd.f32 %v1721, %v1722
    %v1724 = vrot.slane %v1717, 4
    %v1725 = vadd.f32 %v1717, %v1724
    %v1726 = vrot.slane %v1725, 2
    %v1727 = vadd.f32 %v1725, %v1726
    %v1728 = vrot.slane %v1727, 1
    %v1729 = vadd.f32 %v1727, %v1728
    %v1730 = vrcp.pop %v1723
    %v1731 = vrcp.pop %v1729
    %v1732 = vmul.f32 %v1715, %v1730
    %v1733 = vmul.f32 %v1717, %v1731
    %v1734 = vmul.f32 %v1732, %v1672
    %v1735 = vmul.f32 %v1733, %v1673
    %v1736 = vsel %vm230, %v1734, 0.0
    %v1737 = vrot.slane %v1736, 4
    %v1738 = vadd.f32 %v1736, %v1737
    %v1739 = vrot.slane %v1738, 2
    %v1740 = vadd.f32 %v1738, %v1739
    %v1741 = vrot.slane %v1740, 1
    %v1742 = vadd.f32 %v1740, %v1741
    %v1743 = vsel %vm230, %v1735, 0.0
    %v1744 = vrot.slane %v1743, 4
    %v1745 = vadd.f32 %v1743, %v1744
    %v1746 = vrot.slane %v1745, 2
    %v1747 = vadd.f32 %v1745, %v1746
    %v1748 = vrot.slane %v1747, 1
    %v1749 = vadd.f32 %v1747, %v1748
    %1750 = vset.pattern.permute.xlu0 0
    %1751 = vperm.xlu0 %1750, %v1671
    %v1752 = vpop.permute.xlu0 %1751
    %vm1753 = vcmp.eq.s32.totalorder %v184, %v1752
    %v1754 = vsel %vm1753, 1, 0
    %v1755 = vcvt.s32.f32 %v1754
    %v1756 = vld [vmem:[#allocation13] sm:$0xff]
    %v1757 = vld [vmem:[#allocation13 + $0x8] sm:$0xff]
    %v1758 = vld [vmem:[#allocation13 + $0x10] sm:$0xff]
    %v1759 = vld [vmem:[#allocation13 + $0x18] sm:$0xff]
    %v1760 = vld [vmem:[#allocation14] sm:$0xff]
    %v1761 = vld [vmem:[#allocation14 + $0x8] sm:$0xff]
    %v1762 = vld [vmem:[#allocation14 + $0x10] sm:$0xff]
    %v1763 = vld [vmem:[#allocation14 + $0x18] sm:$0xff]
    %1764 = vmatpush.msra.mxu0 0.0
    %1765 = vmatpush.msra.mxu0 0.0
    %1766 = vmatpush.msra.mxu0 0.0
    %1767 = vmatpush.msra.mxu0 0.0
    %1768 = vmatpush.msra.mxu0 0.0
    %1769 = vmatpush.msra.mxu0 0.0
    %1770 = vmatpush.msra.mxu0 0.0
    %1771 = vmatpush.msra.mxu0 0.0
    %1772 = vmatpush.msra.mxu0 0.0
    %1773 = vmatpush.msra.mxu0 0.0
    %1774 = vmatpush.msra.mxu0 0.0
    %1775 = vmatpush.msra.mxu0 0.0
    %1776 = vmatpush.msra.mxu0 %v1763
    %1777 = vmatpush.msra.mxu0 %v1762
    %1778 = vmatpush.msra.mxu0 %v1761
    %1779 = vmatpush.msra.mxu0 %v1760
    %1780 = vmatmul.f32.gmra.mxu0 %v1648
    %v1781 = vpop.f32.mrf.mxu0
    %v1782 = vadd.f32 0.0, %v1781
    %1783 = vdwg.mxu0
    %v1786 = vsel %vm1017, %v1749, %v1742
    %v1787 = vsel %vm230, %v1786, 0
    %1789 = vmatpush.msra.mxu0 0.0
    %1790 = vmatpush.msra.mxu0 0.0
    %1791 = vmatpush.msra.mxu0 0.0
    %1792 = vmatpush.msra.mxu0 0.0
    %1793 = vmatpush.msra.mxu0 0.0
    %1794 = vmatpush.msra.mxu0 0.0
    %1795 = vmatpush.msra.mxu0 0.0
    %1796 = vmatpush.msra.mxu0 0.0
    %1797 = vmatpush.msra.mxu0 0.0
    %1798 = vmatpush.msra.mxu0 0.0
    %1799 = vmatpush.msra.mxu0 0.0
    %1800 = vmatpush.msra.mxu0 0.0
    %1801 = vmatpush.msra.mxu0 %v1759
    %1802 = vmatpush.msra.mxu0 %v1758
    %1803 = vmatpush.msra.mxu0 %v1757
    %1804 = vmatpush.msra.mxu0 %v1756
    %1805 = vmatmul.f32.gmra.mxu0 %v1787
    %v1806 = vpop.f32.mrf.mxu0
    %v1807 = vadd.f32 %v1782, %v1806
    %1808 = vdwg.mxu0
    %v1809 = vld [vmem:[#allocation16] sm:$0xff]
    %v1810 = vld [vmem:[#allocation16 + $0x8] sm:$0xff]
    %v1811 = vld [vmem:[#allocation16 + $0x10] sm:$0xff]
    %v1812 = vld [vmem:[#allocation16 + $0x18] sm:$0xff]
    %v1813 = vld [vmem:[#allocation16 + $0x20] sm:$0xff]
    %v1814 = vld [vmem:[#allocation16 + $0x28] sm:$0xff]
    %v1815 = vld [vmem:[#allocation16 + $0x30] sm:$0xff]
    %v1816 = vld [vmem:[#allocation16 + $0x38] sm:$0xff]
    %v1817 = vld [vmem:[#allocation16 + $0x40] sm:$0xff]
    %v1818 = vld [vmem:[#allocation16 + $0x48] sm:$0xff]
    %v1819 = vld [vmem:[#allocation16 + $0x50] sm:$0xff]
    %v1820 = vld [vmem:[#allocation16 + $0x58] sm:$0xff]
    %v1821 = vld [vmem:[#allocation16 + $0x60] sm:$0xff]
    %v1822 = vld [vmem:[#allocation16 + $0x68] sm:$0xff]
    %v1823 = vld [vmem:[#allocation16 + $0x70] sm:$0xff]
    %v1824 = vld [vmem:[#allocation16 + $0x78] sm:$0xff]
    %1825 = vmatpush.msra.mxu0 %v1824
    %1826 = vmatpush.msra.mxu0 %v1823
    %1827 = vmatpush.msra.mxu0 %v1822
    %1828 = vmatpush.msra.mxu0 %v1821
    %1829 = vmatpush.msra.mxu0 %v1820
    %1830 = vmatpush.msra.mxu0 %v1819
    %1831 = vmatpush.msra.mxu0 %v1818
    %1832 = vmatpush.msra.mxu0 %v1817
    %1833 = vmatpush.msra.mxu0 %v1816
    %1834 = vmatpush.msra.mxu0 %v1815
    %1835 = vmatpush.msra.mxu0 %v1814
    %1836 = vmatpush.msra.mxu0 %v1813
    %1837 = vmatpush.msra.mxu0 %v1812
    %1838 = vmatpush.msra.mxu0 %v1811
    %1839 = vmatpush.msra.mxu0 %v1810
    %1840 = vmatpush.msra.mxu0 %v1809
    %1841 = vmatmul.f32.gmra.mxu0 %v1755
    %v1842 = vpop.f32.mrf.mxu0
    %v1843 = vadd.f32 0.0, %v1842
    %1844 = vdwg.mxu0
    %v1845 = vadd.f32 %v1807, %v1843
    %v1846 = vadd.f32 %v1845, %v1079
    %v1847 = vxor.u32 %v1846, 2147483648
    %v1848 = vmul.f32 %v1847, 1.442695
    %v1849 = vpow.pop %v1848
    %v1850 = vadd.f32 %v1849, 1.0
    %v1851 = vrcp.pop %v1850
    %v1852 = vmul.f32 %v1850, %v1851
    %v1853 = vsub.f32 1.0, %v1852
    %v1854 = vmul.f32 %v1851, %v1853
    %v1855 = vadd.f32 %v1851, %v1854
    %vm1856 = vweird.f32 %v1850
    %vm1857 = vweird.f32 %v1851
    %vm1858 = vmor %vm1856, %vm1857
    %v1859 = vsel %vm1858, %v1851, %v1855
    %v1860 = vand.u32 2147483647, %v1850
    %vm1861 = vcmp.eq.f32.partialorder %v1860, 8.507059e+37
    %v1862 = vand.u32 %v1850, 2147483648
    %v1863 = vor.u32 1.1754944e-38, %v1862
    %v1864 = vsel %vm1861, %v1863, %v1859
    %v1865 = vmul.f32 1.0, %v1864
    %v1866 = vtanh.pop %v1846
    %v1867 = vmul.f32 %v1865, %v1634
    %1869 = vrot.lane.b32.xlu0 %v1866, 64
    %v1870 = vpop.permute.xlu0 %1869
    %v1872 = vmul.f32 %v1865, %v1870
    %1874 = vrot.lane.b32.xlu0 %v1872, 32
    %v1875 = vpop.permute.xlu0 %1874
    %v1877 = vadd.f32 %v1867, %v1875
    %v1878 = vtanh.pop %v1877
    %1880 = vrot.lane.b32.xlu0 %v1878, 64
    %v1881 = vpop.permute.xlu0 %1880
    %v1883 = vmul.f32 %v1865, %v1881
    %v1884 = vld [vmem:[#allocation17] sm:$0xff]
    %v1885 = vld [vmem:[#allocation17 + $0x8] sm:$0xff]
    %v1886 = vld [vmem:[#allocation17 + $0x10] sm:$0xff]
    %v1887 = vld [vmem:[#allocation17 + $0x18] sm:$0xff]
    %1889 = vrot.lane.b32.xlu0 %v1883, 32
    %v1890 = vpop.permute.xlu0 %1889
    %v1891 = vsel %vm230, %v1890, 0
    %1893 = vmatpush.msra.mxu0 0.0
    %1894 = vmatpush.msra.mxu0 0.0
    %1895 = vmatpush.msra.mxu0 0.0
    %1896 = vmatpush.msra.mxu0 0.0
    %1897 = vmatpush.msra.mxu0 0.0
    %1898 = vmatpush.msra.mxu0 0.0
    %1899 = vmatpush.msra.mxu0 0.0
    %1900 = vmatpush.msra.mxu0 0.0
    %1901 = vmatpush.msra.mxu0 0.0
    %1902 = vmatpush.msra.mxu0 0.0
    %1903 = vmatpush.msra.mxu0 0.0
    %1904 = vmatpush.msra.mxu0 0.0
    %1905 = vmatpush.msra.mxu0 %v1887
    %1906 = vmatpush.msra.mxu0 %v1886
    %1907 = vmatpush.msra.mxu0 %v1885
    %1908 = vmatpush.msra.mxu0 %v1884
    %1909 = vmatmul.f32.gmra.mxu0 %v1891
    %v1910 = vpop.f32.mrf.mxu0
    %v1911 = vadd.f32 %v1124, %v1910
    %1912 = vdwg.mxu0
    %1913 = vst [vmem:[#allocation19 + $0x6] sm:$0x3] %v1911
    %v1914 = vld [vmem:[%s1 + $0x6] sm:$0x3]
    %v1915 = vld [vmem:[#allocation3] sm:$0xff]
    %v1916 = vld [vmem:[#allocation3 + $0x8] sm:$0xff]
    %v1917 = vld [vmem:[#allocation4] sm:$0xff]
    %v1918 = vld [vmem:[#allocation4 + $0x8] sm:$0xff]
    %1919 = vmatpush.msra.mxu0 0.0
    %1920 = vmatpush.msra.mxu0 0.0
    %1921 = vmatpush.msra.mxu0 0.0
    %1922 = vmatpush.msra.mxu0 0.0
    %1923 = vmatpush.msra.mxu0 0.0
    %1924 = vmatpush.msra.mxu0 0.0
    %1925 = vmatpush.msra.mxu0 0.0
    %1926 = vmatpush.msra.mxu0 0.0
    %1927 = vmatpush.msra.mxu0 0.0
    %1928 = vmatpush.msra.mxu0 0.0
    %1929 = vmatpush.msra.mxu0 0.0
    %1930 = vmatpush.msra.mxu0 0.0
    %1931 = vmatpush.msra.mxu0 %v182
    %1932 = vmatpush.msra.mxu0 %v181
    %1933 = vmatpush.msra.mxu0 %v180
    %1934 = vmatpush.msra.mxu0 %v179
    %1935 = vmatmul.f32.gmra.mxu0 %v1891
    %v1936 = vpop.f32.mrf.mxu0
    %v1937 = vadd.f32 0.0, %v1936
    %1938 = vdwg.mxu0
    %v1940 = vrot.slane %v1937, 1
    %v1941 = vperm.slane %v1937, 0
    %v1942 = vperm.slane %v1940, 0
    %v1945 = vadd.f32 %v1917, %v1941
    %v1946 = vadd.f32 %v1918, %v1942
    %v1947 = vtanh.pop %v1945
    %v1948 = vtanh.pop %v1946
    %v1949 = vmul.f32 %v1947, %v938
    %v1950 = vmul.f32 %v1948, %v938
    %v1951 = vsel %vm230, %v1949, 0.0
    %1952 = vadd.xlane.f32.xlu0 %v1951
    %v1953 = vpop.xlane.xlu0 %1952
    %v1954 = vsel %vm230, %v1950, 0.0
    %1955 = vadd.xlane.f32.xlu0 %v1954
    %v1956 = vpop.xlane.xlu0 %1955
    %v1957 = vmul.f32 %v1953, 1.442695
    %v1958 = vpow.pop %v1957
    %v1959 = vmul.f32 %v1956, 1.442695
    %v1960 = vpow.pop %v1959
    %v1961 = vrot.slane %v1958, 4
    %v1962 = vadd.f32 %v1958, %v1961
    %v1963 = vrot.slane %v1962, 2
    %v1964 = vadd.f32 %v1962, %v1963
    %v1965 = vrot.slane %v1964, 1
    %v1966 = vadd.f32 %v1964, %v1965
    %v1967 = vrot.slane %v1960, 4
    %v1968 = vadd.f32 %v1960, %v1967
    %v1969 = vrot.slane %v1968, 2
    %v1970 = vadd.f32 %v1968, %v1969
    %v1971 = vrot.slane %v1970, 1
    %v1972 = vadd.f32 %v1970, %v1971
    %v1973 = vrcp.pop %v1966
    %v1974 = vrcp.pop %v1972
    %v1975 = vmul.f32 %v1958, %v1973
    %v1976 = vmul.f32 %v1960, %v1974
    %v1977 = vmul.f32 %v1975, %v1915
    %v1978 = vmul.f32 %v1976, %v1916
    %v1979 = vsel %vm230, %v1977, 0.0
    %v1980 = vrot.slane %v1979, 4
    %v1981 = vadd.f32 %v1979, %v1980
    %v1982 = vrot.slane %v1981, 2
    %v1983 = vadd.f32 %v1981, %v1982
    %v1984 = vrot.slane %v1983, 1
    %v1985 = vadd.f32 %v1983, %v1984
    %v1986 = vsel %vm230, %v1978, 0.0
    %v1987 = vrot.slane %v1986, 4
    %v1988 = vadd.f32 %v1986, %v1987
    %v1989 = vrot.slane %v1988, 2
    %v1990 = vadd.f32 %v1988, %v1989
    %v1991 = vrot.slane %v1990, 1
    %v1992 = vadd.f32 %v1990, %v1991
    %1993 = vset.pattern.permute.xlu0 0
    %1994 = vperm.xlu0 %1993, %v1914
    %v1995 = vpop.permute.xlu0 %1994
    %vm1996 = vcmp.eq.s32.totalorder %v184, %v1995
    %v1997 = vsel %vm1996, 1, 0
    %v1998 = vcvt.s32.f32 %v1997
    %v1999 = vld [vmem:[#allocation13] sm:$0xff]
    %v2000 = vld [vmem:[#allocation13 + $0x8] sm:$0xff]
    %v2001 = vld [vmem:[#allocation13 + $0x10] sm:$0xff]
    %v2002 = vld [vmem:[#allocation13 + $0x18] sm:$0xff]
    %v2003 = vld [vmem:[#allocation14] sm:$0xff]
    %v2004 = vld [vmem:[#allocation14 + $0x8] sm:$0xff]
    %v2005 = vld [vmem:[#allocation14 + $0x10] sm:$0xff]
    %v2006 = vld [vmem:[#allocation14 + $0x18] sm:$0xff]
    %2007 = vmatpush.msra.mxu0 0.0
    %2008 = vmatpush.msra.mxu0 0.0
    %2009 = vmatpush.msra.mxu0 0.0
    %2010 = vmatpush.msra.mxu0 0.0
    %2011 = vmatpush.msra.mxu0 0.0
    %2012 = vmatpush.msra.mxu0 0.0
    %2013 = vmatpush.msra.mxu0 0.0
    %2014 = vmatpush.msra.mxu0 0.0
    %2015 = vmatpush.msra.mxu0 0.0
    %2016 = vmatpush.msra.mxu0 0.0
    %2017 = vmatpush.msra.mxu0 0.0
    %2018 = vmatpush.msra.mxu0 0.0
    %2019 = vmatpush.msra.mxu0 %v2006
    %2020 = vmatpush.msra.mxu0 %v2005
    %2021 = vmatpush.msra.mxu0 %v2004
    %2022 = vmatpush.msra.mxu0 %v2003
    %2023 = vmatmul.f32.gmra.mxu0 %v1891
    %v2024 = vpop.f32.mrf.mxu0
    %v2025 = vadd.f32 0.0, %v2024
    %2026 = vdwg.mxu0
    %v2029 = vsel %vm1017, %v1992, %v1985
    %v2030 = vsel %vm230, %v2029, 0
    %2032 = vmatpush.msra.mxu0 0.0
    %2033 = vmatpush.msra.mxu0 0.0
    %2034 = vmatpush.msra.mxu0 0.0
    %2035 = vmatpush.msra.mxu0 0.0
    %2036 = vmatpush.msra.mxu0 0.0
    %2037 = vmatpush.msra.mxu0 0.0
    %2038 = vmatpush.msra.mxu0 0.0
    %2039 = vmatpush.msra.mxu0 0.0
    %2040 = vmatpush.msra.mxu0 0.0
    %2041 = vmatpush.msra.mxu0 0.0
    %2042 = vmatpush.msra.mxu0 0.0
    %2043 = vmatpush.msra.mxu0 0.0
    %2044 = vmatpush.msra.mxu0 %v2002
    %2045 = vmatpush.msra.mxu0 %v2001
    %2046 = vmatpush.msra.mxu0 %v2000
    %2047 = vmatpush.msra.mxu0 %v1999
    %2048 = vmatmul.f32.gmra.mxu0 %v2030
    %v2049 = vpop.f32.mrf.mxu0
    %v2050 = vadd.f32 %v2025, %v2049
    %2051 = vdwg.mxu0
    %v2052 = vld [vmem:[#allocation16] sm:$0xff]
    %v2053 = vld [vmem:[#allocation16 + $0x8] sm:$0xff]
    %v2054 = vld [vmem:[#allocation16 + $0x10] sm:$0xff]
    %v2055 = vld [vmem:[#allocation16 + $0x18] sm:$0xff]
    %v2056 = vld [vmem:[#allocation16 + $0x20] sm:$0xff]
    %v2057 = vld [vmem:[#allocation16 + $0x28] sm:$0xff]
    %v2058 = vld [vmem:[#allocation16 + $0x30] sm:$0xff]
    %v2059 = vld [vmem:[#allocation16 + $0x38] sm:$0xff]
    %v2060 = vld [vmem:[#allocation16 + $0x40] sm:$0xff]
    %v2061 = vld [vmem:[#allocation16 + $0x48] sm:$0xff]
    %v2062 = vld [vmem:[#allocation16 + $0x50] sm:$0xff]
    %v2063 = vld [vmem:[#allocation16 + $0x58] sm:$0xff]
    %v2064 = vld [vmem:[#allocation16 + $0x60] sm:$0xff]
    %v2065 = vld [vmem:[#allocation16 + $0x68] sm:$0xff]
    %v2066 = vld [vmem:[#allocation16 + $0x70] sm:$0xff]
    %v2067 = vld [vmem:[#allocation16 + $0x78] sm:$0xff]
    %2068 = vmatpush.msra.mxu0 %v2067
    %2069 = vmatpush.msra.mxu0 %v2066
    %2070 = vmatpush.msra.mxu0 %v2065
    %2071 = vmatpush.msra.mxu0 %v2064
    %2072 = vmatpush.msra.mxu0 %v2063
    %2073 = vmatpush.msra.mxu0 %v2062
    %2074 = vmatpush.msra.mxu0 %v2061
    %2075 = vmatpush.msra.mxu0 %v2060
    %2076 = vmatpush.msra.mxu0 %v2059
    %2077 = vmatpush.msra.mxu0 %v2058
    %2078 = vmatpush.msra.mxu0 %v2057
    %2079 = vmatpush.msra.mxu0 %v2056
    %2080 = vmatpush.msra.mxu0 %v2055
    %2081 = vmatpush.msra.mxu0 %v2054
    %2082 = vmatpush.msra.mxu0 %v2053
    %2083 = vmatpush.msra.mxu0 %v2052
    %2084 = vmatmul.f32.gmra.mxu0 %v1998
    %v2085 = vpop.f32.mrf.mxu0
    %v2086 = vadd.f32 0.0, %v2085
    %2087 = vdwg.mxu0
    %v2088 = vadd.f32 %v2050, %v2086
    %v2089 = vadd.f32 %v2088, %v1079
    %v2090 = vxor.u32 %v2089, 2147483648
    %v2091 = vmul.f32 %v2090, 1.442695
    %v2092 = vpow.pop %v2091
    %v2093 = vadd.f32 %v2092, 1.0
    %v2094 = vrcp.pop %v2093
    %v2095 = vmul.f32 %v2093, %v2094
    %v2096 = vsub.f32 1.0, %v2095
    %v2097 = vmul.f32 %v2094, %v2096
    %v2098 = vadd.f32 %v2094, %v2097
    %vm2099 = vweird.f32 %v2093
    %vm2100 = vweird.f32 %v2094
    %vm2101 = vmor %vm2099, %vm2100
    %v2102 = vsel %vm2101, %v2094, %v2098
    %v2103 = vand.u32 2147483647, %v2093
    %vm2104 = vcmp.eq.f32.partialorder %v2103, 8.507059e+37
    %v2105 = vand.u32 %v2093, 2147483648
    %v2106 = vor.u32 1.1754944e-38, %v2105
    %v2107 = vsel %vm2104, %v2106, %v2102
    %v2108 = vmul.f32 1.0, %v2107
    %v2109 = vtanh.pop %v2089
    %v2110 = vmul.f32 %v2108, %v1877
    %2112 = vrot.lane.b32.xlu0 %v2109, 64
    %v2113 = vpop.permute.xlu0 %2112
    %v2115 = vmul.f32 %v2108, %v2113
    %2117 = vrot.lane.b32.xlu0 %v2115, 32
    %v2118 = vpop.permute.xlu0 %2117
    %v2120 = vadd.f32 %v2110, %v2118
    %v2121 = vtanh.pop %v2120
    %2123 = vrot.lane.b32.xlu0 %v2121, 64
    %v2124 = vpop.permute.xlu0 %2123
    %v2126 = vmul.f32 %v2108, %v2124
    %v2127 = vld [vmem:[#allocation17] sm:$0xff]
    %v2128 = vld [vmem:[#allocation17 + $0x8] sm:$0xff]
    %v2129 = vld [vmem:[#allocation17 + $0x10] sm:$0xff]
    %v2130 = vld [vmem:[#allocation17 + $0x18] sm:$0xff]
    %2132 = vrot.lane.b32.xlu0 %v2126, 32
    %v2133 = vpop.permute.xlu0 %2132
    %v2134 = vsel %vm230, %v2133, 0
    %2136 = vmatpush.msra.mxu0 0.0
    %2137 = vmatpush.msra.mxu0 0.0
    %2138 = vmatpush.msra.mxu0 0.0
    %2139 = vmatpush.msra.mxu0 0.0
    %2140 = vmatpush.msra.mxu0 0.0
    %2141 = vmatpush.msra.mxu0 0.0
    %2142 = vmatpush.msra.mxu0 0.0
    %2143 = vmatpush.msra.mxu0 0.0
    %2144 = vmatpush.msra.mxu0 0.0
    %2145 = vmatpush.msra.mxu0 0.0
    %2146 = vmatpush.msra.mxu0 0.0
    %2147 = vmatpush.msra.mxu0 0.0
    %2148 = vmatpush.msra.mxu0 %v2130
    %2149 = vmatpush.msra.mxu0 %v2129
    %2150 = vmatpush.msra.mxu0 %v2128
    %2151 = vmatpush.msra.mxu0 %v2127
    %2152 = vmatmul.f32.gmra.mxu0 %v2134
    %v2153 = vpop.f32.mrf.mxu0
    %v2154 = vadd.f32 %v1124, %v2153
    %2155 = vdwg.mxu0
    %2156 = vst [vmem:[#allocation19 + $0x8] sm:$0x3] %v2154
    %v2157 = vsel %vm1152, %v2154, -inf
    %2158 = vmax.xlane.f32.xlu0 %v2157
    %v2159 = vpop.xlane.xlu0 %2158
    %vm2160 = vcmp.eq.f32.partialorder %v2154, %v2159
    %v2161 = vsel %vm2160, %v184, 128
    %v2162 = vsel %vm1152, %v2161, 2147483647
    %v2163 = vand.u32 %v2162, 65535
    %v2164 = vshra.s32 %v2162, 16
    %v2165 = vcvt.s32.f32 %v2163
    %v2166 = vcvt.s32.f32 %v2164
    %2167 = vmin.xlane.f32.xlu0 %v2166
    %v2168 = vpop.xlane.xlu0 %2167
    %vm2169 = vcmp.eq.f32.partialorder %v2166, %v2168
    %v2170 = vsel %vm2169, %v2165, inf
    %2171 = vmin.xlane.f32.xlu0 %v2170
    %v2172 = vpop.xlane.xlu0 %2171
    %v2173 = vcvt.f32.s32 %v2172
    %v2174 = vcvt.f32.s32 %v2168
    %v2175 = vshll.u32 %v2174, 16
    %v2176 = vadd.s32 %v2175, %v2173
    %v2177 = vld [vmem:[#allocation3] sm:$0xff]
    %v2178 = vld [vmem:[#allocation3 + $0x8] sm:$0xff]
    %v2179 = vld [vmem:[#allocation4] sm:$0xff]
    %v2180 = vld [vmem:[#allocation4 + $0x8] sm:$0xff]
    %2181 = vmatpush.msra.mxu0 0.0
    %2182 = vmatpush.msra.mxu0 0.0
    %2183 = vmatpush.msra.mxu0 0.0
    %2184 = vmatpush.msra.mxu0 0.0
    %2185 = vmatpush.msra.mxu0 0.0
    %2186 = vmatpush.msra.mxu0 0.0
    %2187 = vmatpush.msra.mxu0 0.0
    %2188 = vmatpush.msra.mxu0 0.0
    %2189 = vmatpush.msra.mxu0 0.0
    %2190 = vmatpush.msra.mxu0 0.0
    %2191 = vmatpush.msra.mxu0 0.0
    %2192 = vmatpush.msra.mxu0 0.0
    %2193 = vmatpush.msra.mxu0 %v182
    %2194 = vmatpush.msra.mxu0 %v181
    %2195 = vmatpush.msra.mxu0 %v180
    %2196 = vmatpush.msra.mxu0 %v179
    %2197 = vmatmul.f32.gmra.mxu0 %v2134
    %v2198 = vpop.f32.mrf.mxu0
    %v2199 = vadd.f32 0.0, %v2198
    %2200 = vdwg.mxu0
    %v2202 = vrot.slane %v2199, 1
    %v2203 = vperm.slane %v2199, 0
    %v2204 = vperm.slane %v2202, 0
    %v2207 = vadd.f32 %v2179, %v2203
    %v2208 = vadd.f32 %v2180, %v2204
    %v2209 = vtanh.pop %v2207
    %v2210 = vtanh.pop %v2208
    %v2211 = vmul.f32 %v2209, %v938
    %v2212 = vmul.f32 %v2210, %v938
    %v2213 = vsel %vm230, %v2211, 0.0
    %2214 = vadd.xlane.f32.xlu0 %v2213
    %v2215 = vpop.xlane.xlu0 %2214
    %v2216 = vsel %vm230, %v2212, 0.0
    %2217 = vadd.xlane.f32.xlu0 %v2216
    %v2218 = vpop.xlane.xlu0 %2217
    %v2219 = vmul.f32 %v2215, 1.442695
    %v2220 = vpow.pop %v2219
    %v2221 = vmul.f32 %v2218, 1.442695
    %v2222 = vpow.pop %v2221
    %v2223 = vrot.slane %v2220, 4
    %v2224 = vadd.f32 %v2220, %v2223
    %v2225 = vrot.slane %v2224, 2
    %v2226 = vadd.f32 %v2224, %v2225
    %v2227 = vrot.slane %v2226, 1
    %v2228 = vadd.f32 %v2226, %v2227
    %v2229 = vrot.slane %v2222, 4
    %v2230 = vadd.f32 %v2222, %v2229
    %v2231 = vrot.slane %v2230, 2
    %v2232 = vadd.f32 %v2230, %v2231
    %v2233 = vrot.slane %v2232, 1
    %v2234 = vadd.f32 %v2232, %v2233
    %v2235 = vrcp.pop %v2228
    %v2236 = vrcp.pop %v2234
    %v2237 = vmul.f32 %v2220, %v2235
    %v2238 = vmul.f32 %v2222, %v2236
    %v2239 = vmul.f32 %v2237, %v2177
    %v2240 = vmul.f32 %v2238, %v2178
    %v2241 = vsel %vm230, %v2239, 0.0
    %v2242 = vrot.slane %v2241, 4
    %v2243 = vadd.f32 %v2241, %v2242
    %v2244 = vrot.slane %v2243, 2
    %v2245 = vadd.f32 %v2243, %v2244
    %v2246 = vrot.slane %v2245, 1
    %v2247 = vadd.f32 %v2245, %v2246
    %v2248 = vsel %vm230, %v2240, 0.0
    %v2249 = vrot.slane %v2248, 4
    %v2250 = vadd.f32 %v2248, %v2249
    %v2251 = vrot.slane %v2250, 2
    %v2252 = vadd.f32 %v2250, %v2251
    %v2253 = vrot.slane %v2252, 1
    %v2254 = vadd.f32 %v2252, %v2253
    %vm2255 = vcmp.eq.s32.totalorder %v184, %v2176
    %v2256 = vsel %vm2255, 1, 0
    %v2257 = vcvt.s32.f32 %v2256
    %v2258 = vld [vmem:[#allocation13] sm:$0xff]
    %v2259 = vld [vmem:[#allocation13 + $0x8] sm:$0xff]
    %v2260 = vld [vmem:[#allocation13 + $0x10] sm:$0xff]
    %v2261 = vld [vmem:[#allocation13 + $0x18] sm:$0xff]
    %v2262 = vld [vmem:[#allocation14] sm:$0xff]
    %v2263 = vld [vmem:[#allocation14 + $0x8] sm:$0xff]
    %v2264 = vld [vmem:[#allocation14 + $0x10] sm:$0xff]
    %v2265 = vld [vmem:[#allocation14 + $0x18] sm:$0xff]
    %2266 = vmatpush.msra.mxu0 0.0
    %2267 = vmatpush.msra.mxu0 0.0
    %2268 = vmatpush.msra.mxu0 0.0
    %2269 = vmatpush.msra.mxu0 0.0
    %2270 = vmatpush.msra.mxu0 0.0
    %2271 = vmatpush.msra.mxu0 0.0
    %2272 = vmatpush.msra.mxu0 0.0
    %2273 = vmatpush.msra.mxu0 0.0
    %2274 = vmatpush.msra.mxu0 0.0
    %2275 = vmatpush.msra.mxu0 0.0
    %2276 = vmatpush.msra.mxu0 0.0
    %2277 = vmatpush.msra.mxu0 0.0
    %2278 = vmatpush.msra.mxu0 %v2265
    %2279 = vmatpush.msra.mxu0 %v2264
    %2280 = vmatpush.msra.mxu0 %v2263
    %2281 = vmatpush.msra.mxu0 %v2262
    %2282 = vmatmul.f32.gmra.mxu0 %v2134
    %v2283 = vpop.f32.mrf.mxu0
    %v2284 = vadd.f32 0.0, %v2283
    %2285 = vdwg.mxu0
    %v2288 = vsel %vm1017, %v2254, %v2247
    %v2289 = vsel %vm230, %v2288, 0
    %2291 = vmatpush.msra.mxu0 0.0
    %2292 = vmatpush.msra.mxu0 0.0
    %2293 = vmatpush.msra.mxu0 0.0
    %2294 = vmatpush.msra.mxu0 0.0
    %2295 = vmatpush.msra.mxu0 0.0
    %2296 = vmatpush.msra.mxu0 0.0
    %2297 = vmatpush.msra.mxu0 0.0
    %2298 = vmatpush.msra.mxu0 0.0
    %2299 = vmatpush.msra.mxu0 0.0
    %2300 = vmatpush.msra.mxu0 0.0
    %2301 = vmatpush.msra.mxu0 0.0
    %2302 = vmatpush.msra.mxu0 0.0
    %2303 = vmatpush.msra.mxu0 %v2261
    %2304 = vmatpush.msra.mxu0 %v2260
    %2305 = vmatpush.msra.mxu0 %v2259
    %2306 = vmatpush.msra.mxu0 %v2258
    %2307 = vmatmul.f32.gmra.mxu0 %v2289
    %v2308 = vpop.f32.mrf.mxu0
    %v2309 = vadd.f32 %v2284, %v2308
    %2310 = vdwg.mxu0
    %v2311 = vld [vmem:[#allocation16] sm:$0xff]
    %v2312 = vld [vmem:[#allocation16 + $0x8] sm:$0xff]
    %v2313 = vld [vmem:[#allocation16 + $0x10] sm:$0xff]
    %v2314 = vld [vmem:[#allocation16 + $0x18] sm:$0xff]
    %v2315 = vld [vmem:[#allocation16 + $0x20] sm:$0xff]
    %v2316 = vld [vmem:[#allocation16 + $0x28] sm:$0xff]
    %v2317 = vld [vmem:[#allocation16 + $0x30] sm:$0xff]
    %v2318 = vld [vmem:[#allocation16 + $0x38] sm:$0xff]
    %v2319 = vld [vmem:[#allocation16 + $0x40] sm:$0xff]
    %v2320 = vld [vmem:[#allocation16 + $0x48] sm:$0xff]
    %v2321 = vld [vmem:[#allocation16 + $0x50] sm:$0xff]
    %v2322 = vld [vmem:[#allocation16 + $0x58] sm:$0xff]
    %v2323 = vld [vmem:[#allocation16 + $0x60] sm:$0xff]
    %v2324 = vld [vmem:[#allocation16 + $0x68] sm:$0xff]
    %v2325 = vld [vmem:[#allocation16 + $0x70] sm:$0xff]
    %v2326 = vld [vmem:[#allocation16 + $0x78] sm:$0xff]
    %2327 = vmatpush.msra.mxu0 %v2326
    %2328 = vmatpush.msra.mxu0 %v2325
    %2329 = vmatpush.msra.mxu0 %v2324
    %2330 = vmatpush.msra.mxu0 %v2323
    %2331 = vmatpush.msra.mxu0 %v2322
    %2332 = vmatpush.msra.mxu0 %v2321
    %2333 = vmatpush.msra.mxu0 %v2320
    %2334 = vmatpush.msra.mxu0 %v2319
    %2335 = vmatpush.msra.mxu0 %v2318
    %2336 = vmatpush.msra.mxu0 %v2317
    %2337 = vmatpush.msra.mxu0 %v2316
    %2338 = vmatpush.msra.mxu0 %v2315
    %2339 = vmatpush.msra.mxu0 %v2314
    %2340 = vmatpush.msra.mxu0 %v2313
    %2341 = vmatpush.msra.mxu0 %v2312
    %2342 = vmatpush.msra.mxu0 %v2311
    %2343 = vmatmul.f32.gmra.mxu0 %v2257
    %v2344 = vpop.f32.mrf.mxu0
    %v2345 = vadd.f32 0.0, %v2344
    %2346 = vdwg.mxu0
    %v2347 = vadd.f32 %v2309, %v2345
    %v2348 = vadd.f32 %v2347, %v1079
    %v2349 = vxor.u32 %v2348, 2147483648
    %v2350 = vmul.f32 %v2349, 1.442695
    %v2351 = vpow.pop %v2350
    %v2352 = vadd.f32 %v2351, 1.0
    %v2353 = vrcp.pop %v2352
    %v2354 = vmul.f32 %v2352, %v2353
    %v2355 = vsub.f32 1.0, %v2354
    %v2356 = vmul.f32 %v2353, %v2355
    %v2357 = vadd.f32 %v2353, %v2356
    %vm2358 = vweird.f32 %v2352
    %vm2359 = vweird.f32 %v2353
    %vm2360 = vmor %vm2358, %vm2359
    %v2361 = vsel %vm2360, %v2353, %v2357
    %v2362 = vand.u32 2147483647, %v2352
    %vm2363 = vcmp.eq.f32.partialorder %v2362, 8.507059e+37
    %v2364 = vand.u32 %v2352, 2147483648
    %v2365 = vor.u32 1.1754944e-38, %v2364
    %v2366 = vsel %vm2363, %v2365, %v2361
    %v2367 = vmul.f32 1.0, %v2366
    %v2368 = vtanh.pop %v2348
    %v2369 = vmul.f32 %v2367, %v2120
    %2371 = vrot.lane.b32.xlu0 %v2368, 64
    %v2372 = vpop.permute.xlu0 %2371
    %v2374 = vmul.f32 %v2367, %v2372
    %2376 = vrot.lane.b32.xlu0 %v2374, 32
    %v2377 = vpop.permute.xlu0 %2376
    %v2379 = vadd.f32 %v2369, %v2377
    %v2380 = vtanh.pop %v2379
    %2382 = vrot.lane.b32.xlu0 %v2380, 64
    %v2383 = vpop.permute.xlu0 %2382
    %v2385 = vmul.f32 %v2367, %v2383
    %v2386 = vld [vmem:[#allocation17] sm:$0xff]
    %v2387 = vld [vmem:[#allocation17 + $0x8] sm:$0xff]
    %v2388 = vld [vmem:[#allocation17 + $0x10] sm:$0xff]
    %v2389 = vld [vmem:[#allocation17 + $0x18] sm:$0xff]
    %2391 = vrot.lane.b32.xlu0 %v2385, 32
    %v2392 = vpop.permute.xlu0 %2391
    %v2393 = vsel %vm230, %v2392, 0
    %2395 = vmatpush.msra.mxu0 0.0
    %2396 = vmatpush.msra.mxu0 0.0
    %2397 = vmatpush.msra.mxu0 0.0
    %2398 = vmatpush.msra.mxu0 0.0
    %2399 = vmatpush.msra.mxu0 0.0
    %2400 = vmatpush.msra.mxu0 0.0
    %2401 = vmatpush.msra.mxu0 0.0
    %2402 = vmatpush.msra.mxu0 0.0
    %2403 = vmatpush.msra.mxu0 0.0
    %2404 = vmatpush.msra.mxu0 0.0
    %2405 = vmatpush.msra.mxu0 0.0
    %2406 = vmatpush.msra.mxu0 0.0
    %2407 = vmatpush.msra.mxu0 %v2389
    %2408 = vmatpush.msra.mxu0 %v2388
    %2409 = vmatpush.msra.mxu0 %v2387
    %2410 = vmatpush.msra.mxu0 %v2386
    %2411 = vmatmul.f32.gmra.mxu0 %v2393
    %v2412 = vpop.f32.mrf.mxu0
    %v2413 = vadd.f32 %v1124, %v2412
    %2414 = vdwg.mxu0
    %2415 = vst [vmem:[#allocation19 + $0xa] sm:$0x3] %v2413
    %v2416 = vld [vmem:[%s1 + $0xa] sm:$0x3]
    %v2417 = vld [vmem:[#allocation3] sm:$0xff]
    %v2418 = vld [vmem:[#allocation3 + $0x8] sm:$0xff]
    %v2419 = vld [vmem:[#allocation4] sm:$0xff]
    %v2420 = vld [vmem:[#allocation4 + $0x8] sm:$0xff]
    %2421 = vmatpush.msra.mxu0 0.0
    %2422 = vmatpush.msra.mxu0 0.0
    %2423 = vmatpush.msra.mxu0 0.0
    %2424 = vmatpush.msra.mxu0 0.0
    %2425 = vmatpush.msra.mxu0 0.0
    %2426 = vmatpush.msra.mxu0 0.0
    %2427 = vmatpush.msra.mxu0 0.0
    %2428 = vmatpush.msra.mxu0 0.0
    %2429 = vmatpush.msra.mxu0 0.0
    %2430 = vmatpush.msra.mxu0 0.0
    %2431 = vmatpush.msra.mxu0 0.0
    %2432 = vmatpush.msra.mxu0 0.0
    %2433 = vmatpush.msra.mxu0 %v182
    %2434 = vmatpush.msra.mxu0 %v181
    %2435 = vmatpush.msra.mxu0 %v180
    %2436 = vmatpush.msra.mxu0 %v179
    %2437 = vmatmul.f32.gmra.mxu0 %v2393
    %v2438 = vpop.f32.mrf.mxu0
    %v2439 = vadd.f32 0.0, %v2438
    %2440 = vdwg.mxu0
    %v2442 = vrot.slane %v2439, 1
    %v2443 = vperm.slane %v2439, 0
    %v2444 = vperm.slane %v2442, 0
    %v2447 = vadd.f32 %v2419, %v2443
    %v2448 = vadd.f32 %v2420, %v2444
    %v2449 = vtanh.pop %v2447
    %v2450 = vtanh.pop %v2448
    %v2451 = vmul.f32 %v2449, %v938
    %v2452 = vmul.f32 %v2450, %v938
    %v2453 = vsel %vm230, %v2451, 0.0
    %2454 = vadd.xlane.f32.xlu0 %v2453
    %v2455 = vpop.xlane.xlu0 %2454
    %v2456 = vsel %vm230, %v2452, 0.0
    %2457 = vadd.xlane.f32.xlu0 %v2456
    %v2458 = vpop.xlane.xlu0 %2457
    %v2459 = vmul.f32 %v2455, 1.442695
    %v2460 = vpow.pop %v2459
    %v2461 = vmul.f32 %v2458, 1.442695
    %v2462 = vpow.pop %v2461
    %v2463 = vrot.slane %v2460, 4
    %v2464 = vadd.f32 %v2460, %v2463
    %v2465 = vrot.slane %v2464, 2
    %v2466 = vadd.f32 %v2464, %v2465
    %v2467 = vrot.slane %v2466, 1
    %v2468 = vadd.f32 %v2466, %v2467
    %v2469 = vrot.slane %v2462, 4
    %v2470 = vadd.f32 %v2462, %v2469
    %v2471 = vrot.slane %v2470, 2
    %v2472 = vadd.f32 %v2470, %v2471
    %v2473 = vrot.slane %v2472, 1
    %v2474 = vadd.f32 %v2472, %v2473
    %v2475 = vrcp.pop %v2468
    %v2476 = vrcp.pop %v2474
    %v2477 = vmul.f32 %v2460, %v2475
    %v2478 = vmul.f32 %v2462, %v2476
    %v2479 = vmul.f32 %v2477, %v2417
    %v2480 = vmul.f32 %v2478, %v2418
    %v2481 = vsel %vm230, %v2479, 0.0
    %v2482 = vrot.slane %v2481, 4
    %v2483 = vadd.f32 %v2481, %v2482
    %v2484 = vrot.slane %v2483, 2
    %v2485 = vadd.f32 %v2483, %v2484
    %v2486 = vrot.slane %v2485, 1
    %v2487 = vadd.f32 %v2485, %v2486
    %v2488 = vsel %vm230, %v2480, 0.0
    %v2489 = vrot.slane %v2488, 4
    %v2490 = vadd.f32 %v2488, %v2489
    %v2491 = vrot.slane %v2490, 2
    %v2492 = vadd.f32 %v2490, %v2491
    %v2493 = vrot.slane %v2492, 1
    %v2494 = vadd.f32 %v2492, %v2493
    %2495 = vset.pattern.permute.xlu0 0
    %2496 = vperm.xlu0 %2495, %v2416
    %v2497 = vpop.permute.xlu0 %2496
    %vm2498 = vcmp.eq.s32.totalorder %v184, %v2497
    %v2499 = vsel %vm2498, 1, 0
    %v2500 = vcvt.s32.f32 %v2499
    %v2501 = vld [vmem:[#allocation13] sm:$0xff]
    %v2502 = vld [vmem:[#allocation13 + $0x8] sm:$0xff]
    %v2503 = vld [vmem:[#allocation13 + $0x10] sm:$0xff]
    %v2504 = vld [vmem:[#allocation13 + $0x18] sm:$0xff]
    %v2505 = vld [vmem:[#allocation14] sm:$0xff]
    %v2506 = vld [vmem:[#allocation14 + $0x8] sm:$0xff]
    %v2507 = vld [vmem:[#allocation14 + $0x10] sm:$0xff]
    %v2508 = vld [vmem:[#allocation14 + $0x18] sm:$0xff]
    %2509 = vmatpush.msra.mxu0 0.0
    %2510 = vmatpush.msra.mxu0 0.0
    %2511 = vmatpush.msra.mxu0 0.0
    %2512 = vmatpush.msra.mxu0 0.0
    %2513 = vmatpush.msra.mxu0 0.0
    %2514 = vmatpush.msra.mxu0 0.0
    %2515 = vmatpush.msra.mxu0 0.0
    %2516 = vmatpush.msra.mxu0 0.0
    %2517 = vmatpush.msra.mxu0 0.0
    %2518 = vmatpush.msra.mxu0 0.0
    %2519 = vmatpush.msra.mxu0 0.0
    %2520 = vmatpush.msra.mxu0 0.0
    %2521 = vmatpush.msra.mxu0 %v2508
    %2522 = vmatpush.msra.mxu0 %v2507
    %2523 = vmatpush.msra.mxu0 %v2506
    %2524 = vmatpush.msra.mxu0 %v2505
    %2525 = vmatmul.f32.gmra.mxu0 %v2393
    %v2526 = vpop.f32.mrf.mxu0
    %v2527 = vadd.f32 0.0, %v2526
    %2528 = vdwg.mxu0
    %v2531 = vsel %vm1017, %v2494, %v2487
    %v2532 = vsel %vm230, %v2531, 0
    %2534 = vmatpush.msra.mxu0 0.0
    %2535 = vmatpush.msra.mxu0 0.0
    %2536 = vmatpush.msra.mxu0 0.0
    %2537 = vmatpush.msra.mxu0 0.0
    %2538 = vmatpush.msra.mxu0 0.0
    %2539 = vmatpush.msra.mxu0 0.0
    %2540 = vmatpush.msra.mxu0 0.0
    %2541 = vmatpush.msra.mxu0 0.0
    %2542 = vmatpush.msra.mxu0 0.0
    %2543 = vmatpush.msra.mxu0 0.0
    %2544 = vmatpush.msra.mxu0 0.0
    %2545 = vmatpush.msra.mxu0 0.0
    %2546 = vmatpush.msra.mxu0 %v2504
    %2547 = vmatpush.msra.mxu0 %v2503
    %2548 = vmatpush.msra.mxu0 %v2502
    %2549 = vmatpush.msra.mxu0 %v2501
    %2550 = vmatmul.f32.gmra.mxu0 %v2532
    %v2551 = vpop.f32.mrf.mxu0
    %v2552 = vadd.f32 %v2527, %v2551
    %2553 = vdwg.mxu0
    %v2554 = vld [vmem:[#allocation16] sm:$0xff]
    %v2555 = vld [vmem:[#allocation16 + $0x8] sm:$0xff]
    %v2556 = vld [vmem:[#allocation16 + $0x10] sm:$0xff]
    %v2557 = vld [vmem:[#allocation16 + $0x18] sm:$0xff]
    %v2558 = vld [vmem:[#allocation16 + $0x20] sm:$0xff]
    %v2559 = vld [vmem:[#allocation16 + $0x28] sm:$0xff]
    %v2560 = vld [vmem:[#allocation16 + $0x30] sm:$0xff]
    %v2561 = vld [vmem:[#allocation16 + $0x38] sm:$0xff]
    %v2562 = vld [vmem:[#allocation16 + $0x40] sm:$0xff]
    %v2563 = vld [vmem:[#allocation16 + $0x48] sm:$0xff]
    %v2564 = vld [vmem:[#allocation16 + $0x50] sm:$0xff]
    %v2565 = vld [vmem:[#allocation16 + $0x58] sm:$0xff]
    %v2566 = vld [vmem:[#allocation16 + $0x60] sm:$0xff]
    %v2567 = vld [vmem:[#allocation16 + $0x68] sm:$0xff]
    %v2568 = vld [vmem:[#allocation16 + $0x70] sm:$0xff]
    %v2569 = vld [vmem:[#allocation16 + $0x78] sm:$0xff]
    %2570 = vmatpush.msra.mxu0 %v2569
    %2571 = vmatpush.msra.mxu0 %v2568
    %2572 = vmatpush.msra.mxu0 %v2567
    %2573 = vmatpush.msra.mxu0 %v2566
    %2574 = vmatpush.msra.mxu0 %v2565
    %2575 = vmatpush.msra.mxu0 %v2564
    %2576 = vmatpush.msra.mxu0 %v2563
    %2577 = vmatpush.msra.mxu0 %v2562
    %2578 = vmatpush.msra.mxu0 %v2561
    %2579 = vmatpush.msra.mxu0 %v2560
    %2580 = vmatpush.msra.mxu0 %v2559
    %2581 = vmatpush.msra.mxu0 %v2558
    %2582 = vmatpush.msra.mxu0 %v2557
    %2583 = vmatpush.msra.mxu0 %v2556
    %2584 = vmatpush.msra.mxu0 %v2555
    %2585 = vmatpush.msra.mxu0 %v2554
    %2586 = vmatmul.f32.gmra.mxu0 %v2500
    %v2587 = vpop.f32.mrf.mxu0
    %v2588 = vadd.f32 0.0, %v2587
    %2589 = vdwg.mxu0
    %v2590 = vadd.f32 %v2552, %v2588
    %v2591 = vadd.f32 %v2590, %v1079
    %v2592 = vxor.u32 %v2591, 2147483648
    %v2593 = vmul.f32 %v2592, 1.442695
    %v2594 = vpow.pop %v2593
    %v2595 = vadd.f32 %v2594, 1.0
    %v2596 = vrcp.pop %v2595
    %v2597 = vmul.f32 %v2595, %v2596
    %v2598 = vsub.f32 1.0, %v2597
    %v2599 = vmul.f32 %v2596, %v2598
    %v2600 = vadd.f32 %v2596, %v2599
    %vm2601 = vweird.f32 %v2595
    %vm2602 = vweird.f32 %v2596
    %vm2603 = vmor %vm2601, %vm2602
    %v2604 = vsel %vm2603, %v2596, %v2600
    %v2605 = vand.u32 2147483647, %v2595
    %vm2606 = vcmp.eq.f32.partialorder %v2605, 8.507059e+37
    %v2607 = vand.u32 %v2595, 2147483648
    %v2608 = vor.u32 1.1754944e-38, %v2607
    %v2609 = vsel %vm2606, %v2608, %v2604
    %v2610 = vmul.f32 1.0, %v2609
    %v2611 = vtanh.pop %v2591
    %v2612 = vmul.f32 %v2610, %v2379
    %2614 = vrot.lane.b32.xlu0 %v2611, 64
    %v2615 = vpop.permute.xlu0 %2614
    %v2617 = vmul.f32 %v2610, %v2615
    %2619 = vrot.lane.b32.xlu0 %v2617, 32
    %v2620 = vpop.permute.xlu0 %2619
    %v2622 = vadd.f32 %v2612, %v2620
    %v2623 = vtanh.pop %v2622
    %2625 = vrot.lane.b32.xlu0 %v2623, 64
    %v2626 = vpop.permute.xlu0 %2625
    %v2628 = vmul.f32 %v2610, %v2626
    %v2629 = vld [vmem:[#allocation17] sm:$0xff]
    %v2630 = vld [vmem:[#allocation17 + $0x8] sm:$0xff]
    %v2631 = vld [vmem:[#allocation17 + $0x10] sm:$0xff]
    %v2632 = vld [vmem:[#allocation17 + $0x18] sm:$0xff]
    %2634 = vrot.lane.b32.xlu0 %v2628, 32
    %v2635 = vpop.permute.xlu0 %2634
    %v2636 = vsel %vm230, %v2635, 0
    %2638 = vmatpush.msra.mxu0 0.0
    %2639 = vmatpush.msra.mxu0 0.0
    %2640 = vmatpush.msra.mxu0 0.0
    %2641 = vmatpush.msra.mxu0 0.0
    %2642 = vmatpush.msra.mxu0 0.0
    %2643 = vmatpush.msra.mxu0 0.0
    %2644 = vmatpush.msra.mxu0 0.0
    %2645 = vmatpush.msra.mxu0 0.0
    %2646 = vmatpush.msra.mxu0 0.0
    %2647 = vmatpush.msra.mxu0 0.0
    %2648 = vmatpush.msra.mxu0 0.0
    %2649 = vmatpush.msra.mxu0 0.0
    %2650 = vmatpush.msra.mxu0 %v2632
    %2651 = vmatpush.msra.mxu0 %v2631
    %2652 = vmatpush.msra.mxu0 %v2630
    %2653 = vmatpush.msra.mxu0 %v2629
    %2654 = vmatmul.f32.gmra.mxu0 %v2636
    %v2655 = vpop.f32.mrf.mxu0
    %v2656 = vadd.f32 %v1124, %v2655
    %2657 = vdwg.mxu0
    %2658 = vst [vmem:[#allocation19 + $0xc] sm:$0x3] %v2656
    %v2659 = vsel %vm1152, %v2656, -inf
    %2660 = vmax.xlane.f32.xlu0 %v2659
    %v2661 = vpop.xlane.xlu0 %2660
    %vm2662 = vcmp.eq.f32.partialorder %v2656, %v2661
    %v2663 = vsel %vm2662, %v184, 128
    %v2664 = vsel %vm1152, %v2663, 2147483647
    %v2665 = vand.u32 %v2664, 65535
    %v2666 = vshra.s32 %v2664, 16
    %v2667 = vcvt.s32.f32 %v2665
    %v2668 = vcvt.s32.f32 %v2666
    %2669 = vmin.xlane.f32.xlu0 %v2668
    %v2670 = vpop.xlane.xlu0 %2669
    %vm2671 = vcmp.eq.f32.partialorder %v2668, %v2670
    %v2672 = vsel %vm2671, %v2667, inf
    %2673 = vmin.xlane.f32.xlu0 %v2672
    %v2674 = vpop.xlane.xlu0 %2673
    %v2675 = vcvt.f32.s32 %v2674
    %v2676 = vcvt.f32.s32 %v2670
    %v2677 = vshll.u32 %v2676, 16
    %v2678 = vadd.s32 %v2677, %v2675
    %v2679 = vld [vmem:[#allocation3] sm:$0xff]
    %v2680 = vld [vmem:[#allocation3 + $0x8] sm:$0xff]
    %v2681 = vld [vmem:[#allocation4] sm:$0xff]
    %v2682 = vld [vmem:[#allocation4 + $0x8] sm:$0xff]
    %2683 = vmatpush.msra.mxu0 0.0
    %2684 = vmatpush.msra.mxu0 0.0
    %2685 = vmatpush.msra.mxu0 0.0
    %2686 = vmatpush.msra.mxu0 0.0
    %2687 = vmatpush.msra.mxu0 0.0
    %2688 = vmatpush.msra.mxu0 0.0
    %2689 = vmatpush.msra.mxu0 0.0
    %2690 = vmatpush.msra.mxu0 0.0
    %2691 = vmatpush.msra.mxu0 0.0
    %2692 = vmatpush.msra.mxu0 0.0
    %2693 = vmatpush.msra.mxu0 0.0
    %2694 = vmatpush.msra.mxu0 0.0
    %2695 = vmatpush.msra.mxu0 %v182
    %2696 = vmatpush.msra.mxu0 %v181
    %2697 = vmatpush.msra.mxu0 %v180
    %2698 = vmatpush.msra.mxu0 %v179
    %2699 = vmatmul.f32.gmra.mxu0 %v2636
    %v2700 = vpop.f32.mrf.mxu0
    %v2701 = vadd.f32 0.0, %v2700
    %2702 = vdwg.mxu0
    %v2704 = vrot.slane %v2701, 1
    %v2705 = vperm.slane %v2701, 0
    %v2706 = vperm.slane %v2704, 0
    %v2709 = vadd.f32 %v2681, %v2705
    %v2710 = vadd.f32 %v2682, %v2706
    %v2711 = vtanh.pop %v2709
    %v2712 = vtanh.pop %v2710
    %v2713 = vmul.f32 %v2711, %v938
    %v2714 = vmul.f32 %v2712, %v938
    %v2715 = vsel %vm230, %v2713, 0.0
    %2716 = vadd.xlane.f32.xlu0 %v2715
    %v2717 = vpop.xlane.xlu0 %2716
    %v2718 = vsel %vm230, %v2714, 0.0
    %2719 = vadd.xlane.f32.xlu0 %v2718
    %v2720 = vpop.xlane.xlu0 %2719
    %v2721 = vmul.f32 %v2717, 1.442695
    %v2722 = vpow.pop %v2721
    %v2723 = vmul.f32 %v2720, 1.442695
    %v2724 = vpow.pop %v2723
    %v2725 = vrot.slane %v2722, 4
    %v2726 = vadd.f32 %v2722, %v2725
    %v2727 = vrot.slane %v2726, 2
    %v2728 = vadd.f32 %v2726, %v2727
    %v2729 = vrot.slane %v2728, 1
    %v2730 = vadd.f32 %v2728, %v2729
    %v2731 = vrot.slane %v2724, 4
    %v2732 = vadd.f32 %v2724, %v2731
    %v2733 = vrot.slane %v2732, 2
    %v2734 = vadd.f32 %v2732, %v2733
    %v2735 = vrot.slane %v2734, 1
    %v2736 = vadd.f32 %v2734, %v2735
    %v2737 = vrcp.pop %v2730
    %v2738 = vrcp.pop %v2736
    %v2739 = vmul.f32 %v2722, %v2737
    %v2740 = vmul.f32 %v2724, %v2738
    %v2741 = vmul.f32 %v2739, %v2679
    %v2742 = vmul.f32 %v2740, %v2680
    %v2743 = vsel %vm230, %v2741, 0.0
    %v2744 = vrot.slane %v2743, 4
    %v2745 = vadd.f32 %v2743, %v2744
    %v2746 = vrot.slane %v2745, 2
    %v2747 = vadd.f32 %v2745, %v2746
    %v2748 = vrot.slane %v2747, 1
    %v2749 = vadd.f32 %v2747, %v2748
    %v2750 = vsel %vm230, %v2742, 0.0
    %v2751 = vrot.slane %v2750, 4
    %v2752 = vadd.f32 %v2750, %v2751
    %v2753 = vrot.slane %v2752, 2
    %v2754 = vadd.f32 %v2752, %v2753
    %v2755 = vrot.slane %v2754, 1
    %v2756 = vadd.f32 %v2754, %v2755
    %vm2757 = vcmp.eq.s32.totalorder %v184, %v2678
    %v2758 = vsel %vm2757, 1, 0
    %v2759 = vcvt.s32.f32 %v2758
    %v2760 = vld [vmem:[#allocation13] sm:$0xff]
    %v2761 = vld [vmem:[#allocation13 + $0x8] sm:$0xff]
    %v2762 = vld [vmem:[#allocation13 + $0x10] sm:$0xff]
    %v2763 = vld [vmem:[#allocation13 + $0x18] sm:$0xff]
    %v2764 = vld [vmem:[#allocation14] sm:$0xff]
    %v2765 = vld [vmem:[#allocation14 + $0x8] sm:$0xff]
    %v2766 = vld [vmem:[#allocation14 + $0x10] sm:$0xff]
    %v2767 = vld [vmem:[#allocation14 + $0x18] sm:$0xff]
    %2768 = vmatpush.msra.mxu0 0.0
    %2769 = vmatpush.msra.mxu0 0.0
    %2770 = vmatpush.msra.mxu0 0.0
    %2771 = vmatpush.msra.mxu0 0.0
    %2772 = vmatpush.msra.mxu0 0.0
    %2773 = vmatpush.msra.mxu0 0.0
    %2774 = vmatpush.msra.mxu0 0.0
    %2775 = vmatpush.msra.mxu0 0.0
    %2776 = vmatpush.msra.mxu0 0.0
    %2777 = vmatpush.msra.mxu0 0.0
    %2778 = vmatpush.msra.mxu0 0.0
    %2779 = vmatpush.msra.mxu0 0.0
    %2780 = vmatpush.msra.mxu0 %v2767
    %2781 = vmatpush.msra.mxu0 %v2766
    %2782 = vmatpush.msra.mxu0 %v2765
    %2783 = vmatpush.msra.mxu0 %v2764
    %2784 = vmatmul.f32.gmra.mxu0 %v2636
    %v2785 = vpop.f32.mrf.mxu0
    %v2786 = vadd.f32 0.0, %v2785
    %2787 = vdwg.mxu0
    %v2790 = vsel %vm1017, %v2756, %v2749
    %v2791 = vsel %vm230, %v2790, 0
    %2793 = vmatpush.msra.mxu0 0.0
    %2794 = vmatpush.msra.mxu0 0.0
    %2795 = vmatpush.msra.mxu0 0.0
    %2796 = vmatpush.msra.mxu0 0.0
    %2797 = vmatpush.msra.mxu0 0.0
    %2798 = vmatpush.msra.mxu0 0.0
    %2799 = vmatpush.msra.mxu0 0.0
    %2800 = vmatpush.msra.mxu0 0.0
    %2801 = vmatpush.msra.mxu0 0.0
    %2802 = vmatpush.msra.mxu0 0.0
    %2803 = vmatpush.msra.mxu0 0.0
    %2804 = vmatpush.msra.mxu0 0.0
    %2805 = vmatpush.msra.mxu0 %v2763
    %2806 = vmatpush.msra.mxu0 %v2762
    %2807 = vmatpush.msra.mxu0 %v2761
    %2808 = vmatpush.msra.mxu0 %v2760
    %2809 = vmatmul.f32.gmra.mxu0 %v2791
    %v2810 = vpop.f32.mrf.mxu0
    %v2811 = vadd.f32 %v2786, %v2810
    %2812 = vdwg.mxu0
    %v2813 = vld [vmem:[#allocation16] sm:$0xff]
    %v2814 = vld [vmem:[#allocation16 + $0x8] sm:$0xff]
    %v2815 = vld [vmem:[#allocation16 + $0x10] sm:$0xff]
    %v2816 = vld [vmem:[#allocation16 + $0x18] sm:$0xff]
    %v2817 = vld [vmem:[#allocation16 + $0x20] sm:$0xff]
    %v2818 = vld [vmem:[#allocation16 + $0x28] sm:$0xff]
    %v2819 = vld [vmem:[#allocation16 + $0x30] sm:$0xff]
    %v2820 = vld [vmem:[#allocation16 + $0x38] sm:$0xff]
    %v2821 = vld [vmem:[#allocation16 + $0x40] sm:$0xff]
    %v2822 = vld [vmem:[#allocation16 + $0x48] sm:$0xff]
    %v2823 = vld [vmem:[#allocation16 + $0x50] sm:$0xff]
    %v2824 = vld [vmem:[#allocation16 + $0x58] sm:$0xff]
    %v2825 = vld [vmem:[#allocation16 + $0x60] sm:$0xff]
    %v2826 = vld [vmem:[#allocation16 + $0x68] sm:$0xff]
    %v2827 = vld [vmem:[#allocation16 + $0x70] sm:$0xff]
    %v2828 = vld [vmem:[#allocation16 + $0x78] sm:$0xff]
    %2829 = vmatpush.msra.mxu0 %v2828
    %2830 = vmatpush.msra.mxu0 %v2827
    %2831 = vmatpush.msra.mxu0 %v2826
    %2832 = vmatpush.msra.mxu0 %v2825
    %2833 = vmatpush.msra.mxu0 %v2824
    %2834 = vmatpush.msra.mxu0 %v2823
    %2835 = vmatpush.msra.mxu0 %v2822
    %2836 = vmatpush.msra.mxu0 %v2821
    %2837 = vmatpush.msra.mxu0 %v2820
    %2838 = vmatpush.msra.mxu0 %v2819
    %2839 = vmatpush.msra.mxu0 %v2818
    %2840 = vmatpush.msra.mxu0 %v2817
    %2841 = vmatpush.msra.mxu0 %v2816
    %2842 = vmatpush.msra.mxu0 %v2815
    %2843 = vmatpush.msra.mxu0 %v2814
    %2844 = vmatpush.msra.mxu0 %v2813
    %2845 = vmatmul.f32.gmra.mxu0 %v2759
    %v2846 = vpop.f32.mrf.mxu0
    %v2847 = vadd.f32 0.0, %v2846
    %2848 = vdwg.mxu0
    %v2849 = vadd.f32 %v2811, %v2847
    %v2850 = vadd.f32 %v2849, %v1079
    %v2851 = vxor.u32 %v2850, 2147483648
    %v2852 = vmul.f32 %v2851, 1.442695
    %v2853 = vpow.pop %v2852
    %v2854 = vadd.f32 %v2853, 1.0
    %v2855 = vrcp.pop %v2854
    %v2856 = vmul.f32 %v2854, %v2855
    %v2857 = vsub.f32 1.0, %v2856
    %v2858 = vmul.f32 %v2855, %v2857
    %v2859 = vadd.f32 %v2855, %v2858
    %vm2860 = vweird.f32 %v2854
    %vm2861 = vweird.f32 %v2855
    %vm2862 = vmor %vm2860, %vm2861
    %v2863 = vsel %vm2862, %v2855, %v2859
    %v2864 = vand.u32 2147483647, %v2854
    %vm2865 = vcmp.eq.f32.partialorder %v2864, 8.507059e+37
    %v2866 = vand.u32 %v2854, 2147483648
    %v2867 = vor.u32 1.1754944e-38, %v2866
    %v2868 = vsel %vm2865, %v2867, %v2863
    %v2869 = vmul.f32 1.0, %v2868
    %v2870 = vtanh.pop %v2850
    %v2871 = vmul.f32 %v2869, %v2622
    %2873 = vrot.lane.b32.xlu0 %v2870, 64
    %v2874 = vpop.permute.xlu0 %2873
    %v2876 = vmul.f32 %v2869, %v2874
    %2878 = vrot.lane.b32.xlu0 %v2876, 32
    %v2879 = vpop.permute.xlu0 %2878
    %v2881 = vadd.f32 %v2871, %v2879
    %v2882 = vtanh.pop %v2881
    %2884 = vrot.lane.b32.xlu0 %v2882, 64
    %v2885 = vpop.permute.xlu0 %2884
    %v2887 = vmul.f32 %v2869, %v2885
    %v2888 = vld [vmem:[#allocation17] sm:$0xff]
    %v2889 = vld [vmem:[#allocation17 + $0x8] sm:$0xff]
    %v2890 = vld [vmem:[#allocation17 + $0x10] sm:$0xff]
    %v2891 = vld [vmem:[#allocation17 + $0x18] sm:$0xff]
    %2893 = vrot.lane.b32.xlu0 %v2887, 32
    %v2894 = vpop.permute.xlu0 %2893
    %v2895 = vsel %vm230, %v2894, 0
    %2897 = vmatpush.msra.mxu0 0.0
    %2898 = vmatpush.msra.mxu0 0.0
    %2899 = vmatpush.msra.mxu0 0.0
    %2900 = vmatpush.msra.mxu0 0.0
    %2901 = vmatpush.msra.mxu0 0.0
    %2902 = vmatpush.msra.mxu0 0.0
    %2903 = vmatpush.msra.mxu0 0.0
    %2904 = vmatpush.msra.mxu0 0.0
    %2905 = vmatpush.msra.mxu0 0.0
    %2906 = vmatpush.msra.mxu0 0.0
    %2907 = vmatpush.msra.mxu0 0.0
    %2908 = vmatpush.msra.mxu0 0.0
    %2909 = vmatpush.msra.mxu0 %v2891
    %2910 = vmatpush.msra.mxu0 %v2890
    %2911 = vmatpush.msra.mxu0 %v2889
    %2912 = vmatpush.msra.mxu0 %v2888
    %2913 = vmatmul.f32.gmra.mxu0 %v2895
    %v2914 = vpop.f32.mrf.mxu0
    %v2915 = vadd.f32 %v1124, %v2914
    %2916 = vdwg.mxu0
    %2917 = vst [vmem:[#allocation19 + $0xe] sm:$0x3] %v2915
    // Predicated region
    $region94: #{tpu_custom_call.1} parent=1 // pred_check
      _
    $region95: #{tpu_custom_call.1} parent=1 // pred_check_branch
      %2919 = sbr.rel (0) target = $region97
    $region96: #{tpu_custom_call.1} parent=1 // pred_region
      %2921 = vsyncadd [#allocation7], 0
      %s2922 = sshll.u32 [#allocation19], 4
      %s2923 = int_to_ptr.vmem [resolvable:$true] %s2922
      %s2924 = sshll.u32 %s15, 4
      %s2925 = int_to_ptr.hbm [resolvable:$true] %s2924
      %2930 = dma.vmem_to_hbm [thread:$0]  %s2923, 256, %s2925, [#allocation7], 128, 128, 8
    $region97: #{tpu_custom_call.1} parent=1 // pred_fallthru
      _
    // Predicated region
    $region98: #{tpu_custom_call.1} parent=1 // pred_check
      _
    $region99: #{tpu_custom_call.1} parent=1 // pred_check_branch
      %2932 = sbr.rel (0) target = $region101
    $region100: #{tpu_custom_call.1} parent=1 // pred_region
      %2934 = dma.done [#allocation7], 256
    $region101: #{tpu_custom_call.1} parent=1 // pred_fallthru
      _
    %2935 = vsyncpa [#allocation6], 1
    %2936 = vsyncpa [#allocation9], 1
    %2937 = vsyncpa [#allocation12], 1
    %2938 = vsyncpa [#allocation15], 1
    %2939 = vsyncpa [#allocation18], 1
    %2940 = vsyncpa [#allocation7], 1

</llo_original>
